<compile_context>
chip_gen: v7x
topology: tpu7x:2x2x1
jax: 0.10.0
libtpu: 0.0.40
codegen_flags: <defaults>
</compile_context>

<pallas_src>
import functools

import numpy as np
import jax
import jax.numpy as jnp
from jax import lax
from jax.experimental import pallas as pl
from jax.experimental.pallas import tpu as pltpu


def _round_up(x, m):
    return ((x + m - 1) // m) * m


# ------------------------------ Pallas kernel -------------------------------

def _lenet5_kernel(x_ref, w1_ref, b1_ref, ce1_ref, co1_ref,
                   w2_ref, b2_ref, ce2_ref, co2_ref,
                   wf1_ref, bf1_ref, wf2_ref, bf2_ref, wf3_ref, bf3_ref,
                   out_ref):
    """One batch block of B images per grid step.

    Activation layout: [row_class * B + image, lane], lanes channel-interleaved
    as [col * C + ch] (matches the host-packed weights).  All reshapes only
    split/merge leading dims whose sublane factor is a multiple of 8.
    """
    f32 = jnp.float32
    B = x_ref.shape[1]                                   # images per block

    def dot(a, b):
        return jnp.dot(a, b, preferred_element_type=f32)

    x = x_ref[...]                                       # (28, B, 28) [row, img, col]

    # conv1 (1->6, k5, valid) + ReLU: rows h*B + b, lanes ow*6 + oc
    acc1 = dot(x[0:24].reshape(24 * B, 28), w1_ref[0])
    for ki in range(1, 5):
        acc1 = acc1 + dot(x[ki:ki + 24].reshape(24 * B, 28), w1_ref[ki])
    a1 = jnp.maximum(acc1 + b1_ref[...], 0.0)            # (24B, 144)

    # maxpool 2x2: rows = pairwise max of contiguous B-row blocks (VPU only),
    # columns = exact 0/1 selector matmuls in the interleaved lane layout.
    a1p = a1.reshape(12, 2, B, 144)
    m1 = jnp.maximum(a1p[:, 0], a1p[:, 1]).reshape(12 * B, 144)
    p1 = jnp.maximum(dot(m1, ce1_ref[...]), dot(m1, co1_ref[...]))   # (12B, 72)
    p1 = p1.reshape(12, B, 72)

    # conv2 (6->16, k5, valid) + ReLU: rows r*B + b, lanes ow*16 + oc
    acc2 = dot(p1[0:8].reshape(8 * B, 72), w2_ref[0])
    for ki in range(1, 5):
        acc2 = acc2 + dot(p1[ki:ki + 8].reshape(8 * B, 72), w2_ref[ki])
    a2 = jnp.maximum(acc2 + b2_ref[...], 0.0)            # (8B, 128)

    a2p = a2.reshape(4, 2, B, 128)
    m2 = jnp.maximum(a2p[:, 0], a2p[:, 1]).reshape(4 * B, 128)
    p2 = jnp.maximum(dot(m2, ce2_ref[...]), dot(m2, co2_ref[...]))   # (4B, 64)
    p2 = p2.reshape(4, B, 64)

    # fc1 (256 -> 120): torch .view(-1, 256) flatten folded into wf1; the four
    # spatial rows accumulate as batched (B,64)@(64,120) matmuls.
    h = dot(p2[0], wf1_ref[0])
    for i in range(1, 4):
        h = h + dot(p2[i], wf1_ref[i])
    h = jnp.maximum(h + bf1_ref[...], 0.0)               # (B, 120)

    # fc2 + ReLU, fc3 (padded to 128 lanes -> unmasked lane-dense store)
    h = jnp.maximum(dot(h, wf2_ref[...]) + bf2_ref[...], 0.0)        # (B, 84)
    out_ref[...] = dot(h, wf3_ref[...]) + bf3_ref[...]               # (B, 128)


# ------------------------- host-side weight packing --------------------------

def _even_odd_cols(w, c):
    """Even/odd column selectors for the interleaved [col*c + channel] layout."""
    j = np.arange(w // 2)
    se = np.zeros((w, w // 2), np.float32)
    so = np.zeros((w, w // 2), np.float32)
    se[2 * j, j] = 1.0
    so[2 * j + 1, j] = 1.0
    eye = np.eye(c, dtype=np.float32)
    return np.kron(se, eye), np.kron(so, eye)


def _pack_conv(w, in_width, out_width):
    """w: (OC, IC, 5, 5) torch conv weight -> (KH, in_width*IC, out_width*OC)
    with M[ki, col*IC+ic, ow*OC+oc] = w[oc, ic, ki, col-ow] (zero outside the
    kernel), so sum_ki x[rows ki:ki+OH] @ M[ki] == valid cross-correlation."""
    oc_, ic_, kh, kw = w.shape
    shift = (np.arange(in_width)[None, :, None]
             == (np.arange(kw)[:, None, None]
                 + np.arange(out_width)[None, None, :])).astype(np.float32)
    taps = jnp.transpose(w, (2, 3, 1, 0))                # (KH, KW, IC, OC)
    combined = jnp.einsum("jbw,kjio->kbiwo", shift, taps)
    return combined.reshape(kh, in_width * ic_, out_width * oc_)


def pack_params(p):
    ce1, co1 = _even_odd_cols(24, 6)
    ce2, co2 = _even_odd_cols(8, 16)
    wf1 = jnp.transpose(p["fc1_w"].reshape(120, 16, 4, 4), (2, 3, 1, 0))
    wf3 = jnp.zeros((84, 128), jnp.float32).at[:, :10].set(jnp.transpose(p["fc3_w"]))
    bf3 = jnp.zeros((1, 128), jnp.float32).at[:, :10].set(p["fc3_b"][None, :])
    return (
        _pack_conv(p["conv1_w"], 28, 24),                # (5, 28, 144)
        jnp.tile(p["conv1_b"], 24)[None, :],             # (1, 144)
        jnp.asarray(ce1), jnp.asarray(co1),              # (144, 72) x2
        _pack_conv(p["conv2_w"], 12, 8),                 # (5, 72, 128)
        jnp.tile(p["conv2_b"], 8)[None, :],              # (1, 128)
        jnp.asarray(ce2), jnp.asarray(co2),              # (128, 64) x2
        wf1.reshape(4, 64, 120),                         # (4, 64, 120)
        p["fc1_b"][None, :],                             # (1, 120)
        jnp.transpose(p["fc2_w"]), p["fc2_b"][None, :],  # (120, 84), (1, 84)
        wf3, bf3,                                        # (84, 128), (1, 128)
    )


# ------------------------------ fused forward --------------------------------

@functools.partial(jax.jit, static_argnames=("block_b",))
def lenet5_forward(img, packed, block_b=32):
    """img: (N, 1, 28, 28) float32 NCHW -> logits (N, 10)."""
    n = img.shape[0]
    b = min(_round_up(block_b, 8), _round_up(n, 8))      # images per grid step
    n_pad = _round_up(n, b)

    # Wrapper-side layout plumbing: (N,1,28,28) -> (28, N_pad, 28) row-major
    # [image row, image, col] so the kernel can batch M = rows * B everywhere.
    x = jnp.pad(img[:, 0], ((0, n_pad - n), (0, 0), (0, 0)))
    x = jnp.transpose(x, (1, 0, 2))                      # (28, n_pad, 28)

    const_specs = [
        pl.BlockSpec(tuple(c.shape), lambda i, _nd=c.ndim: (0,) * _nd)
        for c in packed
    ]
    out = pl.pallas_call(
        _lenet5_kernel,
        grid=(n_pad // b,),
        in_specs=[pl.BlockSpec((28, b, 28), lambda i: (0, i, 0))] + const_specs,
        out_specs=pl.BlockSpec((b, 128), lambda i: (i, 0)),
        out_shape=jax.ShapeDtypeStruct((n_pad, 128), jnp.float32),
        compiler_params=pltpu.CompilerParams(
            dimension_semantics=("parallel",)),
    )(x, *packed)
    return out[:n, :10]


# --------------------------- params and reference ----------------------------

def init_params(key):
    ks = jax.random.split(key, 10)

    def u(k, shape, fan_in):
        bnd = 1.0 / np.sqrt(fan_in)
        return jax.random.uniform(k, shape, jnp.float32, -bnd, bnd)

    return {
        "conv1_w": u(ks[0], (6, 1, 5, 5), 25),
        "conv1_b": u(ks[1], (6,), 25),
        "conv2_w": u(ks[2], (16, 6, 5, 5), 150),
        "conv2_b": u(ks[3], (16,), 150),
        "fc1_w": u(ks[4], (120, 256), 256),
        "fc1_b": u(ks[5], (120,), 256),
        "fc2_w": u(ks[6], (84, 120), 120),
        "fc2_b": u(ks[7], (84,), 120),
        "fc3_w": u(ks[8], (10, 84), 84),
        "fc3_b": u(ks[9], (10,), 84),
    }


def lenet5_reference(img, p):
    """Pure-JAX mirror of the PyTorch module, for correctness checking."""
    hi = jax.lax.Precision.HIGHEST
    x = lax.conv_general_dilated(img, p["conv1_w"], (1, 1), "VALID",
                                 dimension_numbers=("NCHW", "OIHW", "NCHW"),
                                 precision=hi)
    x = jax.nn.relu(x + p["conv1_b"][None, :, None, None])
    x = lax.reduce_window(x, -jnp.inf, lax.max, (1, 1, 2, 2), (1, 1, 2, 2), "VALID")
    x = lax.conv_general_dilated(x, p["conv2_w"], (1, 1), "VALID",
                                 dimension_numbers=("NCHW", "OIHW", "NCHW"),
                                 precision=hi)
    x = jax.nn.relu(x + p["conv2_b"][None, :, None, None])
    x = lax.reduce_window(x, -jnp.inf, lax.max, (1, 1, 2, 2), (1, 1, 2, 2), "VALID")
    x = x.reshape(x.shape[0], -1)                        # torch view(-1, 256) order
    x = jax.nn.relu(jnp.dot(x, p["fc1_w"].T, precision=hi) + p["fc1_b"])
    x = jax.nn.relu(jnp.dot(x, p["fc2_w"].T, precision=hi) + p["fc2_b"])
    return jnp.dot(x, p["fc3_w"].T, precision=hi) + p["fc3_b"]


if __name__ == "__main__":
    key = jax.random.PRNGKey(0)
    k_img, k_par = jax.random.split(key)

    img = jax.random.normal(k_img, (16, 1, 28, 28), jnp.float32)  # NCHW, like torch
    params = init_params(k_par)
    packed = pack_params(params)      # one-time host-side weight packing (hoisted)

    # block_b=8 -> grid=(2,): exercises batched blocks + >=2 grid steps (v7x TCs)
    logits = jax.block_until_ready(lenet5_forward(img, packed, block_b=8))
    assert logits.shape == (16, 10), logits.shape

    ref = lenet5_reference(img, params)
    err = float(jnp.max(jnp.abs(logits - ref)))
    assert err < 2e-2, f"max abs error vs reference: {err}"

    print("KERNEL_OK")
</pallas_src>

<mosaic_0001>
module attributes {stable_mosaic.version = 11 : i64} {
  func.func @_lenet5_kernel(%arg0: i32, %arg1: memref<28x8x28xf32, #tpu.memory_space<vmem>>, %arg2: memref<5x28x144xf32, #tpu.memory_space<vmem>>, %arg3: memref<1x144xf32, #tpu.memory_space<vmem>>, %arg4: memref<144x72xf32, #tpu.memory_space<vmem>>, %arg5: memref<144x72xf32, #tpu.memory_space<vmem>>, %arg6: memref<5x72x128xf32, #tpu.memory_space<vmem>>, %arg7: memref<1x128xf32, #tpu.memory_space<vmem>>, %arg8: memref<128x64xf32, #tpu.memory_space<vmem>>, %arg9: memref<128x64xf32, #tpu.memory_space<vmem>>, %arg10: memref<4x64x120xf32, #tpu.memory_space<vmem>>, %arg11: memref<1x120xf32, #tpu.memory_space<vmem>>, %arg12: memref<120x84xf32, #tpu.memory_space<vmem>>, %arg13: memref<1x84xf32, #tpu.memory_space<vmem>>, %arg14: memref<84x128xf32, #tpu.memory_space<vmem>>, %arg15: memref<1x128xf32, #tpu.memory_space<vmem>>, %arg16: memref<8x128xf32, #tpu.memory_space<vmem>>) attributes {dimension_semantics = [#tpu.dimension_semantics<parallel>], iteration_bounds = array<i64: 2>, scalar_prefetch = 0 : i64, scratch_operands = 0 : i64, tpu.core_type = #tpu.core_type<tc>, window_params = [{transform_indices = @transform_0, window_bounds = array<i64: 28, 8, 28>}, {pipeline_mode = #tpu.pipeline_mode<synchronous>, transform_indices = @transform_1, window_bounds = array<i64: 5, 28, 144>}, {pipeline_mode = #tpu.pipeline_mode<synchronous>, transform_indices = @transform_2, window_bounds = array<i64: 1, 144>}, {pipeline_mode = #tpu.pipeline_mode<synchronous>, transform_indices = @transform_3, window_bounds = array<i64: 144, 72>}, {pipeline_mode = #tpu.pipeline_mode<synchronous>, transform_indices = @transform_4, window_bounds = array<i64: 144, 72>}, {pipeline_mode = #tpu.pipeline_mode<synchronous>, transform_indices = @transform_5, window_bounds = array<i64: 5, 72, 128>}, {pipeline_mode = #tpu.pipeline_mode<synchronous>, transform_indices = @transform_6, window_bounds = array<i64: 1, 128>}, {pipeline_mode = #tpu.pipeline_mode<synchronous>, transform_indices = @transform_7, window_bounds = array<i64: 128, 64>}, {pipeline_mode = #tpu.pipeline_mode<synchronous>, transform_indices = @transform_8, window_bounds = array<i64: 128, 64>}, {pipeline_mode = #tpu.pipeline_mode<synchronous>, transform_indices = @transform_9, window_bounds = array<i64: 4, 64, 120>}, {pipeline_mode = #tpu.pipeline_mode<synchronous>, transform_indices = @transform_10, window_bounds = array<i64: 1, 120>}, {pipeline_mode = #tpu.pipeline_mode<synchronous>, transform_indices = @transform_11, window_bounds = array<i64: 120, 84>}, {pipeline_mode = #tpu.pipeline_mode<synchronous>, transform_indices = @transform_12, window_bounds = array<i64: 1, 84>}, {pipeline_mode = #tpu.pipeline_mode<synchronous>, transform_indices = @transform_13, window_bounds = array<i64: 84, 128>}, {pipeline_mode = #tpu.pipeline_mode<synchronous>, transform_indices = @transform_14, window_bounds = array<i64: 1, 128>}, {transform_indices = @transform_15, window_bounds = array<i64: 8, 128>}]} {
    %c0 = arith.constant 0 : index
    %c0_0 = arith.constant 0 : index
    %c0_1 = arith.constant 0 : index
    %0 = vector.load %arg1[%c0, %c0_0, %c0_1] : memref<28x8x28xf32, #tpu.memory_space<vmem>>, vector<28x8x28xf32>
    %1 = vector.extract_strided_slice %0 {offsets = [0, 0, 0], sizes = [24, 8, 28], strides = [1, 1, 1]} : vector<28x8x28xf32> to vector<24x8x28xf32>
    %2 = vector.shape_cast %1 : vector<24x8x28xf32> to vector<192x28xf32>
    %c0_2 = arith.constant 0 : index
    %c0_3 = arith.constant 0 : index
    %c0_4 = arith.constant 0 : index
    %3 = vector.load %arg2[%c0_2, %c0_3, %c0_4] : memref<5x28x144xf32, #tpu.memory_space<vmem>>, vector<1x28x144xf32>
    %4 = vector.shape_cast %3 : vector<1x28x144xf32> to vector<28x144xf32>
    %cst = arith.constant dense<0.000000e+00> : vector<192x144xf32>
    %5 = tpu.matmul %2, %4, %cst {dimension_numbers = #tpu.dot_dimension_numbers<[1], [0], [0], [1], [0, 0, 1, 1], [], []>} : vector<192x28xf32>, vector<28x144xf32>, vector<192x144xf32> -> vector<192x144xf32>
    %6 = vector.extract_strided_slice %0 {offsets = [1, 0, 0], sizes = [24, 8, 28], strides = [1, 1, 1]} : vector<28x8x28xf32> to vector<24x8x28xf32>
    %7 = vector.shape_cast %6 : vector<24x8x28xf32> to vector<192x28xf32>
    %c1 = arith.constant 1 : index
    %c0_5 = arith.constant 0 : index
    %c0_6 = arith.constant 0 : index
    %8 = vector.load %arg2[%c1, %c0_5, %c0_6] : memref<5x28x144xf32, #tpu.memory_space<vmem>>, vector<1x28x144xf32>
    %9 = vector.shape_cast %8 : vector<1x28x144xf32> to vector<28x144xf32>
    %cst_7 = arith.constant dense<0.000000e+00> : vector<192x144xf32>
    %10 = tpu.matmul %7, %9, %cst_7 {dimension_numbers = #tpu.dot_dimension_numbers<[1], [0], [0], [1], [0, 0, 1, 1], [], []>} : vector<192x28xf32>, vector<28x144xf32>, vector<192x144xf32> -> vector<192x144xf32>
    %11 = arith.addf %5, %10 : vector<192x144xf32>
    %12 = vector.extract_strided_slice %0 {offsets = [2, 0, 0], sizes = [24, 8, 28], strides = [1, 1, 1]} : vector<28x8x28xf32> to vector<24x8x28xf32>
    %13 = vector.shape_cast %12 : vector<24x8x28xf32> to vector<192x28xf32>
    %c2 = arith.constant 2 : index
    %c0_8 = arith.constant 0 : index
    %c0_9 = arith.constant 0 : index
    %14 = vector.load %arg2[%c2, %c0_8, %c0_9] : memref<5x28x144xf32, #tpu.memory_space<vmem>>, vector<1x28x144xf32>
    %15 = vector.shape_cast %14 : vector<1x28x144xf32> to vector<28x144xf32>
    %cst_10 = arith.constant dense<0.000000e+00> : vector<192x144xf32>
    %16 = tpu.matmul %13, %15, %cst_10 {dimension_numbers = #tpu.dot_dimension_numbers<[1], [0], [0], [1], [0, 0, 1, 1], [], []>} : vector<192x28xf32>, vector<28x144xf32>, vector<192x144xf32> -> vector<192x144xf32>
    %17 = arith.addf %11, %16 : vector<192x144xf32>
    %18 = vector.extract_strided_slice %0 {offsets = [3, 0, 0], sizes = [24, 8, 28], strides = [1, 1, 1]} : vector<28x8x28xf32> to vector<24x8x28xf32>
    %19 = vector.shape_cast %18 : vector<24x8x28xf32> to vector<192x28xf32>
    %c3 = arith.constant 3 : index
    %c0_11 = arith.constant 0 : index
    %c0_12 = arith.constant 0 : index
    %20 = vector.load %arg2[%c3, %c0_11, %c0_12] : memref<5x28x144xf32, #tpu.memory_space<vmem>>, vector<1x28x144xf32>
    %21 = vector.shape_cast %20 : vector<1x28x144xf32> to vector<28x144xf32>
    %cst_13 = arith.constant dense<0.000000e+00> : vector<192x144xf32>
    %22 = tpu.matmul %19, %21, %cst_13 {dimension_numbers = #tpu.dot_dimension_numbers<[1], [0], [0], [1], [0, 0, 1, 1], [], []>} : vector<192x28xf32>, vector<28x144xf32>, vector<192x144xf32> -> vector<192x144xf32>
    %23 = arith.addf %17, %22 : vector<192x144xf32>
    %24 = vector.extract_strided_slice %0 {offsets = [4, 0, 0], sizes = [24, 8, 28], strides = [1, 1, 1]} : vector<28x8x28xf32> to vector<24x8x28xf32>
    %25 = vector.shape_cast %24 : vector<24x8x28xf32> to vector<192x28xf32>
    %c4 = arith.constant 4 : index
    %c0_14 = arith.constant 0 : index
    %c0_15 = arith.constant 0 : index
    %26 = vector.load %arg2[%c4, %c0_14, %c0_15] : memref<5x28x144xf32, #tpu.memory_space<vmem>>, vector<1x28x144xf32>
    %27 = vector.shape_cast %26 : vector<1x28x144xf32> to vector<28x144xf32>
    %cst_16 = arith.constant dense<0.000000e+00> : vector<192x144xf32>
    %28 = tpu.matmul %25, %27, %cst_16 {dimension_numbers = #tpu.dot_dimension_numbers<[1], [0], [0], [1], [0, 0, 1, 1], [], []>} : vector<192x28xf32>, vector<28x144xf32>, vector<192x144xf32> -> vector<192x144xf32>
    %29 = arith.addf %23, %28 : vector<192x144xf32>
    %c0_17 = arith.constant 0 : index
    %c0_18 = arith.constant 0 : index
    %30 = vector.load %arg3[%c0_17, %c0_18] : memref<1x144xf32, #tpu.memory_space<vmem>>, vector<1x144xf32>
    %31 = vector.broadcast %30 : vector<1x144xf32> to vector<192x144xf32>
    %32 = arith.addf %29, %31 : vector<192x144xf32>
    %cst_19 = arith.constant 0.000000e+00 : f32
    %33 = vector.broadcast %cst_19 : f32 to vector<192x144xf32>
    %34 = arith.maximumf %32, %33 : vector<192x144xf32>
    %35 = vector.shape_cast %34 : vector<192x144xf32> to vector<12x2x8x144xf32>
    %36 = vector.extract_strided_slice %35 {offsets = [0, 0, 0, 0], sizes = [12, 1, 8, 144], strides = [1, 1, 1, 1]} : vector<12x2x8x144xf32> to vector<12x1x8x144xf32>
    %37 = vector.shape_cast %36 : vector<12x1x8x144xf32> to vector<12x8x144xf32>
    %38 = vector.extract_strided_slice %35 {offsets = [0, 1, 0, 0], sizes = [12, 1, 8, 144], strides = [1, 1, 1, 1]} : vector<12x2x8x144xf32> to vector<12x1x8x144xf32>
    %39 = vector.shape_cast %38 : vector<12x1x8x144xf32> to vector<12x8x144xf32>
    %40 = arith.maximumf %37, %39 : vector<12x8x144xf32>
    %41 = vector.shape_cast %40 : vector<12x8x144xf32> to vector<96x144xf32>
    %c0_20 = arith.constant 0 : index
    %c0_21 = arith.constant 0 : index
    %42 = vector.load %arg4[%c0_20, %c0_21] : memref<144x72xf32, #tpu.memory_space<vmem>>, vector<144x72xf32>
    %cst_22 = arith.constant dense<0.000000e+00> : vector<96x72xf32>
    %43 = tpu.matmul %41, %42, %cst_22 {dimension_numbers = #tpu.dot_dimension_numbers<[1], [0], [0], [1], [0, 0, 1, 1], [], []>} : vector<96x144xf32>, vector<144x72xf32>, vector<96x72xf32> -> vector<96x72xf32>
    %c0_23 = arith.constant 0 : index
    %c0_24 = arith.constant 0 : index
    %44 = vector.load %arg5[%c0_23, %c0_24] : memref<144x72xf32, #tpu.memory_space<vmem>>, vector<144x72xf32>
    %cst_25 = arith.constant dense<0.000000e+00> : vector<96x72xf32>
    %45 = tpu.matmul %41, %44, %cst_25 {dimension_numbers = #tpu.dot_dimension_numbers<[1], [0], [0], [1], [0, 0, 1, 1], [], []>} : vector<96x144xf32>, vector<144x72xf32>, vector<96x72xf32> -> vector<96x72xf32>
    %46 = arith.maximumf %43, %45 : vector<96x72xf32>
    %47 = vector.shape_cast %46 : vector<96x72xf32> to vector<12x8x72xf32>
    %48 = vector.extract_strided_slice %47 {offsets = [0, 0, 0], sizes = [8, 8, 72], strides = [1, 1, 1]} : vector<12x8x72xf32> to vector<8x8x72xf32>
    %49 = vector.shape_cast %48 : vector<8x8x72xf32> to vector<64x72xf32>
    %c0_26 = arith.constant 0 : index
    %c0_27 = arith.constant 0 : index
    %c0_28 = arith.constant 0 : index
    %50 = vector.load %arg6[%c0_26, %c0_27, %c0_28] : memref<5x72x128xf32, #tpu.memory_space<vmem>>, vector<1x72x128xf32>
    %51 = vector.shape_cast %50 : vector<1x72x128xf32> to vector<72x128xf32>
    %cst_29 = arith.constant dense<0.000000e+00> : vector<64x128xf32>
    %52 = tpu.matmul %49, %51, %cst_29 {dimension_numbers = #tpu.dot_dimension_numbers<[1], [0], [0], [1], [0, 0, 1, 1], [], []>} : vector<64x72xf32>, vector<72x128xf32>, vector<64x128xf32> -> vector<64x128xf32>
    %53 = vector.extract_strided_slice %47 {offsets = [1, 0, 0], sizes = [8, 8, 72], strides = [1, 1, 1]} : vector<12x8x72xf32> to vector<8x8x72xf32>
    %54 = vector.shape_cast %53 : vector<8x8x72xf32> to vector<64x72xf32>
    %c1_30 = arith.constant 1 : index
    %c0_31 = arith.constant 0 : index
    %c0_32 = arith.constant 0 : index
    %55 = vector.load %arg6[%c1_30, %c0_31, %c0_32] : memref<5x72x128xf32, #tpu.memory_space<vmem>>, vector<1x72x128xf32>
    %56 = vector.shape_cast %55 : vector<1x72x128xf32> to vector<72x128xf32>
    %cst_33 = arith.constant dense<0.000000e+00> : vector<64x128xf32>
    %57 = tpu.matmul %54, %56, %cst_33 {dimension_numbers = #tpu.dot_dimension_numbers<[1], [0], [0], [1], [0, 0, 1, 1], [], []>} : vector<64x72xf32>, vector<72x128xf32>, vector<64x128xf32> -> vector<64x128xf32>
    %58 = arith.addf %52, %57 : vector<64x128xf32>
    %59 = vector.extract_strided_slice %47 {offsets = [2, 0, 0], sizes = [8, 8, 72], strides = [1, 1, 1]} : vector<12x8x72xf32> to vector<8x8x72xf32>
    %60 = vector.shape_cast %59 : vector<8x8x72xf32> to vector<64x72xf32>
    %c2_34 = arith.constant 2 : index
    %c0_35 = arith.constant 0 : index
    %c0_36 = arith.constant 0 : index
    %61 = vector.load %arg6[%c2_34, %c0_35, %c0_36] : memref<5x72x128xf32, #tpu.memory_space<vmem>>, vector<1x72x128xf32>
    %62 = vector.shape_cast %61 : vector<1x72x128xf32> to vector<72x128xf32>
    %cst_37 = arith.constant dense<0.000000e+00> : vector<64x128xf32>
    %63 = tpu.matmul %60, %62, %cst_37 {dimension_numbers = #tpu.dot_dimension_numbers<[1], [0], [0], [1], [0, 0, 1, 1], [], []>} : vector<64x72xf32>, vector<72x128xf32>, vector<64x128xf32> -> vector<64x128xf32>
    %64 = arith.addf %58, %63 : vector<64x128xf32>
    %65 = vector.extract_strided_slice %47 {offsets = [3, 0, 0], sizes = [8, 8, 72], strides = [1, 1, 1]} : vector<12x8x72xf32> to vector<8x8x72xf32>
    %66 = vector.shape_cast %65 : vector<8x8x72xf32> to vector<64x72xf32>
    %c3_38 = arith.constant 3 : index
    %c0_39 = arith.constant 0 : index
    %c0_40 = arith.constant 0 : index
    %67 = vector.load %arg6[%c3_38, %c0_39, %c0_40] : memref<5x72x128xf32, #tpu.memory_space<vmem>>, vector<1x72x128xf32>
    %68 = vector.shape_cast %67 : vector<1x72x128xf32> to vector<72x128xf32>
    %cst_41 = arith.constant dense<0.000000e+00> : vector<64x128xf32>
    %69 = tpu.matmul %66, %68, %cst_41 {dimension_numbers = #tpu.dot_dimension_numbers<[1], [0], [0], [1], [0, 0, 1, 1], [], []>} : vector<64x72xf32>, vector<72x128xf32>, vector<64x128xf32> -> vector<64x128xf32>
    %70 = arith.addf %64, %69 : vector<64x128xf32>
    %71 = vector.extract_strided_slice %47 {offsets = [4, 0, 0], sizes = [8, 8, 72], strides = [1, 1, 1]} : vector<12x8x72xf32> to vector<8x8x72xf32>
    %72 = vector.shape_cast %71 : vector<8x8x72xf32> to vector<64x72xf32>
    %c4_42 = arith.constant 4 : index
    %c0_43 = arith.constant 0 : index
    %c0_44 = arith.constant 0 : index
    %73 = vector.load %arg6[%c4_42, %c0_43, %c0_44] : memref<5x72x128xf32, #tpu.memory_space<vmem>>, vector<1x72x128xf32>
    %74 = vector.shape_cast %73 : vector<1x72x128xf32> to vector<72x128xf32>
    %cst_45 = arith.constant dense<0.000000e+00> : vector<64x128xf32>
    %75 = tpu.matmul %72, %74, %cst_45 {dimension_numbers = #tpu.dot_dimension_numbers<[1], [0], [0], [1], [0, 0, 1, 1], [], []>} : vector<64x72xf32>, vector<72x128xf32>, vector<64x128xf32> -> vector<64x128xf32>
    %76 = arith.addf %70, %75 : vector<64x128xf32>
    %c0_46 = arith.constant 0 : index
    %c0_47 = arith.constant 0 : index
    %77 = vector.load %arg7[%c0_46, %c0_47] : memref<1x128xf32, #tpu.memory_space<vmem>>, vector<1x128xf32>
    %78 = vector.broadcast %77 : vector<1x128xf32> to vector<64x128xf32>
    %79 = arith.addf %76, %78 : vector<64x128xf32>
    %cst_48 = arith.constant 0.000000e+00 : f32
    %80 = vector.broadcast %cst_48 : f32 to vector<64x128xf32>
    %81 = arith.maximumf %79, %80 : vector<64x128xf32>
    %82 = vector.shape_cast %81 : vector<64x128xf32> to vector<4x2x8x128xf32>
    %83 = vector.extract_strided_slice %82 {offsets = [0, 0, 0, 0], sizes = [4, 1, 8, 128], strides = [1, 1, 1, 1]} : vector<4x2x8x128xf32> to vector<4x1x8x128xf32>
    %84 = vector.shape_cast %83 : vector<4x1x8x128xf32> to vector<4x8x128xf32>
    %85 = vector.extract_strided_slice %82 {offsets = [0, 1, 0, 0], sizes = [4, 1, 8, 128], strides = [1, 1, 1, 1]} : vector<4x2x8x128xf32> to vector<4x1x8x128xf32>
    %86 = vector.shape_cast %85 : vector<4x1x8x128xf32> to vector<4x8x128xf32>
    %87 = arith.maximumf %84, %86 : vector<4x8x128xf32>
    %88 = vector.shape_cast %87 : vector<4x8x128xf32> to vector<32x128xf32>
    %c0_49 = arith.constant 0 : index
    %c0_50 = arith.constant 0 : index
    %89 = vector.load %arg8[%c0_49, %c0_50] : memref<128x64xf32, #tpu.memory_space<vmem>>, vector<128x64xf32>
    %cst_51 = arith.constant dense<0.000000e+00> : vector<32x64xf32>
    %90 = tpu.matmul %88, %89, %cst_51 {dimension_numbers = #tpu.dot_dimension_numbers<[1], [0], [0], [1], [0, 0, 1, 1], [], []>} : vector<32x128xf32>, vector<128x64xf32>, vector<32x64xf32> -> vector<32x64xf32>
    %c0_52 = arith.constant 0 : index
    %c0_53 = arith.constant 0 : index
    %91 = vector.load %arg9[%c0_52, %c0_53] : memref<128x64xf32, #tpu.memory_space<vmem>>, vector<128x64xf32>
    %cst_54 = arith.constant dense<0.000000e+00> : vector<32x64xf32>
    %92 = tpu.matmul %88, %91, %cst_54 {dimension_numbers = #tpu.dot_dimension_numbers<[1], [0], [0], [1], [0, 0, 1, 1], [], []>} : vector<32x128xf32>, vector<128x64xf32>, vector<32x64xf32> -> vector<32x64xf32>
    %93 = arith.maximumf %90, %92 : vector<32x64xf32>
    %94 = vector.shape_cast %93 : vector<32x64xf32> to vector<4x8x64xf32>
    %95 = vector.extract_strided_slice %94 {offsets = [0, 0, 0], sizes = [1, 8, 64], strides = [1, 1, 1]} : vector<4x8x64xf32> to vector<1x8x64xf32>
    %96 = vector.shape_cast %95 : vector<1x8x64xf32> to vector<8x64xf32>
    %c0_55 = arith.constant 0 : index
    %c0_56 = arith.constant 0 : index
    %c0_57 = arith.constant 0 : index
    %97 = vector.load %arg10[%c0_55, %c0_56, %c0_57] : memref<4x64x120xf32, #tpu.memory_space<vmem>>, vector<1x64x120xf32>
    %98 = vector.shape_cast %97 : vector<1x64x120xf32> to vector<64x120xf32>
    %cst_58 = arith.constant dense<0.000000e+00> : vector<8x120xf32>
    %99 = tpu.matmul %96, %98, %cst_58 {dimension_numbers = #tpu.dot_dimension_numbers<[1], [0], [0], [1], [0, 0, 1, 1], [], []>} : vector<8x64xf32>, vector<64x120xf32>, vector<8x120xf32> -> vector<8x120xf32>
    %100 = vector.extract_strided_slice %94 {offsets = [1, 0, 0], sizes = [1, 8, 64], strides = [1, 1, 1]} : vector<4x8x64xf32> to vector<1x8x64xf32>
    %101 = vector.shape_cast %100 : vector<1x8x64xf32> to vector<8x64xf32>
    %c1_59 = arith.constant 1 : index
    %c0_60 = arith.constant 0 : index
    %c0_61 = arith.constant 0 : index
    %102 = vector.load %arg10[%c1_59, %c0_60, %c0_61] : memref<4x64x120xf32, #tpu.memory_space<vmem>>, vector<1x64x120xf32>
    %103 = vector.shape_cast %102 : vector<1x64x120xf32> to vector<64x120xf32>
    %cst_62 = arith.constant dense<0.000000e+00> : vector<8x120xf32>
    %104 = tpu.matmul %101, %103, %cst_62 {dimension_numbers = #tpu.dot_dimension_numbers<[1], [0], [0], [1], [0, 0, 1, 1], [], []>} : vector<8x64xf32>, vector<64x120xf32>, vector<8x120xf32> -> vector<8x120xf32>
    %105 = arith.addf %99, %104 : vector<8x120xf32>
    %106 = vector.extract_strided_slice %94 {offsets = [2, 0, 0], sizes = [1, 8, 64], strides = [1, 1, 1]} : vector<4x8x64xf32> to vector<1x8x64xf32>
    %107 = vector.shape_cast %106 : vector<1x8x64xf32> to vector<8x64xf32>
    %c2_63 = arith.constant 2 : index
    %c0_64 = arith.constant 0 : index
    %c0_65 = arith.constant 0 : index
    %108 = vector.load %arg10[%c2_63, %c0_64, %c0_65] : memref<4x64x120xf32, #tpu.memory_space<vmem>>, vector<1x64x120xf32>
    %109 = vector.shape_cast %108 : vector<1x64x120xf32> to vector<64x120xf32>
    %cst_66 = arith.constant dense<0.000000e+00> : vector<8x120xf32>
    %110 = tpu.matmul %107, %109, %cst_66 {dimension_numbers = #tpu.dot_dimension_numbers<[1], [0], [0], [1], [0, 0, 1, 1], [], []>} : vector<8x64xf32>, vector<64x120xf32>, vector<8x120xf32> -> vector<8x120xf32>
    %111 = arith.addf %105, %110 : vector<8x120xf32>
    %112 = vector.extract_strided_slice %94 {offsets = [3, 0, 0], sizes = [1, 8, 64], strides = [1, 1, 1]} : vector<4x8x64xf32> to vector<1x8x64xf32>
    %113 = vector.shape_cast %112 : vector<1x8x64xf32> to vector<8x64xf32>
    %c3_67 = arith.constant 3 : index
    %c0_68 = arith.constant 0 : index
    %c0_69 = arith.constant 0 : index
    %114 = vector.load %arg10[%c3_67, %c0_68, %c0_69] : memref<4x64x120xf32, #tpu.memory_space<vmem>>, vector<1x64x120xf32>
    %115 = vector.shape_cast %114 : vector<1x64x120xf32> to vector<64x120xf32>
    %cst_70 = arith.constant dense<0.000000e+00> : vector<8x120xf32>
    %116 = tpu.matmul %113, %115, %cst_70 {dimension_numbers = #tpu.dot_dimension_numbers<[1], [0], [0], [1], [0, 0, 1, 1], [], []>} : vector<8x64xf32>, vector<64x120xf32>, vector<8x120xf32> -> vector<8x120xf32>
    %117 = arith.addf %111, %116 : vector<8x120xf32>
    %c0_71 = arith.constant 0 : index
    %c0_72 = arith.constant 0 : index
    %118 = vector.load %arg11[%c0_71, %c0_72] : memref<1x120xf32, #tpu.memory_space<vmem>>, vector<1x120xf32>
    %119 = vector.broadcast %118 : vector<1x120xf32> to vector<8x120xf32>
    %120 = arith.addf %117, %119 : vector<8x120xf32>
    %cst_73 = arith.constant 0.000000e+00 : f32
    %121 = vector.broadcast %cst_73 : f32 to vector<8x120xf32>
    %122 = arith.maximumf %120, %121 : vector<8x120xf32>
    %c0_74 = arith.constant 0 : index
    %c0_75 = arith.constant 0 : index
    %123 = vector.load %arg12[%c0_74, %c0_75] : memref<120x84xf32, #tpu.memory_space<vmem>>, vector<120x84xf32>
    %cst_76 = arith.constant dense<0.000000e+00> : vector<8x84xf32>
    %124 = tpu.matmul %122, %123, %cst_76 {dimension_numbers = #tpu.dot_dimension_numbers<[1], [0], [0], [1], [0, 0, 1, 1], [], []>} : vector<8x120xf32>, vector<120x84xf32>, vector<8x84xf32> -> vector<8x84xf32>
    %c0_77 = arith.constant 0 : index
    %c0_78 = arith.constant 0 : index
    %125 = vector.load %arg13[%c0_77, %c0_78] : memref<1x84xf32, #tpu.memory_space<vmem>>, vector<1x84xf32>
    %126 = vector.broadcast %125 : vector<1x84xf32> to vector<8x84xf32>
    %127 = arith.addf %124, %126 : vector<8x84xf32>
    %cst_79 = arith.constant 0.000000e+00 : f32
    %128 = vector.broadcast %cst_79 : f32 to vector<8x84xf32>
    %129 = arith.maximumf %127, %128 : vector<8x84xf32>
    %c0_80 = arith.constant 0 : index
    %c0_81 = arith.constant 0 : index
    %130 = vector.load %arg14[%c0_80, %c0_81] : memref<84x128xf32, #tpu.memory_space<vmem>>, vector<84x128xf32>
    %cst_82 = arith.constant dense<0.000000e+00> : vector<8x128xf32>
    %131 = tpu.matmul %129, %130, %cst_82 {dimension_numbers = #tpu.dot_dimension_numbers<[1], [0], [0], [1], [0, 0, 1, 1], [], []>} : vector<8x84xf32>, vector<84x128xf32>, vector<8x128xf32> -> vector<8x128xf32>
    %c0_83 = arith.constant 0 : index
    %c0_84 = arith.constant 0 : index
    %132 = vector.load %arg15[%c0_83, %c0_84] : memref<1x128xf32, #tpu.memory_space<vmem>>, vector<1x128xf32>
    %133 = vector.broadcast %132 : vector<1x128xf32> to vector<8x128xf32>
    %134 = arith.addf %131, %133 : vector<8x128xf32>
    %c0_85 = arith.constant 0 : index
    %c0_86 = arith.constant 0 : index
    %135 = vector.load %arg16[%c0_85, %c0_86] : memref<8x128xf32, #tpu.memory_space<vmem>>, vector<8x128xf32>
    tpu.vector_store %arg16[%c0_85, %c0_86], %134 {strides = array<i32>} : memref<8x128xf32, #tpu.memory_space<vmem>>, vector<8x128xf32>,
    return
  }
  func.func @transform_0(%arg0: i32) -> (i32, i32, i32) {
    %c0_i32 = arith.constant 0 : i32
    %c0_i32_0 = arith.constant 0 : i32
    %c0_i32_1 = arith.constant 0 : i32
    return %c0_i32, %arg0, %c0_i32_0 : i32, i32, i32
  }
  func.func @transform_1(%arg0: i32) -> (i32, i32, i32) {
    %c0_i32 = arith.constant 0 : i32
    %c0_i32_0 = arith.constant 0 : i32
    %c0_i32_1 = arith.constant 0 : i32
    %c0_i32_2 = arith.constant 0 : i32
    return %c0_i32, %c0_i32_0, %c0_i32_1 : i32, i32, i32
  }
  func.func @transform_2(%arg0: i32) -> (i32, i32) {
    %c0_i32 = arith.constant 0 : i32
    %c0_i32_0 = arith.constant 0 : i32
    %c0_i32_1 = arith.constant 0 : i32
    return %c0_i32, %c0_i32_0 : i32, i32
  }
  func.func @transform_3(%arg0: i32) -> (i32, i32) {
    %c0_i32 = arith.constant 0 : i32
    %c0_i32_0 = arith.constant 0 : i32
    %c0_i32_1 = arith.constant 0 : i32
    return %c0_i32, %c0_i32_0 : i32, i32
  }
  func.func @transform_4(%arg0: i32) -> (i32, i32) {
    %c0_i32 = arith.constant 0 : i32
    %c0_i32_0 = arith.constant 0 : i32
    %c0_i32_1 = arith.constant 0 : i32
    return %c0_i32, %c0_i32_0 : i32, i32
  }
  func.func @transform_5(%arg0: i32) -> (i32, i32, i32) {
    %c0_i32 = arith.constant 0 : i32
    %c0_i32_0 = arith.constant 0 : i32
    %c0_i32_1 = arith.constant 0 : i32
    %c0_i32_2 = arith.constant 0 : i32
    return %c0_i32, %c0_i32_0, %c0_i32_1 : i32, i32, i32
  }
  func.func @transform_6(%arg0: i32) -> (i32, i32) {
    %c0_i32 = arith.constant 0 : i32
    %c0_i32_0 = arith.constant 0 : i32
    %c0_i32_1 = arith.constant 0 : i32
    return %c0_i32, %c0_i32_0 : i32, i32
  }
  func.func @transform_7(%arg0: i32) -> (i32, i32) {
    %c0_i32 = arith.constant 0 : i32
    %c0_i32_0 = arith.constant 0 : i32
    %c0_i32_1 = arith.constant 0 : i32
    return %c0_i32, %c0_i32_0 : i32, i32
  }
  func.func @transform_8(%arg0: i32) -> (i32, i32) {
    %c0_i32 = arith.constant 0 : i32
    %c0_i32_0 = arith.constant 0 : i32
    %c0_i32_1 = arith.constant 0 : i32
    return %c0_i32, %c0_i32_0 : i32, i32
  }
  func.func @transform_9(%arg0: i32) -> (i32, i32, i32) {
    %c0_i32 = arith.constant 0 : i32
    %c0_i32_0 = arith.constant 0 : i32
    %c0_i32_1 = arith.constant 0 : i32
    %c0_i32_2 = arith.constant 0 : i32
    return %c0_i32, %c0_i32_0, %c0_i32_1 : i32, i32, i32
  }
  func.func @transform_10(%arg0: i32) -> (i32, i32) {
    %c0_i32 = arith.constant 0 : i32
    %c0_i32_0 = arith.constant 0 : i32
    %c0_i32_1 = arith.constant 0 : i32
    return %c0_i32, %c0_i32_0 : i32, i32
  }
  func.func @transform_11(%arg0: i32) -> (i32, i32) {
    %c0_i32 = arith.constant 0 : i32
    %c0_i32_0 = arith.constant 0 : i32
    %c0_i32_1 = arith.constant 0 : i32
    return %c0_i32, %c0_i32_0 : i32, i32
  }
  func.func @transform_12(%arg0: i32) -> (i32, i32) {
    %c0_i32 = arith.constant 0 : i32
    %c0_i32_0 = arith.constant 0 : i32
    %c0_i32_1 = arith.constant 0 : i32
    return %c0_i32, %c0_i32_0 : i32, i32
  }
  func.func @transform_13(%arg0: i32) -> (i32, i32) {
    %c0_i32 = arith.constant 0 : i32
    %c0_i32_0 = arith.constant 0 : i32
    %c0_i32_1 = arith.constant 0 : i32
    return %c0_i32, %c0_i32_0 : i32, i32
  }
  func.func @transform_14(%arg0: i32) -> (i32, i32) {
    %c0_i32 = arith.constant 0 : i32
    %c0_i32_0 = arith.constant 0 : i32
    %c0_i32_1 = arith.constant 0 : i32
    return %c0_i32, %c0_i32_0 : i32, i32
  }
  func.func @transform_15(%arg0: i32) -> (i32, i32) {
    %c0_i32 = arith.constant 0 : i32
    %c0_i32_0 = arith.constant 0 : i32
    return %arg0, %c0_i32 : i32, i32
  }
}

</mosaic_0001>

<llo_original>
// kernel: lenet5_forward.1
$region0: #{lenet5_forward.1}
  #allocation0 [shape = 'u32[]', space=smem, size = 0x4, offset = 0x4, fixed_abs, tag = 'smem constant byte address 0x4 - core index']
  #allocation1 [shape = 'u32[144,128]{1,0:T(1,128)}', space=vmem, size = 0x12000, scoped, tag = 'internal scratch']
  %s0 = inlined_call_operand.vmem [shape: f32[28,16,28], index: 0, kind: input, shape index: {}]
  %s1 = inlined_call_operand.vmem [shape: f32[5,28,144], index: 1, kind: input, shape index: {}]
  %s2 = inlined_call_operand.vmem [shape: f32[1,144], index: 2, kind: input, shape index: {}]
  %s3 = inlined_call_operand.hbm [shape: f32[144,72], index: 3, kind: input, shape index: {}]
  %s4 = inlined_call_operand.hbm [shape: f32[144,72], index: 4, kind: input, shape index: {}]
  %s5 = inlined_call_operand.vmem [shape: f32[5,72,128], index: 5, kind: input, shape index: {}]
  %s6 = inlined_call_operand.vmem [shape: f32[1,128], index: 6, kind: input, shape index: {}]
  %s7 = inlined_call_operand.vmem [shape: f32[128,64], index: 7, kind: input, shape index: {}]
  %s8 = inlined_call_operand.vmem [shape: f32[128,64], index: 8, kind: input, shape index: {}]
  %s9 = inlined_call_operand.vmem [shape: f32[4,64,120], index: 9, kind: input, shape index: {}]
  %s10 = inlined_call_operand.vmem [shape: f32[1,120], index: 10, kind: input, shape index: {}]
  %s11 = inlined_call_operand.vmem [shape: f32[120,84], index: 11, kind: input, shape index: {}]
  %s12 = inlined_call_operand.vmem [shape: f32[1,84], index: 12, kind: input, shape index: {}]
  %s13 = inlined_call_operand.vmem [shape: f32[84,128], index: 13, kind: input, shape index: {}]
  %s14 = inlined_call_operand.vmem [shape: f32[1,128], index: 14, kind: input, shape index: {}]
  %s15 = inlined_call_operand.hbm [shape: f32[16,128], index: 15, kind: output, shape index: {}]
  %s16 = sld [smem:[#allocation0]]
  $region139: #{lenet5_forward.1} parent=0
    _
  %s18 = ssub.s32 1, %s16
  %s19 = scalar_select 0, %s18, %s16
  $region1: #{lenet5_forward.1} parent=0
    #allocation2 [shape = 'u8[229376]{0}', space=vmem, size = 0x38000, scoped, tag = 'input window, operand 0']
    #allocation3 [shape = 'u8[73728]{0}', space=vmem, size = 0x12000, scoped, tag = 'input window, operand 3, single buffered']
    #allocation4 [shape = 's32[2]{0}', space=sflag, size = 0x8, scoped, tag = 'scoped memory for lenet5_forward.1']
    #allocation5 [shape = 's32[2]{0}', space=sflag, size = 0x8, scoped, tag = 'scoped memory for lenet5_forward.1']
    #allocation6 [shape = 'u8[73728]{0}', space=vmem, size = 0x12000, scoped, tag = 'input window, operand 4, single buffered']
    #allocation7 [shape = 's32[1]{0}', space=sflag, size = 0x4, scoped, tag = 'scoped memory for lenet5_forward.1']
    #allocation8 [shape = 'u8[8192]{0}', space=vmem, size = 0x2000, scoped, tag = 'output window, operand 0']
    %20 = vsyncpa [#allocation4], 0
    %21 = vsyncpa [#allocation7], 0
    %22 = vsyncpa [#allocation5], 0
    %s23 = scalar_lea.sflag [#allocation5], 1
    %24 = vsyncpa %s23, 0
    loop: start=0, step=1, limit=4
    $region2: #{lenet5_forward.1} parent=1 // loop_pre_header
      _
    $region3: #{lenet5_forward.1} parent=1 // loop_header
      %s26 = sphi 0, %s30
      %p27 = scmp.ge.s32.totalorder %s26, 4
      %s36 = sphi 0, %s38
      %s39 = sphi 0, %s36
      %s40 = sphi 0, %s39
      %s56 = sphi 0, %s40
      %s60 = sphi 0, %s60
      %s62 = sphi 0, %s60
      %s63 = sphi 0, %s62
      %s77 = sphi 0, %s63
      %s81 = sphi 0, %s81
      %s83 = sphi 0, %s81
      %s84 = sphi 0, %s83
      %s98 = sphi 0, %s84
      %s102 = sphi 0, %s102
      %s104 = sphi 0, %s102
      %s105 = sphi 0, %s104
      %s119 = sphi 0, %s105
      %s123 = sphi 0, %s123
      %s125 = sphi 0, %s123
      %s126 = sphi 0, %s125
      %s140 = sphi 0, %s126
      %s144 = sphi 0, %s144
      %s146 = sphi 0, %s144
      %s147 = sphi 0, %s146
      %s161 = sphi 0, %s147
      %s165 = sphi 0, %s165
      %s167 = sphi 0, %s165
      %s168 = sphi 0, %s167
      %s182 = sphi 0, %s168
      %s186 = sphi 0, %s186
      %s188 = sphi 0, %s186
      %s189 = sphi 0, %s188
      %s203 = sphi 0, %s189
      %s207 = sphi 0, %s207
      %s209 = sphi 0, %s207
      %s210 = sphi 0, %s209
      %s224 = sphi 0, %s210
      %s228 = sphi 0, %s228
      %s230 = sphi 0, %s228
      %s231 = sphi 0, %s230
      %s245 = sphi 0, %s231
      %s249 = sphi 0, %s249
      %s251 = sphi 0, %s249
      %s252 = sphi 0, %s251
      %s266 = sphi 0, %s252
      %s270 = sphi 0, %s270
      %s272 = sphi 0, %s270
      %s273 = sphi 0, %s272
      %s287 = sphi 0, %s273
      %s291 = sphi 0, %s291
      %s293 = sphi 0, %s291
      %s294 = sphi 0, %s293
      %s308 = sphi 0, %s294
      %s312 = sphi 0, %s312
      %s314 = sphi 0, %s312
      %s315 = sphi 0, %s314
      %s329 = sphi 0, %s315
      %s333 = sphi 0, %s333
      %s335 = sphi 0, %s333
      %s336 = sphi 0, %s335
      %s350 = sphi 0, %s336
      %s356 = sphi 0, %s358
      %s359 = sphi 0, %s356
      %s360 = sphi 0, %s359
      %s376 = sphi 0, %s360
    $region4: #{lenet5_forward.1} parent=1 // loop_header_branch
      %29 = sbr.rel (%p27) target = $region8
    $region5: #{lenet5_forward.1} parent=1 // loop_body
      %s31 = ssub.s32 %s26, 1
      %s32 = ssub.s32 %s26, 2
      %s33 = sadd.s32 %s26, 1
      %s34 = ssub.s32 %s26, %s33
      %p35 = scmp.eq.s32.totalorder %s34, 0
      %s37 = sadd.s32 %s36, 1
      %s38 = scalar_select %p35, %s36, %s37
      %p41 = pneg %p35
      %p42 = scmp.eq.s32.totalorder %s26, 1
      %p43 = por %p41, %p42
      %p44 = scmp.ne.s32.totalorder %s36, %s39
      %p45 = scmp.eq.s32.totalorder %s26, 0
      %p46 = por %p44, %p45
      %p47 = scmp.ne.s32.totalorder %s36, %s39
      %p48 = scmp.eq.s32.totalorder %s31, 1
      %p49 = por %p47, %p48
      %p50 = scmp.ne.s32.totalorder %s39, %s40
      %p51 = scmp.eq.s32.totalorder %s31, 0
      %p52 = por %p50, %p51
      %p53 = scmp.ne.s32.totalorder %s39, %s40
      %p54 = scmp.eq.s32.totalorder %s32, 1
      %p55 = por %p53, %p54
      %p57 = scmp.ne.s32.totalorder %s40, %s56
      %p58 = scmp.eq.s32.totalorder %s32, 0
      %p59 = por %p57, %p58
      %s61 = sadd.s32 %s60, 1
      %p64 = scmp.eq.s32.totalorder %s26, 1
      %p65 = scmp.ne.s32.totalorder %s60, %s62
      %p66 = scmp.eq.s32.totalorder %s26, 0
      %p67 = por %p65, %p66
      %p68 = scmp.ne.s32.totalorder %s60, %s62
      %p69 = scmp.eq.s32.totalorder %s31, 1
      %p70 = por %p68, %p69
      %p71 = scmp.ne.s32.totalorder %s62, %s63
      %p72 = scmp.eq.s32.totalorder %s31, 0
      %p73 = por %p71, %p72
      %p74 = scmp.ne.s32.totalorder %s62, %s63
      %p75 = scmp.eq.s32.totalorder %s32, 1
      %p76 = por %p74, %p75
      %p78 = scmp.ne.s32.totalorder %s63, %s77
      %p79 = scmp.eq.s32.totalorder %s32, 0
      %p80 = por %p78, %p79
      %s82 = sadd.s32 %s81, 1
      %p85 = scmp.eq.s32.totalorder %s26, 1
      %p86 = scmp.ne.s32.totalorder %s81, %s83
      %p87 = scmp.eq.s32.totalorder %s26, 0
      %p88 = por %p86, %p87
      %p89 = scmp.ne.s32.totalorder %s81, %s83
      %p90 = scmp.eq.s32.totalorder %s31, 1
      %p91 = por %p89, %p90
      %p92 = scmp.ne.s32.totalorder %s83, %s84
      %p93 = scmp.eq.s32.totalorder %s31, 0
      %p94 = por %p92, %p93
      %p95 = scmp.ne.s32.totalorder %s83, %s84
      %p96 = scmp.eq.s32.totalorder %s32, 1
      %p97 = por %p95, %p96
      %p99 = scmp.ne.s32.totalorder %s84, %s98
      %p100 = scmp.eq.s32.totalorder %s32, 0
      %p101 = por %p99, %p100
      %s103 = sadd.s32 %s102, 1
      %p106 = scmp.eq.s32.totalorder %s26, 1
      %p107 = scmp.ne.s32.totalorder %s102, %s104
      %p108 = scmp.eq.s32.totalorder %s26, 0
      %p109 = por %p107, %p108
      %p110 = scmp.ne.s32.totalorder %s102, %s104
      %p111 = scmp.eq.s32.totalorder %s31, 1
      %p112 = por %p110, %p111
      %p113 = scmp.ne.s32.totalorder %s104, %s105
      %p114 = scmp.eq.s32.totalorder %s31, 0
      %p115 = por %p113, %p114
      %p116 = scmp.ne.s32.totalorder %s104, %s105
      %p117 = scmp.eq.s32.totalorder %s32, 1
      %p118 = por %p116, %p117
      %p120 = scmp.ne.s32.totalorder %s105, %s119
      %p121 = scmp.eq.s32.totalorder %s32, 0
      %p122 = por %p120, %p121
      %s124 = sadd.s32 %s123, 1
      %p127 = scmp.eq.s32.totalorder %s26, 1
      %p128 = scmp.ne.s32.totalorder %s123, %s125
      %p129 = scmp.eq.s32.totalorder %s26, 0
      %p130 = por %p128, %p129
      %p131 = scmp.ne.s32.totalorder %s123, %s125
      %p132 = scmp.eq.s32.totalorder %s31, 1
      %p133 = por %p131, %p132
      %p134 = scmp.ne.s32.totalorder %s125, %s126
      %p135 = scmp.eq.s32.totalorder %s31, 0
      %p136 = por %p134, %p135
      %p137 = scmp.ne.s32.totalorder %s125, %s126
      %p138 = scmp.eq.s32.totalorder %s32, 1
      %p139 = por %p137, %p138
      %p141 = scmp.ne.s32.totalorder %s126, %s140
      %p142 = scmp.eq.s32.totalorder %s32, 0
      %p143 = por %p141, %p142
      %s145 = sadd.s32 %s144, 1
      %p148 = scmp.eq.s32.totalorder %s26, 1
      %p149 = scmp.ne.s32.totalorder %s144, %s146
      %p150 = scmp.eq.s32.totalorder %s26, 0
      %p151 = por %p149, %p150
      %p152 = scmp.ne.s32.totalorder %s144, %s146
      %p153 = scmp.eq.s32.totalorder %s31, 1
      %p154 = por %p152, %p153
      %p155 = scmp.ne.s32.totalorder %s146, %s147
      %p156 = scmp.eq.s32.totalorder %s31, 0
      %p157 = por %p155, %p156
      %p158 = scmp.ne.s32.totalorder %s146, %s147
      %p159 = scmp.eq.s32.totalorder %s32, 1
      %p160 = por %p158, %p159
      %p162 = scmp.ne.s32.totalorder %s147, %s161
      %p163 = scmp.eq.s32.totalorder %s32, 0
      %p164 = por %p162, %p163
      %s166 = sadd.s32 %s165, 1
      %p169 = scmp.eq.s32.totalorder %s26, 1
      %p170 = scmp.ne.s32.totalorder %s165, %s167
      %p171 = scmp.eq.s32.totalorder %s26, 0
      %p172 = por %p170, %p171
      %p173 = scmp.ne.s32.totalorder %s165, %s167
      %p174 = scmp.eq.s32.totalorder %s31, 1
      %p175 = por %p173, %p174
      %p176 = scmp.ne.s32.totalorder %s167, %s168
      %p177 = scmp.eq.s32.totalorder %s31, 0
      %p178 = por %p176, %p177
      %p179 = scmp.ne.s32.totalorder %s167, %s168
      %p180 = scmp.eq.s32.totalorder %s32, 1
      %p181 = por %p179, %p180
      %p183 = scmp.ne.s32.totalorder %s168, %s182
      %p184 = scmp.eq.s32.totalorder %s32, 0
      %p185 = por %p183, %p184
      %s187 = sadd.s32 %s186, 1
      %p190 = scmp.eq.s32.totalorder %s26, 1
      %p191 = scmp.ne.s32.totalorder %s186, %s188
      %p192 = scmp.eq.s32.totalorder %s26, 0
      %p193 = por %p191, %p192
      %p194 = scmp.ne.s32.totalorder %s186, %s188
      %p195 = scmp.eq.s32.totalorder %s31, 1
      %p196 = por %p194, %p195
      %p197 = scmp.ne.s32.totalorder %s188, %s189
      %p198 = scmp.eq.s32.totalorder %s31, 0
      %p199 = por %p197, %p198
      %p200 = scmp.ne.s32.totalorder %s188, %s189
      %p201 = scmp.eq.s32.totalorder %s32, 1
      %p202 = por %p200, %p201
      %p204 = scmp.ne.s32.totalorder %s189, %s203
      %p205 = scmp.eq.s32.totalorder %s32, 0
      %p206 = por %p204, %p205
      %s208 = sadd.s32 %s207, 1
      %p211 = scmp.eq.s32.totalorder %s26, 1
      %p212 = scmp.ne.s32.totalorder %s207, %s209
      %p213 = scmp.eq.s32.totalorder %s26, 0
      %p214 = por %p212, %p213
      %p215 = scmp.ne.s32.totalorder %s207, %s209
      %p216 = scmp.eq.s32.totalorder %s31, 1
      %p217 = por %p215, %p216
      %p218 = scmp.ne.s32.totalorder %s209, %s210
      %p219 = scmp.eq.s32.totalorder %s31, 0
      %p220 = por %p218, %p219
      %p221 = scmp.ne.s32.totalorder %s209, %s210
      %p222 = scmp.eq.s32.totalorder %s32, 1
      %p223 = por %p221, %p222
      %p225 = scmp.ne.s32.totalorder %s210, %s224
      %p226 = scmp.eq.s32.totalorder %s32, 0
      %p227 = por %p225, %p226
      %s229 = sadd.s32 %s228, 1
      %p232 = scmp.eq.s32.totalorder %s26, 1
      %p233 = scmp.ne.s32.totalorder %s228, %s230
      %p234 = scmp.eq.s32.totalorder %s26, 0
      %p235 = por %p233, %p234
      %p236 = scmp.ne.s32.totalorder %s228, %s230
      %p237 = scmp.eq.s32.totalorder %s31, 1
      %p238 = por %p236, %p237
      %p239 = scmp.ne.s32.totalorder %s230, %s231
      %p240 = scmp.eq.s32.totalorder %s31, 0
      %p241 = por %p239, %p240
      %p242 = scmp.ne.s32.totalorder %s230, %s231
      %p243 = scmp.eq.s32.totalorder %s32, 1
      %p244 = por %p242, %p243
      %p246 = scmp.ne.s32.totalorder %s231, %s245
      %p247 = scmp.eq.s32.totalorder %s32, 0
      %p248 = por %p246, %p247
      %s250 = sadd.s32 %s249, 1
      %p253 = scmp.eq.s32.totalorder %s26, 1
      %p254 = scmp.ne.s32.totalorder %s249, %s251
      %p255 = scmp.eq.s32.totalorder %s26, 0
      %p256 = por %p254, %p255
      %p257 = scmp.ne.s32.totalorder %s249, %s251
      %p258 = scmp.eq.s32.totalorder %s31, 1
      %p259 = por %p257, %p258
      %p260 = scmp.ne.s32.totalorder %s251, %s252
      %p261 = scmp.eq.s32.totalorder %s31, 0
      %p262 = por %p260, %p261
      %p263 = scmp.ne.s32.totalorder %s251, %s252
      %p264 = scmp.eq.s32.totalorder %s32, 1
      %p265 = por %p263, %p264
      %p267 = scmp.ne.s32.totalorder %s252, %s266
      %p268 = scmp.eq.s32.totalorder %s32, 0
      %p269 = por %p267, %p268
      %s271 = sadd.s32 %s270, 1
      %p274 = scmp.eq.s32.totalorder %s26, 1
      %p275 = scmp.ne.s32.totalorder %s270, %s272
      %p276 = scmp.eq.s32.totalorder %s26, 0
      %p277 = por %p275, %p276
      %p278 = scmp.ne.s32.totalorder %s270, %s272
      %p279 = scmp.eq.s32.totalorder %s31, 1
      %p280 = por %p278, %p279
      %p281 = scmp.ne.s32.totalorder %s272, %s273
      %p282 = scmp.eq.s32.totalorder %s31, 0
      %p283 = por %p281, %p282
      %p284 = scmp.ne.s32.totalorder %s272, %s273
      %p285 = scmp.eq.s32.totalorder %s32, 1
      %p286 = por %p284, %p285
      %p288 = scmp.ne.s32.totalorder %s273, %s287
      %p289 = scmp.eq.s32.totalorder %s32, 0
      %p290 = por %p288, %p289
      %s292 = sadd.s32 %s291, 1
      %p295 = scmp.eq.s32.totalorder %s26, 1
      %p296 = scmp.ne.s32.totalorder %s291, %s293
      %p297 = scmp.eq.s32.totalorder %s26, 0
      %p298 = por %p296, %p297
      %p299 = scmp.ne.s32.totalorder %s291, %s293
      %p300 = scmp.eq.s32.totalorder %s31, 1
      %p301 = por %p299, %p300
      %p302 = scmp.ne.s32.totalorder %s293, %s294
      %p303 = scmp.eq.s32.totalorder %s31, 0
      %p304 = por %p302, %p303
      %p305 = scmp.ne.s32.totalorder %s293, %s294
      %p306 = scmp.eq.s32.totalorder %s32, 1
      %p307 = por %p305, %p306
      %p309 = scmp.ne.s32.totalorder %s294, %s308
      %p310 = scmp.eq.s32.totalorder %s32, 0
      %p311 = por %p309, %p310
      %s313 = sadd.s32 %s312, 1
      %p316 = scmp.eq.s32.totalorder %s26, 1
      %p317 = scmp.ne.s32.totalorder %s312, %s314
      %p318 = scmp.eq.s32.totalorder %s26, 0
      %p319 = por %p317, %p318
      %p320 = scmp.ne.s32.totalorder %s312, %s314
      %p321 = scmp.eq.s32.totalorder %s31, 1
      %p322 = por %p320, %p321
      %p323 = scmp.ne.s32.totalorder %s314, %s315
      %p324 = scmp.eq.s32.totalorder %s31, 0
      %p325 = por %p323, %p324
      %p326 = scmp.ne.s32.totalorder %s314, %s315
      %p327 = scmp.eq.s32.totalorder %s32, 1
      %p328 = por %p326, %p327
      %p330 = scmp.ne.s32.totalorder %s315, %s329
      %p331 = scmp.eq.s32.totalorder %s32, 0
      %p332 = por %p330, %p331
      %s334 = sadd.s32 %s333, 1
      %p337 = scmp.eq.s32.totalorder %s26, 1
      %p338 = scmp.ne.s32.totalorder %s333, %s335
      %p339 = scmp.eq.s32.totalorder %s26, 0
      %p340 = por %p338, %p339
      %p341 = scmp.ne.s32.totalorder %s333, %s335
      %p342 = scmp.eq.s32.totalorder %s31, 1
      %p343 = por %p341, %p342
      %p344 = scmp.ne.s32.totalorder %s335, %s336
      %p345 = scmp.eq.s32.totalorder %s31, 0
      %p346 = por %p344, %p345
      %p347 = scmp.ne.s32.totalorder %s335, %s336
      %p348 = scmp.eq.s32.totalorder %s32, 1
      %p349 = por %p347, %p348
      %p351 = scmp.ne.s32.totalorder %s336, %s350
      %p352 = scmp.eq.s32.totalorder %s32, 0
      %p353 = por %p351, %p352
      %s354 = ssub.s32 %s26, %s33
      %p355 = scmp.eq.s32.totalorder %s354, 0
      %s357 = sadd.s32 %s356, 1
      %s358 = scalar_select %p355, %s356, %s357
      %p361 = pneg %p355
      %p362 = scmp.eq.s32.totalorder %s26, 1
      %p363 = por %p361, %p362
      %p364 = scmp.ne.s32.totalorder %s356, %s359
      %p365 = scmp.eq.s32.totalorder %s26, 0
      %p366 = por %p364, %p365
      %p367 = scmp.ne.s32.totalorder %s356, %s359
      %p368 = scmp.eq.s32.totalorder %s31, 1
      %p369 = por %p367, %p368
      %p370 = scmp.ne.s32.totalorder %s359, %s360
      %p371 = scmp.eq.s32.totalorder %s31, 0
      %p372 = por %p370, %p371
      %p373 = scmp.ne.s32.totalorder %s359, %s360
      %p374 = scmp.eq.s32.totalorder %s32, 1
      %p375 = por %p373, %p374
      %p377 = scmp.ne.s32.totalorder %s360, %s376
      %p378 = scmp.eq.s32.totalorder %s32, 0
      %p379 = por %p377, %p378
      %p380 = scmp.le.s32.totalorder 1, %s26
      %p381 = scmp.lt.s32.totalorder %s26, 3
      %p382 = pnand %p380, %p381
      %p383 = pneg %p382
      // Predicated region
      $region9: #{lenet5_forward.1} parent=5 // pred_check
        _
      $region10: #{lenet5_forward.1} parent=5 // pred_check_branch
        %385 = sbr.rel (%p382) target = $region12
      $region11: #{lenet5_forward.1} parent=5 // pred_region
        %s386 = ssub.s32 %s26, 1
        // Predicated region
        $region13: #{lenet5_forward.1} parent=11 // pred_check
          %p387 = pneg %p73
        $region14: #{lenet5_forward.1} parent=11 // pred_check_branch
          %389 = sbr.rel (%p387) target = $region16
        $region15: #{lenet5_forward.1} parent=11 // pred_region
          _
        $region16: #{lenet5_forward.1} parent=11 // pred_fallthru
          _
        // Predicated region
        $region17: #{lenet5_forward.1} parent=11 // pred_check
          %p390 = pneg %p94
        $region18: #{lenet5_forward.1} parent=11 // pred_check_branch
          %392 = sbr.rel (%p390) target = $region20
        $region19: #{lenet5_forward.1} parent=11 // pred_region
          _
        $region20: #{lenet5_forward.1} parent=11 // pred_fallthru
          _
        // Predicated region
        $region21: #{lenet5_forward.1} parent=11 // pred_check
          %p393 = pneg %p115
        $region22: #{lenet5_forward.1} parent=11 // pred_check_branch
          %395 = sbr.rel (%p393) target = $region24
        $region23: #{lenet5_forward.1} parent=11 // pred_region
          %s397 = ssub.s32 2304, 2304
          %398 = vsyncadd [#allocation4], %s397
          %s399 = sshll.u32 [#allocation3], 4
          %s400 = int_to_ptr.vmem [resolvable:$true] %s399
          %405 = dma.hbm_to_vmem [thread:$0]  %s3, 2304, %s400, [#allocation4], 128, 128, 8
        $region24: #{lenet5_forward.1} parent=11 // pred_fallthru
          _
        // Predicated region
        $region25: #{lenet5_forward.1} parent=11 // pred_check
          %p406 = pneg %p136
        $region26: #{lenet5_forward.1} parent=11 // pred_check_branch
          %408 = sbr.rel (%p406) target = $region28
        $region27: #{lenet5_forward.1} parent=11 // pred_region
          %s410 = ssub.s32 2304, 2304
          %411 = vsyncadd [#allocation7], %s410
          %s412 = sshll.u32 [#allocation6], 4
          %s413 = int_to_ptr.vmem [resolvable:$true] %s412
          %418 = dma.hbm_to_vmem [thread:$0]  %s4, 2304, %s413, [#allocation7], 128, 128, 8
        $region28: #{lenet5_forward.1} parent=11 // pred_fallthru
          _
        // Predicated region
        $region29: #{lenet5_forward.1} parent=11 // pred_check
          %p419 = pneg %p157
        $region30: #{lenet5_forward.1} parent=11 // pred_check_branch
          %421 = sbr.rel (%p419) target = $region32
        $region31: #{lenet5_forward.1} parent=11 // pred_region
          _
        $region32: #{lenet5_forward.1} parent=11 // pred_fallthru
          _
        // Predicated region
        $region33: #{lenet5_forward.1} parent=11 // pred_check
          %p422 = pneg %p178
        $region34: #{lenet5_forward.1} parent=11 // pred_check_branch
          %424 = sbr.rel (%p422) target = $region36
        $region35: #{lenet5_forward.1} parent=11 // pred_region
          _
        $region36: #{lenet5_forward.1} parent=11 // pred_fallthru
          _
        // Predicated region
        $region37: #{lenet5_forward.1} parent=11 // pred_check
          %p425 = pneg %p199
        $region38: #{lenet5_forward.1} parent=11 // pred_check_branch
          %427 = sbr.rel (%p425) target = $region40
        $region39: #{lenet5_forward.1} parent=11 // pred_region
          _
        $region40: #{lenet5_forward.1} parent=11 // pred_fallthru
          _
        // Predicated region
        $region41: #{lenet5_forward.1} parent=11 // pred_check
          %p428 = pneg %p220
        $region42: #{lenet5_forward.1} parent=11 // pred_check_branch
          %430 = sbr.rel (%p428) target = $region44
        $region43: #{lenet5_forward.1} parent=11 // pred_region
          _
        $region44: #{lenet5_forward.1} parent=11 // pred_fallthru
          _
        // Predicated region
        $region45: #{lenet5_forward.1} parent=11 // pred_check
          %p431 = pneg %p241
        $region46: #{lenet5_forward.1} parent=11 // pred_check_branch
          %433 = sbr.rel (%p431) target = $region48
        $region47: #{lenet5_forward.1} parent=11 // pred_region
          _
        $region48: #{lenet5_forward.1} parent=11 // pred_fallthru
          _
        // Predicated region
        $region49: #{lenet5_forward.1} parent=11 // pred_check
          %p434 = pneg %p262
        $region50: #{lenet5_forward.1} parent=11 // pred_check_branch
          %436 = sbr.rel (%p434) target = $region52
        $region51: #{lenet5_forward.1} parent=11 // pred_region
          _
        $region52: #{lenet5_forward.1} parent=11 // pred_fallthru
          _
        // Predicated region
        $region53: #{lenet5_forward.1} parent=11 // pred_check
          %p437 = pneg %p283
        $region54: #{lenet5_forward.1} parent=11 // pred_check_branch
          %439 = sbr.rel (%p437) target = $region56
        $region55: #{lenet5_forward.1} parent=11 // pred_region
          _
        $region56: #{lenet5_forward.1} parent=11 // pred_fallthru
          _
        // Predicated region
        $region57: #{lenet5_forward.1} parent=11 // pred_check
          %p440 = pneg %p304
        $region58: #{lenet5_forward.1} parent=11 // pred_check_branch
          %442 = sbr.rel (%p440) target = $region60
        $region59: #{lenet5_forward.1} parent=11 // pred_region
          _
        $region60: #{lenet5_forward.1} parent=11 // pred_fallthru
          _
        // Predicated region
        $region61: #{lenet5_forward.1} parent=11 // pred_check
          %p443 = pneg %p325
        $region62: #{lenet5_forward.1} parent=11 // pred_check_branch
          %445 = sbr.rel (%p443) target = $region64
        $region63: #{lenet5_forward.1} parent=11 // pred_region
          _
        $region64: #{lenet5_forward.1} parent=11 // pred_fallthru
          _
        // Predicated region
        $region65: #{lenet5_forward.1} parent=11 // pred_check
          %p446 = pneg %p346
        $region66: #{lenet5_forward.1} parent=11 // pred_check_branch
          %448 = sbr.rel (%p446) target = $region68
        $region67: #{lenet5_forward.1} parent=11 // pred_region
          _
        $region68: #{lenet5_forward.1} parent=11 // pred_fallthru
          _
      $region12: #{lenet5_forward.1} parent=5 // pred_fallthru
        _
      %p449 = scmp.lt.s32.totalorder %s26, 2
      // Predicated region
      $region69: #{lenet5_forward.1} parent=5 // pred_check
        %p450 = pneg %p449
      $region70: #{lenet5_forward.1} parent=5 // pred_check_branch
        %452 = sbr.rel (%p450) target = $region72
      $region71: #{lenet5_forward.1} parent=5 // pred_region
        // Predicated region
        $region73: #{lenet5_forward.1} parent=71 // pred_check
          %p453 = pneg %p46
        $region74: #{lenet5_forward.1} parent=71 // pred_check_branch
          %455 = sbr.rel (%p453) target = $region76
        $region75: #{lenet5_forward.1} parent=71 // pred_region
          %s456 = sand.u32 %s36, 1
          %s457 = sand.u32 %s36, 1
          %s458 = smul.addr %s457, 224
          %s459 = scalar_lea.vmem [#allocation2], %s458
          %s460 = smul.addr %s26, 8
          %s461 = scalar_lea.vmem %s0, %s460
          // Predicated region
          $region77: #{lenet5_forward.1} parent=75 // pred_check
            _
          $region78: #{lenet5_forward.1} parent=75 // pred_check_branch
            %463 = sbr.rel (0) target = $region80
          $region79: #{lenet5_forward.1} parent=75 // pred_region
            // Predicated region
            $region81: #{lenet5_forward.1} parent=79 // pred_check
              _
            $region82: #{lenet5_forward.1} parent=79 // pred_check_branch
              %465 = sbr.rel (0) target = $region84
            $region83: #{lenet5_forward.1} parent=79 // pred_region
              // Predicated region
              $region96: #{lenet5_forward.1} parent=83 // pred_check
                _
              $region97: #{lenet5_forward.1} parent=83 // pred_check_branch
                %534 = sbr.rel (0) target = $region99
              $region98: #{lenet5_forward.1} parent=83 // pred_region
                loop: start=0, step=1, limit=1
                $region100: #{lenet5_forward.1} parent=98 // loop_pre_header
                  _
                $region101: #{lenet5_forward.1} parent=98 // loop_header
                  %s536 = sphi 0, %s540
                  %p537 = scmp.ge.s32.totalorder %s536, 1
                  %s541 = sphi %s461, %s461
                  %s542 = sphi %s459, %s459
                $region102: #{lenet5_forward.1} parent=98 // loop_header_branch
                  %539 = sbr.rel (%p537) target = $region106
                $region103: #{lenet5_forward.1} parent=98 // loop_body
                  %v543 = vld [vmem:[%s541] sm:$0xff]
                  %544 = vst [vmem:[%s542] sm:$0xff] %v543
                  %v545 = vld [vmem:[%s541 + $0x10] sm:$0xff]
                  %546 = vst [vmem:[%s542 + $0x8] sm:$0xff] %v545
                  %v547 = vld [vmem:[%s541 + $0x20] sm:$0xff]
                  %548 = vst [vmem:[%s542 + $0x10] sm:$0xff] %v547
                  %v549 = vld [vmem:[%s541 + $0x30] sm:$0xff]
                  %550 = vst [vmem:[%s542 + $0x18] sm:$0xff] %v549
                  %v551 = vld [vmem:[%s541 + $0x40] sm:$0xff]
                  %552 = vst [vmem:[%s542 + $0x20] sm:$0xff] %v551
                  %v553 = vld [vmem:[%s541 + $0x50] sm:$0xff]
                  %554 = vst [vmem:[%s542 + $0x28] sm:$0xff] %v553
                  %v555 = vld [vmem:[%s541 + $0x60] sm:$0xff]
                  %556 = vst [vmem:[%s542 + $0x30] sm:$0xff] %v555
                  %v557 = vld [vmem:[%s541 + $0x70] sm:$0xff]
                  %558 = vst [vmem:[%s542 + $0x38] sm:$0xff] %v557
                  %v559 = vld [vmem:[%s541 + $0x80] sm:$0xff]
                  %560 = vst [vmem:[%s542 + $0x40] sm:$0xff] %v559
                  %v561 = vld [vmem:[%s541 + $0x90] sm:$0xff]
                  %562 = vst [vmem:[%s542 + $0x48] sm:$0xff] %v561
                  %v563 = vld [vmem:[%s541 + $0xa0] sm:$0xff]
                  %564 = vst [vmem:[%s542 + $0x50] sm:$0xff] %v563
                  %v565 = vld [vmem:[%s541 + $0xb0] sm:$0xff]
                  %566 = vst [vmem:[%s542 + $0x58] sm:$0xff] %v565
                  %v567 = vld [vmem:[%s541 + $0xc0] sm:$0xff]
                  %568 = vst [vmem:[%s542 + $0x60] sm:$0xff] %v567
                  %v569 = vld [vmem:[%s541 + $0xd0] sm:$0xff]
                  %570 = vst [vmem:[%s542 + $0x68] sm:$0xff] %v569
                  %v571 = vld [vmem:[%s541 + $0xe0] sm:$0xff]
                  %572 = vst [vmem:[%s542 + $0x70] sm:$0xff] %v571
                  %v573 = vld [vmem:[%s541 + $0xf0] sm:$0xff]
                  %574 = vst [vmem:[%s542 + $0x78] sm:$0xff] %v573
                  %v575 = vld [vmem:[%s541 + $0x100] sm:$0xff]
                  %576 = vst [vmem:[%s542 + $0x80] sm:$0xff] %v575
                  %v577 = vld [vmem:[%s541 + $0x110] sm:$0xff]
                  %578 = vst [vmem:[%s542 + $0x88] sm:$0xff] %v577
                  %v579 = vld [vmem:[%s541 + $0x120] sm:$0xff]
                  %580 = vst [vmem:[%s542 + $0x90] sm:$0xff] %v579
                  %v581 = vld [vmem:[%s541 + $0x130] sm:$0xff]
                  %582 = vst [vmem:[%s542 + $0x98] sm:$0xff] %v581
                  %v583 = vld [vmem:[%s541 + $0x140] sm:$0xff]
                  %584 = vst [vmem:[%s542 + $0xa0] sm:$0xff] %v583
                  %v585 = vld [vmem:[%s541 + $0x150] sm:$0xff]
                  %586 = vst [vmem:[%s542 + $0xa8] sm:$0xff] %v585
                  %v587 = vld [vmem:[%s541 + $0x160] sm:$0xff]
                  %588 = vst [vmem:[%s542 + $0xb0] sm:$0xff] %v587
                  %v589 = vld [vmem:[%s541 + $0x170] sm:$0xff]
                  %590 = vst [vmem:[%s542 + $0xb8] sm:$0xff] %v589
                  %v591 = vld [vmem:[%s541 + $0x180] sm:$0xff]
                  %592 = vst [vmem:[%s542 + $0xc0] sm:$0xff] %v591
                  %v593 = vld [vmem:[%s541 + $0x190] sm:$0xff]
                  %594 = vst [vmem:[%s542 + $0xc8] sm:$0xff] %v593
                  %v595 = vld [vmem:[%s541 + $0x1a0] sm:$0xff]
                  %596 = vst [vmem:[%s542 + $0xd0] sm:$0xff] %v595
                  %v597 = vld [vmem:[%s541 + $0x1b0] sm:$0xff]
                  %598 = vst [vmem:[%s542 + $0xd8] sm:$0xff] %v597
                $region104: #{lenet5_forward.1} parent=98 // loop_footer
                  %s540 = sadd.s32 1, %s536
                $region105: #{lenet5_forward.1} parent=98 // loop_footer_branch
                  %535 = sbr.rel target = $region101
                $region106: #{lenet5_forward.1} parent=98 // loop_exit
                  _
              $region99: #{lenet5_forward.1} parent=83 // pred_fallthru
                _
              // Predicated region
              $region107: #{lenet5_forward.1} parent=83 // pred_check
                _
              $region108: #{lenet5_forward.1} parent=83 // pred_check_branch
                %600 = sbr.rel target = $region110
              $region109: #{lenet5_forward.1} parent=83 // pred_region
                _
              $region110: #{lenet5_forward.1} parent=83 // pred_fallthru
                _
            $region84: #{lenet5_forward.1} parent=79 // pred_fallthru
              _
            // Predicated region
            $region85: #{lenet5_forward.1} parent=79 // pred_check
              _
            $region86: #{lenet5_forward.1} parent=79 // pred_check_branch
              %467 = sbr.rel target = $region88
            $region87: #{lenet5_forward.1} parent=79 // pred_region
              loop: start=0, step=1, limit=1
              $region89: #{lenet5_forward.1} parent=87 // loop_pre_header
                _
              $region90: #{lenet5_forward.1} parent=87 // loop_header
                %s470 = sphi 0, %s474
                %p471 = scmp.ge.s32.totalorder %s470, 1
                %s475 = sphi %s461, %s461
                %s476 = sphi %s459, %s459
              $region91: #{lenet5_forward.1} parent=87 // loop_header_branch
                %473 = sbr.rel (%p471) target = $region95
              $region92: #{lenet5_forward.1} parent=87 // loop_body
                %v477 = vld [vmem:[%s475] sm:$0xff]
                %478 = vst [vmem:[%s476] sm:$0xff] %v477
                %v479 = vld [vmem:[%s475 + $0x10] sm:$0xff]
                %480 = vst [vmem:[%s476 + $0x8] sm:$0xff] %v479
                %v481 = vld [vmem:[%s475 + $0x20] sm:$0xff]
                %482 = vst [vmem:[%s476 + $0x10] sm:$0xff] %v481
                %v483 = vld [vmem:[%s475 + $0x30] sm:$0xff]
                %484 = vst [vmem:[%s476 + $0x18] sm:$0xff] %v483
                %v485 = vld [vmem:[%s475 + $0x40] sm:$0xff]
                %486 = vst [vmem:[%s476 + $0x20] sm:$0xff] %v485
                %v487 = vld [vmem:[%s475 + $0x50] sm:$0xff]
                %488 = vst [vmem:[%s476 + $0x28] sm:$0xff] %v487
                %v489 = vld [vmem:[%s475 + $0x60] sm:$0xff]
                %490 = vst [vmem:[%s476 + $0x30] sm:$0xff] %v489
                %v491 = vld [vmem:[%s475 + $0x70] sm:$0xff]
                %492 = vst [vmem:[%s476 + $0x38] sm:$0xff] %v491
                %v493 = vld [vmem:[%s475 + $0x80] sm:$0xff]
                %494 = vst [vmem:[%s476 + $0x40] sm:$0xff] %v493
                %v495 = vld [vmem:[%s475 + $0x90] sm:$0xff]
                %496 = vst [vmem:[%s476 + $0x48] sm:$0xff] %v495
                %v497 = vld [vmem:[%s475 + $0xa0] sm:$0xff]
                %498 = vst [vmem:[%s476 + $0x50] sm:$0xff] %v497
                %v499 = vld [vmem:[%s475 + $0xb0] sm:$0xff]
                %500 = vst [vmem:[%s476 + $0x58] sm:$0xff] %v499
                %v501 = vld [vmem:[%s475 + $0xc0] sm:$0xff]
                %502 = vst [vmem:[%s476 + $0x60] sm:$0xff] %v501
                %v503 = vld [vmem:[%s475 + $0xd0] sm:$0xff]
                %504 = vst [vmem:[%s476 + $0x68] sm:$0xff] %v503
                %v505 = vld [vmem:[%s475 + $0xe0] sm:$0xff]
                %506 = vst [vmem:[%s476 + $0x70] sm:$0xff] %v505
                %v507 = vld [vmem:[%s475 + $0xf0] sm:$0xff]
                %508 = vst [vmem:[%s476 + $0x78] sm:$0xff] %v507
                %v509 = vld [vmem:[%s475 + $0x100] sm:$0xff]
                %510 = vst [vmem:[%s476 + $0x80] sm:$0xff] %v509
                %v511 = vld [vmem:[%s475 + $0x110] sm:$0xff]
                %512 = vst [vmem:[%s476 + $0x88] sm:$0xff] %v511
                %v513 = vld [vmem:[%s475 + $0x120] sm:$0xff]
                %514 = vst [vmem:[%s476 + $0x90] sm:$0xff] %v513
                %v515 = vld [vmem:[%s475 + $0x130] sm:$0xff]
                %516 = vst [vmem:[%s476 + $0x98] sm:$0xff] %v515
                %v517 = vld [vmem:[%s475 + $0x140] sm:$0xff]
                %518 = vst [vmem:[%s476 + $0xa0] sm:$0xff] %v517
                %v519 = vld [vmem:[%s475 + $0x150] sm:$0xff]
                %520 = vst [vmem:[%s476 + $0xa8] sm:$0xff] %v519
                %v521 = vld [vmem:[%s475 + $0x160] sm:$0xff]
                %522 = vst [vmem:[%s476 + $0xb0] sm:$0xff] %v521
                %v523 = vld [vmem:[%s475 + $0x170] sm:$0xff]
                %524 = vst [vmem:[%s476 + $0xb8] sm:$0xff] %v523
                %v525 = vld [vmem:[%s475 + $0x180] sm:$0xff]
                %526 = vst [vmem:[%s476 + $0xc0] sm:$0xff] %v525
                %v527 = vld [vmem:[%s475 + $0x190] sm:$0xff]
                %528 = vst [vmem:[%s476 + $0xc8] sm:$0xff] %v527
                %v529 = vld [vmem:[%s475 + $0x1a0] sm:$0xff]
                %530 = vst [vmem:[%s476 + $0xd0] sm:$0xff] %v529
                %v531 = vld [vmem:[%s475 + $0x1b0] sm:$0xff]
                %532 = vst [vmem:[%s476 + $0xd8] sm:$0xff] %v531
              $region93: #{lenet5_forward.1} parent=87 // loop_footer
                %s474 = sadd.s32 1, %s470
              $region94: #{lenet5_forward.1} parent=87 // loop_footer_branch
                %469 = sbr.rel target = $region90
              $region95: #{lenet5_forward.1} parent=87 // loop_exit
                _
            $region88: #{lenet5_forward.1} parent=79 // pred_fallthru
              _
          $region80: #{lenet5_forward.1} parent=75 // pred_fallthru
            _
          %601 = vnop
        $region76: #{lenet5_forward.1} parent=71 // pred_fallthru
          _
      $region72: #{lenet5_forward.1} parent=5 // pred_fallthru
        _
      %p602 = scmp.le.s32.totalorder 1, %s26
      %p603 = scmp.lt.s32.totalorder %s26, 3
      %p604 = pnand %p602, %p603
      %p605 = pneg %p604
      // Predicated region
      $region111: #{lenet5_forward.1} parent=5 // pred_check
        _
      $region112: #{lenet5_forward.1} parent=5 // pred_check_branch
        %607 = sbr.rel (%p604) target = $region114
      $region113: #{lenet5_forward.1} parent=5 // pred_region
        %s608 = ssub.s32 %s26, 1
        %s609 = sand.u32 %s39, 1
        %s610 = sand.u32 %s39, 1
        %s611 = smul.addr %s610, 224
        %s612 = scalar_lea.vmem [#allocation2], %s611
        // Predicated region
        $region115: #{lenet5_forward.1} parent=113 // pred_check
          %p613 = pneg %p52
        $region116: #{lenet5_forward.1} parent=113 // pred_check_branch
          %615 = sbr.rel (%p613) target = $region118
        $region117: #{lenet5_forward.1} parent=113 // pred_region
          _
        $region118: #{lenet5_forward.1} parent=113 // pred_fallthru
          _
        // Predicated region
        $region119: #{lenet5_forward.1} parent=113 // pred_check
          %p616 = pneg %p115
        $region120: #{lenet5_forward.1} parent=113 // pred_check_branch
          %618 = sbr.rel (%p616) target = $region122
        $region121: #{lenet5_forward.1} parent=113 // pred_region
          %619 = dma.done [#allocation4], 2304
        $region122: #{lenet5_forward.1} parent=113 // pred_fallthru
          _
        // Predicated region
        $region123: #{lenet5_forward.1} parent=113 // pred_check
          %p620 = pneg %p136
        $region124: #{lenet5_forward.1} parent=113 // pred_check_branch
          %622 = sbr.rel (%p620) target = $region126
        $region125: #{lenet5_forward.1} parent=113 // pred_region
          %623 = dma.done [#allocation7], 2304
        $region126: #{lenet5_forward.1} parent=113 // pred_fallthru
          _
        %s624 = sand.u32 %s39, 1
        %s625 = sand.u32 %s39, 1
        %s626 = smul.addr %s625, 224
        %s627 = scalar_lea.vmem [#allocation2], %s626
        %p628 = pneg %p52
        %p629 = pneg %p49
        %p630 = pneg %p73
        %p631 = pneg %p70
        %p632 = pneg %p94
        %p633 = pneg %p91
        %p634 = pneg %p115
        %p635 = pneg %p112
        %p636 = pneg %p136
        %p637 = pneg %p133
        %p638 = pneg %p157
        %p639 = pneg %p154
        %p640 = pneg %p178
        %p641 = pneg %p175
        %p642 = pneg %p199
        %p643 = pneg %p196
        %p644 = pneg %p220
        %p645 = pneg %p217
        %p646 = pneg %p241
        %p647 = pneg %p238
        %p648 = pneg %p262
        %p649 = pneg %p259
        %p650 = pneg %p283
        %p651 = pneg %p280
        %p652 = pneg %p304
        %p653 = pneg %p301
        %p654 = pneg %p325
        %p655 = pneg %p322
        %p656 = pneg %p346
        %p657 = pneg %p343
        %p658 = pneg %p372
        %p659 = pneg %p369
        %s660 = sand.u32 %s359, 1
        %s661 = scalar_lea.sflag [#allocation5], %s660
        %s662 = sand.u32 %s359, 1
        %s663 = smul.addr %s662, 8
        %s664 = scalar_lea.vmem [#allocation8], %s663
        %v665 = vld [vmem:[%s612] sm:$0xff]
        %v666 = vld [vmem:[%s612 + $0x8] sm:$0xff]
        %v667 = vld [vmem:[%s612 + $0x10] sm:$0xff]
        %v668 = vld [vmem:[%s612 + $0x18] sm:$0xff]
        %v669 = vld [vmem:[%s612 + $0x20] sm:$0xff]
        %v670 = vld [vmem:[%s612 + $0x28] sm:$0xff]
        %v671 = vld [vmem:[%s612 + $0x30] sm:$0xff]
        %v672 = vld [vmem:[%s612 + $0x38] sm:$0xff]
        %v673 = vld [vmem:[%s612 + $0x40] sm:$0xff]
        %v674 = vld [vmem:[%s612 + $0x48] sm:$0xff]
        %v675 = vld [vmem:[%s612 + $0x50] sm:$0xff]
        %v676 = vld [vmem:[%s612 + $0x58] sm:$0xff]
        %v677 = vld [vmem:[%s612 + $0x60] sm:$0xff]
        %v678 = vld [vmem:[%s612 + $0x68] sm:$0xff]
        %v679 = vld [vmem:[%s612 + $0x70] sm:$0xff]
        %v680 = vld [vmem:[%s612 + $0x78] sm:$0xff]
        %v681 = vld [vmem:[%s612 + $0x80] sm:$0xff]
        %v682 = vld [vmem:[%s612 + $0x88] sm:$0xff]
        %v683 = vld [vmem:[%s612 + $0x90] sm:$0xff]
        %v684 = vld [vmem:[%s612 + $0x98] sm:$0xff]
        %v685 = vld [vmem:[%s612 + $0xa0] sm:$0xff]
        %v686 = vld [vmem:[%s612 + $0xa8] sm:$0xff]
        %v687 = vld [vmem:[%s612 + $0xb0] sm:$0xff]
        %v688 = vld [vmem:[%s612 + $0xb8] sm:$0xff]
        %v689 = vld [vmem:[%s612 + $0xc0] sm:$0xff]
        %v690 = vld [vmem:[%s612 + $0xc8] sm:$0xff]
        %v691 = vld [vmem:[%s612 + $0xd0] sm:$0xff]
        %v692 = vld [vmem:[%s612 + $0xd8] sm:$0xff]
        %v693 = vld [vmem:[%s1] sm:$0xff]
        %v694 = vld [vmem:[%s1 + $0x8] sm:$0xff]
        %v695 = vld [vmem:[%s1 + $0x10] sm:$0xff]
        %v696 = vld [vmem:[%s1 + $0x18] sm:$0xff]
        %v697 = vld [vmem:[%s1 + $0x20] sm:$0xff]
        %v698 = vld [vmem:[%s1 + $0x28] sm:$0xff]
        %v699 = vld [vmem:[%s1 + $0x30] sm:$0xf]
        %v700 = vld [vmem:[%s1 + $0x38] sm:$0xf]
        %s701 = scalar_lea.vmem %s1, 64
        %v702 = vld [vmem:[%s701] sm:$0xff]
        %v703 = vld [vmem:[%s701 + $0x8] sm:$0xff]
        %v704 = vld [vmem:[%s701 + $0x10] sm:$0xff]
        %v705 = vld [vmem:[%s701 + $0x18] sm:$0xff]
        %v706 = vld [vmem:[%s701 + $0x20] sm:$0xff]
        %v707 = vld [vmem:[%s701 + $0x28] sm:$0xff]
        %v708 = vld [vmem:[%s701 + $0x30] sm:$0xf]
        %v709 = vld [vmem:[%s701 + $0x38] sm:$0xf]
        %vm710 = vcmask 228352
        %v712 = vsel %vm710, %v666, 0
        %v715 = vsel %vm710, %v667, 0
        %v718 = vsel %vm710, %v668, 0
        %v721 = vsel %vm710, %v669, 0
        %v724 = vsel %vm710, %v670, 0
        %v727 = vsel %vm710, %v671, 0
        %v730 = vsel %vm710, %v672, 0
        %v733 = vsel %vm710, %v673, 0
        %v736 = vsel %vm710, %v674, 0
        %v739 = vsel %vm710, %v675, 0
        %v742 = vsel %vm710, %v676, 0
        %v745 = vsel %vm710, %v677, 0
        %v748 = vsel %vm710, %v678, 0
        %v751 = vsel %vm710, %v679, 0
        %v754 = vsel %vm710, %v680, 0
        %v757 = vsel %vm710, %v681, 0
        %v760 = vsel %vm710, %v682, 0
        %v763 = vsel %vm710, %v683, 0
        %v766 = vsel %vm710, %v684, 0
        %v769 = vsel %vm710, %v685, 0
        %v772 = vsel %vm710, %v686, 0
        %v775 = vsel %vm710, %v687, 0
        %v778 = vsel %vm710, %v688, 0
        %v781 = vsel %vm710, %v689, 0
        %vm783 = vcmask 1043456
        %v785 = vsel %vm783, %v708, 0
        %v788 = vsel %vm783, %v709, 0
        %790 = vmatprep.subr.mxu0 %v703
        %791 = vmatpush1.msra.mxu0 %v702
        %792 = vmatprep.subr.mxu0 %v705
        %793 = vmatpush1.msra.mxu0 %v704
        %794 = vmatprep.subr.mxu0 %v707
        %795 = vmatpush1.msra.mxu0 %v706
        %796 = vmatprep.subr.mxu0 %v788
        %797 = vmatpush1.msra.mxu0 %v785
        %798 = vmatprep.subr.mxu0 0.0
        %799 = vmatpush1.msra.mxu0 0.0
        %800 = vmatprep.subr.mxu0 0.0
        %801 = vmatpush1.msra.mxu0 0.0
        %802 = vmatprep.subr.mxu0 0.0
        %803 = vmatpush1.msra.mxu0 0.0
        %804 = vmatprep.subr.mxu0 0.0
        %805 = vmatpush1.msra.mxu0 0.0
        %806 = vmatprep.subr.mxu0 0.0
        %807 = vmatpush1.msra.mxu0 0.0
        %808 = vmatprep.subr.mxu0 0.0
        %809 = vmatpush1.msra.mxu0 0.0
        %810 = vmatprep.subr.mxu0 0.0
        %811 = vmatpush1.msra.mxu0 0.0
        %812 = vmatprep.subr.mxu0 0.0
        %813 = vmatpush1.msra.mxu0 0.0
        %814 = vmatprep.subr.mxu0 0.0
        %815 = vmatpush1.msra.mxu0 0.0
        %816 = vmatprep.subr.mxu0 0.0
        %817 = vmatpush1.msra.mxu0 0.0
        %818 = vmatprep.subr.mxu0 0.0
        %819 = vmatpush1.msra.mxu0 0.0
        %820 = vmatprep.subr.mxu0 0.0
        %821 = vmatpush1.msra.mxu0 0.0
        %822 = vmatprep.subr.mxu0 0.0
        %823 = vmatpush1.msra.mxu0 0.0
        %824 = vmatprep.subr.mxu0 0.0
        %825 = vmatpush1.msra.mxu0 0.0
        %826 = vmatprep.subr.mxu0 0.0
        %827 = vmatpush1.msra.mxu0 0.0
        %828 = vmatprep.subr.mxu0 0.0
        %829 = vmatpush1.msra.mxu0 0.0
        %830 = vmatprep.subr.mxu0 0.0
        %831 = vmatpush1.msra.mxu0 0.0
        %832 = vmatprep.subr.mxu0 0.0
        %833 = vmatpush1.msra.mxu0 0.0
        %834 = vmatprep.subr.mxu0 0.0
        %835 = vmatpush1.msra.mxu0 0.0
        %836 = vmatprep.subr.mxu0 0.0
        %837 = vmatpush1.msra.mxu0 0.0
        %838 = vmatprep.subr.mxu0 0.0
        %839 = vmatpush1.msra.mxu0 0.0
        %840 = vmatprep.subr.mxu0 0.0
        %841 = vmatpush1.msra.mxu0 0.0
        %842 = vmatprep.subr.mxu0 0.0
        %843 = vmatpush1.msra.mxu0 0.0
        %844 = vmatprep.subr.mxu0 0.0
        %845 = vmatpush1.msra.mxu0 0.0
        %846 = vmatprep.subr.mxu0 0.0
        %847 = vmatpush1.msra.mxu0 0.0
        %848 = vmatprep.subr.mxu0 0.0
        %849 = vmatpush1.msra.mxu0 0.0
        %850 = vmatprep.subr.mxu0 0.0
        %851 = vmatpush1.msra.mxu0 0.0
        %852 = vmatprep.subr.mxu0 0.0
        %853 = vmatpush1.msra.mxu0 0.0
        %854 = vmatprep.mubr.f32.mxu0 0.0
        %855 = vmatmul.mubr.f32.gmra.mrb[0].mxu0 %v712
        %v856 = vpop.f32.mrb[0].mxu0
        %v857 = vadd.f32 0.0, %v856
        %v858 = vpop.f32.mrb[0].mxu0
        %v859 = vadd.f32 0.0, %v858
        %860 = vmatprep.mubr.f32.mxu0 0.0
        %861 = vmatmul.mubr.f32.gmra.mrb[0].mxu0 %v715
        %v862 = vpop.f32.mrb[0].mxu0
        %v863 = vadd.f32 0.0, %v862
        %v864 = vpop.f32.mrb[0].mxu0
        %v865 = vadd.f32 0.0, %v864
        %866 = vmatprep.mubr.f32.mxu0 0.0
        %867 = vmatmul.mubr.f32.gmra.mrb[0].mxu0 %v718
        %v868 = vpop.f32.mrb[0].mxu0
        %v869 = vadd.f32 0.0, %v868
        %v870 = vpop.f32.mrb[0].mxu0
        %v871 = vadd.f32 0.0, %v870
        %872 = vmatprep.mubr.f32.mxu0 0.0
        %873 = vmatmul.mubr.f32.gmra.mrb[0].mxu0 %v721
        %v874 = vpop.f32.mrb[0].mxu0
        %v875 = vadd.f32 0.0, %v874
        %v876 = vpop.f32.mrb[0].mxu0
        %v877 = vadd.f32 0.0, %v876
        %878 = vmatprep.mubr.f32.mxu0 0.0
        %879 = vmatmul.mubr.f32.gmra.mrb[0].mxu0 %v724
        %v880 = vpop.f32.mrb[0].mxu0
        %v881 = vadd.f32 0.0, %v880
        %v882 = vpop.f32.mrb[0].mxu0
        %v883 = vadd.f32 0.0, %v882
        %884 = vmatprep.mubr.f32.mxu0 0.0
        %885 = vmatmul.mubr.f32.gmra.mrb[0].mxu0 %v727
        %v886 = vpop.f32.mrb[0].mxu0
        %v887 = vadd.f32 0.0, %v886
        %v888 = vpop.f32.mrb[0].mxu0
        %v889 = vadd.f32 0.0, %v888
        %890 = vmatprep.mubr.f32.mxu0 0.0
        %891 = vmatmul.mubr.f32.gmra.mrb[0].mxu0 %v730
        %v892 = vpop.f32.mrb[0].mxu0
        %v893 = vadd.f32 0.0, %v892
        %v894 = vpop.f32.mrb[0].mxu0
        %v895 = vadd.f32 0.0, %v894
        %896 = vmatprep.mubr.f32.mxu0 0.0
        %897 = vmatmul.mubr.f32.gmra.mrb[0].mxu0 %v733
        %v898 = vpop.f32.mrb[0].mxu0
        %v899 = vadd.f32 0.0, %v898
        %v900 = vpop.f32.mrb[0].mxu0
        %v901 = vadd.f32 0.0, %v900
        %902 = vmatprep.mubr.f32.mxu0 0.0
        %903 = vmatmul.mubr.f32.gmra.mrb[0].mxu0 %v736
        %v904 = vpop.f32.mrb[0].mxu0
        %v905 = vadd.f32 0.0, %v904
        %v906 = vpop.f32.mrb[0].mxu0
        %v907 = vadd.f32 0.0, %v906
        %908 = vmatprep.mubr.f32.mxu0 0.0
        %909 = vmatmul.mubr.f32.gmra.mrb[0].mxu0 %v739
        %v910 = vpop.f32.mrb[0].mxu0
        %v911 = vadd.f32 0.0, %v910
        %v912 = vpop.f32.mrb[0].mxu0
        %v913 = vadd.f32 0.0, %v912
        %914 = vmatprep.mubr.f32.mxu0 0.0
        %915 = vmatmul.mubr.f32.gmra.mrb[0].mxu0 %v742
        %v916 = vpop.f32.mrb[0].mxu0
        %v917 = vadd.f32 0.0, %v916
        %v918 = vpop.f32.mrb[0].mxu0
        %v919 = vadd.f32 0.0, %v918
        %920 = vmatprep.mubr.f32.mxu0 0.0
        %921 = vmatmul.mubr.f32.gmra.mrb[0].mxu0 %v745
        %v922 = vpop.f32.mrb[0].mxu0
        %v923 = vadd.f32 0.0, %v922
        %v924 = vpop.f32.mrb[0].mxu0
        %v925 = vadd.f32 0.0, %v924
        %926 = vmatprep.mubr.f32.mxu0 0.0
        %927 = vmatmul.mubr.f32.gmra.mrb[0].mxu0 %v748
        %v928 = vpop.f32.mrb[0].mxu0
        %v929 = vadd.f32 0.0, %v928
        %v930 = vpop.f32.mrb[0].mxu0
        %v931 = vadd.f32 0.0, %v930
        %932 = vmatprep.mubr.f32.mxu0 0.0
        %933 = vmatmul.mubr.f32.gmra.mrb[0].mxu0 %v751
        %v934 = vpop.f32.mrb[0].mxu0
        %v935 = vadd.f32 0.0, %v934
        %v936 = vpop.f32.mrb[0].mxu0
        %v937 = vadd.f32 0.0, %v936
        %938 = vmatprep.mubr.f32.mxu0 0.0
        %939 = vmatmul.mubr.f32.gmra.mrb[0].mxu0 %v754
        %v940 = vpop.f32.mrb[0].mxu0
        %v941 = vadd.f32 0.0, %v940
        %v942 = vpop.f32.mrb[0].mxu0
        %v943 = vadd.f32 0.0, %v942
        %944 = vmatprep.mubr.f32.mxu0 0.0
        %945 = vmatmul.mubr.f32.gmra.mrb[0].mxu0 %v757
        %v946 = vpop.f32.mrb[0].mxu0
        %v947 = vadd.f32 0.0, %v946
        %v948 = vpop.f32.mrb[0].mxu0
        %v949 = vadd.f32 0.0, %v948
        %950 = vmatprep.mubr.f32.mxu0 0.0
        %951 = vmatmul.mubr.f32.gmra.mrb[0].mxu0 %v760
        %v952 = vpop.f32.mrb[0].mxu0
        %v953 = vadd.f32 0.0, %v952
        %v954 = vpop.f32.mrb[0].mxu0
        %v955 = vadd.f32 0.0, %v954
        %956 = vmatprep.mubr.f32.mxu0 0.0
        %957 = vmatmul.mubr.f32.gmra.mrb[0].mxu0 %v763
        %v958 = vpop.f32.mrb[0].mxu0
        %v959 = vadd.f32 0.0, %v958
        %v960 = vpop.f32.mrb[0].mxu0
        %v961 = vadd.f32 0.0, %v960
        %962 = vmatprep.mubr.f32.mxu0 0.0
        %963 = vmatmul.mubr.f32.gmra.mrb[0].mxu0 %v766
        %v964 = vpop.f32.mrb[0].mxu0
        %v965 = vadd.f32 0.0, %v964
        %v966 = vpop.f32.mrb[0].mxu0
        %v967 = vadd.f32 0.0, %v966
        %968 = vmatprep.mubr.f32.mxu0 0.0
        %969 = vmatmul.mubr.f32.gmra.mrb[0].mxu0 %v769
        %v970 = vpop.f32.mrb[0].mxu0
        %v971 = vadd.f32 0.0, %v970
        %v972 = vpop.f32.mrb[0].mxu0
        %v973 = vadd.f32 0.0, %v972
        %974 = vmatprep.mubr.f32.mxu0 0.0
        %975 = vmatmul.mubr.f32.gmra.mrb[0].mxu0 %v772
        %v976 = vpop.f32.mrb[0].mxu0
        %v977 = vadd.f32 0.0, %v976
        %v978 = vpop.f32.mrb[0].mxu0
        %v979 = vadd.f32 0.0, %v978
        %980 = vmatprep.mubr.f32.mxu0 0.0
        %981 = vmatmul.mubr.f32.gmra.mrb[0].mxu0 %v775
        %v982 = vpop.f32.mrb[0].mxu0
        %v983 = vadd.f32 0.0, %v982
        %v984 = vpop.f32.mrb[0].mxu0
        %v985 = vadd.f32 0.0, %v984
        %986 = vmatprep.mubr.f32.mxu0 0.0
        %987 = vmatmul.mubr.f32.gmra.mrb[0].mxu0 %v778
        %v988 = vpop.f32.mrb[0].mxu0
        %v989 = vadd.f32 0.0, %v988
        %v990 = vpop.f32.mrb[0].mxu0
        %v991 = vadd.f32 0.0, %v990
        %992 = vmatprep.mubr.f32.mxu0 0.0
        %993 = vmatmul.mubr.f32.gmra.mrb[0].mxu0 %v781
        %v994 = vpop.f32.mrb[0].mxu0
        %v995 = vadd.f32 0.0, %v994
        %v996 = vpop.f32.mrb[0].mxu0
        %v997 = vadd.f32 0.0, %v996
        %998 = vdwg.mxu0
        %v1000 = vsel %vm710, %v665, 0
        %v1003 = vsel %vm783, %v699, 0
        %v1006 = vsel %vm783, %v700, 0
        %1008 = vmatprep.subr.mxu0 %v694
        %1009 = vmatpush1.msra.mxu0 %v693
        %1010 = vmatprep.subr.mxu0 %v696
        %1011 = vmatpush1.msra.mxu0 %v695
        %1012 = vmatprep.subr.mxu0 %v698
        %1013 = vmatpush1.msra.mxu0 %v697
        %1014 = vmatprep.subr.mxu0 %v1006
        %1015 = vmatpush1.msra.mxu0 %v1003
        %1016 = vmatprep.subr.mxu0 0.0
        %1017 = vmatpush1.msra.mxu0 0.0
        %1018 = vmatprep.subr.mxu0 0.0
        %1019 = vmatpush1.msra.mxu0 0.0
        %1020 = vmatprep.subr.mxu0 0.0
        %1021 = vmatpush1.msra.mxu0 0.0
        %1022 = vmatprep.subr.mxu0 0.0
        %1023 = vmatpush1.msra.mxu0 0.0
        %1024 = vmatprep.subr.mxu0 0.0
        %1025 = vmatpush1.msra.mxu0 0.0
        %1026 = vmatprep.subr.mxu0 0.0
        %1027 = vmatpush1.msra.mxu0 0.0
        %1028 = vmatprep.subr.mxu0 0.0
        %1029 = vmatpush1.msra.mxu0 0.0
        %1030 = vmatprep.subr.mxu0 0.0
        %1031 = vmatpush1.msra.mxu0 0.0
        %1032 = vmatprep.subr.mxu0 0.0
        %1033 = vmatpush1.msra.mxu0 0.0
        %1034 = vmatprep.subr.mxu0 0.0
        %1035 = vmatpush1.msra.mxu0 0.0
        %1036 = vmatprep.subr.mxu0 0.0
        %1037 = vmatpush1.msra.mxu0 0.0
        %1038 = vmatprep.subr.mxu0 0.0
        %1039 = vmatpush1.msra.mxu0 0.0
        %1040 = vmatprep.subr.mxu0 0.0
        %1041 = vmatpush1.msra.mxu0 0.0
        %1042 = vmatprep.subr.mxu0 0.0
        %1043 = vmatpush1.msra.mxu0 0.0
        %1044 = vmatprep.subr.mxu0 0.0
        %1045 = vmatpush1.msra.mxu0 0.0
        %1046 = vmatprep.subr.mxu0 0.0
        %1047 = vmatpush1.msra.mxu0 0.0
        %1048 = vmatprep.subr.mxu0 0.0
        %1049 = vmatpush1.msra.mxu0 0.0
        %1050 = vmatprep.subr.mxu0 0.0
        %1051 = vmatpush1.msra.mxu0 0.0
        %1052 = vmatprep.subr.mxu0 0.0
        %1053 = vmatpush1.msra.mxu0 0.0
        %1054 = vmatprep.subr.mxu0 0.0
        %1055 = vmatpush1.msra.mxu0 0.0
        %1056 = vmatprep.subr.mxu0 0.0
        %1057 = vmatpush1.msra.mxu0 0.0
        %1058 = vmatprep.subr.mxu0 0.0
        %1059 = vmatpush1.msra.mxu0 0.0
        %1060 = vmatprep.subr.mxu0 0.0
        %1061 = vmatpush1.msra.mxu0 0.0
        %1062 = vmatprep.subr.mxu0 0.0
        %1063 = vmatpush1.msra.mxu0 0.0
        %1064 = vmatprep.subr.mxu0 0.0
        %1065 = vmatpush1.msra.mxu0 0.0
        %1066 = vmatprep.subr.mxu0 0.0
        %1067 = vmatpush1.msra.mxu0 0.0
        %1068 = vmatprep.subr.mxu0 0.0
        %1069 = vmatpush1.msra.mxu0 0.0
        %1070 = vmatprep.subr.mxu0 0.0
        %1071 = vmatpush1.msra.mxu0 0.0
        %1072 = vmatprep.mubr.f32.mxu0 0.0
        %1073 = vmatmul.mubr.f32.gmra.mrb[0].mxu0 %v1000
        %v1074 = vpop.f32.mrb[0].mxu0
        %v1075 = vadd.f32 %v857, %v1074
        %v1076 = vpop.f32.mrb[0].mxu0
        %v1077 = vadd.f32 %v859, %v1076
        %1078 = vmatprep.mubr.f32.mxu0 0.0
        %1079 = vmatmul.mubr.f32.gmra.mrb[0].mxu0 %v712
        %v1080 = vpop.f32.mrb[0].mxu0
        %v1081 = vadd.f32 %v863, %v1080
        %v1082 = vpop.f32.mrb[0].mxu0
        %v1083 = vadd.f32 %v865, %v1082
        %1084 = vmatprep.mubr.f32.mxu0 0.0
        %1085 = vmatmul.mubr.f32.gmra.mrb[0].mxu0 %v715
        %v1086 = vpop.f32.mrb[0].mxu0
        %v1087 = vadd.f32 %v869, %v1086
        %v1088 = vpop.f32.mrb[0].mxu0
        %v1089 = vadd.f32 %v871, %v1088
        %1090 = vmatprep.mubr.f32.mxu0 0.0
        %1091 = vmatmul.mubr.f32.gmra.mrb[0].mxu0 %v718
        %v1092 = vpop.f32.mrb[0].mxu0
        %v1093 = vadd.f32 %v875, %v1092
        %v1094 = vpop.f32.mrb[0].mxu0
        %v1095 = vadd.f32 %v877, %v1094
        %1096 = vmatprep.mubr.f32.mxu0 0.0
        %1097 = vmatmul.mubr.f32.gmra.mrb[0].mxu0 %v721
        %v1098 = vpop.f32.mrb[0].mxu0
        %v1099 = vadd.f32 %v881, %v1098
        %v1100 = vpop.f32.mrb[0].mxu0
        %v1101 = vadd.f32 %v883, %v1100
        %1102 = vmatprep.mubr.f32.mxu0 0.0
        %1103 = vmatmul.mubr.f32.gmra.mrb[0].mxu0 %v724
        %v1104 = vpop.f32.mrb[0].mxu0
        %v1105 = vadd.f32 %v887, %v1104
        %v1106 = vpop.f32.mrb[0].mxu0
        %v1107 = vadd.f32 %v889, %v1106
        %1108 = vmatprep.mubr.f32.mxu0 0.0
        %1109 = vmatmul.mubr.f32.gmra.mrb[0].mxu0 %v727
        %v1110 = vpop.f32.mrb[0].mxu0
        %v1111 = vadd.f32 %v893, %v1110
        %v1112 = vpop.f32.mrb[0].mxu0
        %v1113 = vadd.f32 %v895, %v1112
        %1114 = vmatprep.mubr.f32.mxu0 0.0
        %1115 = vmatmul.mubr.f32.gmra.mrb[0].mxu0 %v730
        %v1116 = vpop.f32.mrb[0].mxu0
        %v1117 = vadd.f32 %v899, %v1116
        %v1118 = vpop.f32.mrb[0].mxu0
        %v1119 = vadd.f32 %v901, %v1118
        %1120 = vmatprep.mubr.f32.mxu0 0.0
        %1121 = vmatmul.mubr.f32.gmra.mrb[0].mxu0 %v733
        %v1122 = vpop.f32.mrb[0].mxu0
        %v1123 = vadd.f32 %v905, %v1122
        %v1124 = vpop.f32.mrb[0].mxu0
        %v1125 = vadd.f32 %v907, %v1124
        %1126 = vmatprep.mubr.f32.mxu0 0.0
        %1127 = vmatmul.mubr.f32.gmra.mrb[0].mxu0 %v736
        %v1128 = vpop.f32.mrb[0].mxu0
        %v1129 = vadd.f32 %v911, %v1128
        %v1130 = vpop.f32.mrb[0].mxu0
        %v1131 = vadd.f32 %v913, %v1130
        %1132 = vmatprep.mubr.f32.mxu0 0.0
        %1133 = vmatmul.mubr.f32.gmra.mrb[0].mxu0 %v739
        %v1134 = vpop.f32.mrb[0].mxu0
        %v1135 = vadd.f32 %v917, %v1134
        %v1136 = vpop.f32.mrb[0].mxu0
        %v1137 = vadd.f32 %v919, %v1136
        %1138 = vmatprep.mubr.f32.mxu0 0.0
        %1139 = vmatmul.mubr.f32.gmra.mrb[0].mxu0 %v742
        %v1140 = vpop.f32.mrb[0].mxu0
        %v1141 = vadd.f32 %v923, %v1140
        %v1142 = vpop.f32.mrb[0].mxu0
        %v1143 = vadd.f32 %v925, %v1142
        %1144 = vmatprep.mubr.f32.mxu0 0.0
        %1145 = vmatmul.mubr.f32.gmra.mrb[0].mxu0 %v745
        %v1146 = vpop.f32.mrb[0].mxu0
        %v1147 = vadd.f32 %v929, %v1146
        %v1148 = vpop.f32.mrb[0].mxu0
        %v1149 = vadd.f32 %v931, %v1148
        %1150 = vmatprep.mubr.f32.mxu0 0.0
        %1151 = vmatmul.mubr.f32.gmra.mrb[0].mxu0 %v748
        %v1152 = vpop.f32.mrb[0].mxu0
        %v1153 = vadd.f32 %v935, %v1152
        %v1154 = vpop.f32.mrb[0].mxu0
        %v1155 = vadd.f32 %v937, %v1154
        %1156 = vmatprep.mubr.f32.mxu0 0.0
        %1157 = vmatmul.mubr.f32.gmra.mrb[0].mxu0 %v751
        %v1158 = vpop.f32.mrb[0].mxu0
        %v1159 = vadd.f32 %v941, %v1158
        %v1160 = vpop.f32.mrb[0].mxu0
        %v1161 = vadd.f32 %v943, %v1160
        %1162 = vmatprep.mubr.f32.mxu0 0.0
        %1163 = vmatmul.mubr.f32.gmra.mrb[0].mxu0 %v754
        %v1164 = vpop.f32.mrb[0].mxu0
        %v1165 = vadd.f32 %v947, %v1164
        %v1166 = vpop.f32.mrb[0].mxu0
        %v1167 = vadd.f32 %v949, %v1166
        %1168 = vmatprep.mubr.f32.mxu0 0.0
        %1169 = vmatmul.mubr.f32.gmra.mrb[0].mxu0 %v757
        %v1170 = vpop.f32.mrb[0].mxu0
        %v1171 = vadd.f32 %v953, %v1170
        %v1172 = vpop.f32.mrb[0].mxu0
        %v1173 = vadd.f32 %v955, %v1172
        %1174 = vmatprep.mubr.f32.mxu0 0.0
        %1175 = vmatmul.mubr.f32.gmra.mrb[0].mxu0 %v760
        %v1176 = vpop.f32.mrb[0].mxu0
        %v1177 = vadd.f32 %v959, %v1176
        %v1178 = vpop.f32.mrb[0].mxu0
        %v1179 = vadd.f32 %v961, %v1178
        %1180 = vmatprep.mubr.f32.mxu0 0.0
        %1181 = vmatmul.mubr.f32.gmra.mrb[0].mxu0 %v763
        %v1182 = vpop.f32.mrb[0].mxu0
        %v1183 = vadd.f32 %v965, %v1182
        %v1184 = vpop.f32.mrb[0].mxu0
        %v1185 = vadd.f32 %v967, %v1184
        %1186 = vmatprep.mubr.f32.mxu0 0.0
        %1187 = vmatmul.mubr.f32.gmra.mrb[0].mxu0 %v766
        %v1188 = vpop.f32.mrb[0].mxu0
        %v1189 = vadd.f32 %v971, %v1188
        %v1190 = vpop.f32.mrb[0].mxu0
        %v1191 = vadd.f32 %v973, %v1190
        %1192 = vmatprep.mubr.f32.mxu0 0.0
        %1193 = vmatmul.mubr.f32.gmra.mrb[0].mxu0 %v769
        %v1194 = vpop.f32.mrb[0].mxu0
        %v1195 = vadd.f32 %v977, %v1194
        %v1196 = vpop.f32.mrb[0].mxu0
        %v1197 = vadd.f32 %v979, %v1196
        %1198 = vmatprep.mubr.f32.mxu0 0.0
        %1199 = vmatmul.mubr.f32.gmra.mrb[0].mxu0 %v772
        %v1200 = vpop.f32.mrb[0].mxu0
        %v1201 = vadd.f32 %v983, %v1200
        %v1202 = vpop.f32.mrb[0].mxu0
        %v1203 = vadd.f32 %v985, %v1202
        %1204 = vmatprep.mubr.f32.mxu0 0.0
        %1205 = vmatmul.mubr.f32.gmra.mrb[0].mxu0 %v775
        %v1206 = vpop.f32.mrb[0].mxu0
        %v1207 = vadd.f32 %v989, %v1206
        %v1208 = vpop.f32.mrb[0].mxu0
        %v1209 = vadd.f32 %v991, %v1208
        %1210 = vmatprep.mubr.f32.mxu0 0.0
        %1211 = vmatmul.mubr.f32.gmra.mrb[0].mxu0 %v778
        %v1212 = vpop.f32.mrb[0].mxu0
        %v1213 = vadd.f32 %v995, %v1212
        %v1214 = vpop.f32.mrb[0].mxu0
        %v1215 = vadd.f32 %v997, %v1214
        %1216 = vdwg.mxu0
        %s1217 = scalar_lea.vmem %s1, 128
        %v1218 = vld [vmem:[%s1217] sm:$0xff]
        %v1219 = vld [vmem:[%s1217 + $0x8] sm:$0xff]
        %v1220 = vld [vmem:[%s1217 + $0x10] sm:$0xff]
        %v1221 = vld [vmem:[%s1217 + $0x18] sm:$0xff]
        %v1222 = vld [vmem:[%s1217 + $0x20] sm:$0xff]
        %v1223 = vld [vmem:[%s1217 + $0x28] sm:$0xff]
        %v1224 = vld [vmem:[%s1217 + $0x30] sm:$0xf]
        %v1225 = vld [vmem:[%s1217 + $0x38] sm:$0xf]
        %v1227 = vsel %vm710, %v690, 0
        %v1230 = vsel %vm783, %v1224, 0
        %v1233 = vsel %vm783, %v1225, 0
        %1235 = vmatprep.subr.mxu0 %v1219
        %1236 = vmatpush1.msra.mxu0 %v1218
        %1237 = vmatprep.subr.mxu0 %v1221
        %1238 = vmatpush1.msra.mxu0 %v1220
        %1239 = vmatprep.subr.mxu0 %v1223
        %1240 = vmatpush1.msra.mxu0 %v1222
        %1241 = vmatprep.subr.mxu0 %v1233
        %1242 = vmatpush1.msra.mxu0 %v1230
        %1243 = vmatprep.subr.mxu0 0.0
        %1244 = vmatpush1.msra.mxu0 0.0
        %1245 = vmatprep.subr.mxu0 0.0
        %1246 = vmatpush1.msra.mxu0 0.0
        %1247 = vmatprep.subr.mxu0 0.0
        %1248 = vmatpush1.msra.mxu0 0.0
        %1249 = vmatprep.subr.mxu0 0.0
        %1250 = vmatpush1.msra.mxu0 0.0
        %1251 = vmatprep.subr.mxu0 0.0
        %1252 = vmatpush1.msra.mxu0 0.0
        %1253 = vmatprep.subr.mxu0 0.0
        %1254 = vmatpush1.msra.mxu0 0.0
        %1255 = vmatprep.subr.mxu0 0.0
        %1256 = vmatpush1.msra.mxu0 0.0
        %1257 = vmatprep.subr.mxu0 0.0
        %1258 = vmatpush1.msra.mxu0 0.0
        %1259 = vmatprep.subr.mxu0 0.0
        %1260 = vmatpush1.msra.mxu0 0.0
        %1261 = vmatprep.subr.mxu0 0.0
        %1262 = vmatpush1.msra.mxu0 0.0
        %1263 = vmatprep.subr.mxu0 0.0
        %1264 = vmatpush1.msra.mxu0 0.0
        %1265 = vmatprep.subr.mxu0 0.0
        %1266 = vmatpush1.msra.mxu0 0.0
        %1267 = vmatprep.subr.mxu0 0.0
        %1268 = vmatpush1.msra.mxu0 0.0
        %1269 = vmatprep.subr.mxu0 0.0
        %1270 = vmatpush1.msra.mxu0 0.0
        %1271 = vmatprep.subr.mxu0 0.0
        %1272 = vmatpush1.msra.mxu0 0.0
        %1273 = vmatprep.subr.mxu0 0.0
        %1274 = vmatpush1.msra.mxu0 0.0
        %1275 = vmatprep.subr.mxu0 0.0
        %1276 = vmatpush1.msra.mxu0 0.0
        %1277 = vmatprep.subr.mxu0 0.0
        %1278 = vmatpush1.msra.mxu0 0.0
        %1279 = vmatprep.subr.mxu0 0.0
        %1280 = vmatpush1.msra.mxu0 0.0
        %1281 = vmatprep.subr.mxu0 0.0
        %1282 = vmatpush1.msra.mxu0 0.0
        %1283 = vmatprep.subr.mxu0 0.0
        %1284 = vmatpush1.msra.mxu0 0.0
        %1285 = vmatprep.subr.mxu0 0.0
        %1286 = vmatpush1.msra.mxu0 0.0
        %1287 = vmatprep.subr.mxu0 0.0
        %1288 = vmatpush1.msra.mxu0 0.0
        %1289 = vmatprep.subr.mxu0 0.0
        %1290 = vmatpush1.msra.mxu0 0.0
        %1291 = vmatprep.subr.mxu0 0.0
        %1292 = vmatpush1.msra.mxu0 0.0
        %1293 = vmatprep.subr.mxu0 0.0
        %1294 = vmatpush1.msra.mxu0 0.0
        %1295 = vmatprep.subr.mxu0 0.0
        %1296 = vmatpush1.msra.mxu0 0.0
        %1297 = vmatprep.subr.mxu0 0.0
        %1298 = vmatpush1.msra.mxu0 0.0
        %1299 = vmatprep.mubr.f32.mxu0 0.0
        %1300 = vmatmul.mubr.f32.gmra.mrb[0].mxu0 %v715
        %v1301 = vpop.f32.mrb[0].mxu0
        %v1302 = vadd.f32 0.0, %v1301
        %v1303 = vpop.f32.mrb[0].mxu0
        %v1304 = vadd.f32 0.0, %v1303
        %1305 = vmatprep.mubr.f32.mxu0 0.0
        %1306 = vmatmul.mubr.f32.gmra.mrb[0].mxu0 %v718
        %v1307 = vpop.f32.mrb[0].mxu0
        %v1308 = vadd.f32 0.0, %v1307
        %v1309 = vpop.f32.mrb[0].mxu0
        %v1310 = vadd.f32 0.0, %v1309
        %1311 = vmatprep.mubr.f32.mxu0 0.0
        %1312 = vmatmul.mubr.f32.gmra.mrb[0].mxu0 %v721
        %v1313 = vpop.f32.mrb[0].mxu0
        %v1314 = vadd.f32 0.0, %v1313
        %v1315 = vpop.f32.mrb[0].mxu0
        %v1316 = vadd.f32 0.0, %v1315
        %1317 = vmatprep.mubr.f32.mxu0 0.0
        %1318 = vmatmul.mubr.f32.gmra.mrb[0].mxu0 %v724
        %v1319 = vpop.f32.mrb[0].mxu0
        %v1320 = vadd.f32 0.0, %v1319
        %v1321 = vpop.f32.mrb[0].mxu0
        %v1322 = vadd.f32 0.0, %v1321
        %1323 = vmatprep.mubr.f32.mxu0 0.0
        %1324 = vmatmul.mubr.f32.gmra.mrb[0].mxu0 %v727
        %v1325 = vpop.f32.mrb[0].mxu0
        %v1326 = vadd.f32 0.0, %v1325
        %v1327 = vpop.f32.mrb[0].mxu0
        %v1328 = vadd.f32 0.0, %v1327
        %1329 = vmatprep.mubr.f32.mxu0 0.0
        %1330 = vmatmul.mubr.f32.gmra.mrb[0].mxu0 %v730
        %v1331 = vpop.f32.mrb[0].mxu0
        %v1332 = vadd.f32 0.0, %v1331
        %v1333 = vpop.f32.mrb[0].mxu0
        %v1334 = vadd.f32 0.0, %v1333
        %1335 = vmatprep.mubr.f32.mxu0 0.0
        %1336 = vmatmul.mubr.f32.gmra.mrb[0].mxu0 %v733
        %v1337 = vpop.f32.mrb[0].mxu0
        %v1338 = vadd.f32 0.0, %v1337
        %v1339 = vpop.f32.mrb[0].mxu0
        %v1340 = vadd.f32 0.0, %v1339
        %1341 = vmatprep.mubr.f32.mxu0 0.0
        %1342 = vmatmul.mubr.f32.gmra.mrb[0].mxu0 %v736
        %v1343 = vpop.f32.mrb[0].mxu0
        %v1344 = vadd.f32 0.0, %v1343
        %v1345 = vpop.f32.mrb[0].mxu0
        %v1346 = vadd.f32 0.0, %v1345
        %1347 = vmatprep.mubr.f32.mxu0 0.0
        %1348 = vmatmul.mubr.f32.gmra.mrb[0].mxu0 %v739
        %v1349 = vpop.f32.mrb[0].mxu0
        %v1350 = vadd.f32 0.0, %v1349
        %v1351 = vpop.f32.mrb[0].mxu0
        %v1352 = vadd.f32 0.0, %v1351
        %1353 = vmatprep.mubr.f32.mxu0 0.0
        %1354 = vmatmul.mubr.f32.gmra.mrb[0].mxu0 %v742
        %v1355 = vpop.f32.mrb[0].mxu0
        %v1356 = vadd.f32 0.0, %v1355
        %v1357 = vpop.f32.mrb[0].mxu0
        %v1358 = vadd.f32 0.0, %v1357
        %1359 = vmatprep.mubr.f32.mxu0 0.0
        %1360 = vmatmul.mubr.f32.gmra.mrb[0].mxu0 %v745
        %v1361 = vpop.f32.mrb[0].mxu0
        %v1362 = vadd.f32 0.0, %v1361
        %v1363 = vpop.f32.mrb[0].mxu0
        %v1364 = vadd.f32 0.0, %v1363
        %1365 = vmatprep.mubr.f32.mxu0 0.0
        %1366 = vmatmul.mubr.f32.gmra.mrb[0].mxu0 %v748
        %v1367 = vpop.f32.mrb[0].mxu0
        %v1368 = vadd.f32 0.0, %v1367
        %v1369 = vpop.f32.mrb[0].mxu0
        %v1370 = vadd.f32 0.0, %v1369
        %1371 = vmatprep.mubr.f32.mxu0 0.0
        %1372 = vmatmul.mubr.f32.gmra.mrb[0].mxu0 %v751
        %v1373 = vpop.f32.mrb[0].mxu0
        %v1374 = vadd.f32 0.0, %v1373
        %v1375 = vpop.f32.mrb[0].mxu0
        %v1376 = vadd.f32 0.0, %v1375
        %1377 = vmatprep.mubr.f32.mxu0 0.0
        %1378 = vmatmul.mubr.f32.gmra.mrb[0].mxu0 %v754
        %v1379 = vpop.f32.mrb[0].mxu0
        %v1380 = vadd.f32 0.0, %v1379
        %v1381 = vpop.f32.mrb[0].mxu0
        %v1382 = vadd.f32 0.0, %v1381
        %1383 = vmatprep.mubr.f32.mxu0 0.0
        %1384 = vmatmul.mubr.f32.gmra.mrb[0].mxu0 %v757
        %v1385 = vpop.f32.mrb[0].mxu0
        %v1386 = vadd.f32 0.0, %v1385
        %v1387 = vpop.f32.mrb[0].mxu0
        %v1388 = vadd.f32 0.0, %v1387
        %1389 = vmatprep.mubr.f32.mxu0 0.0
        %1390 = vmatmul.mubr.f32.gmra.mrb[0].mxu0 %v760
        %v1391 = vpop.f32.mrb[0].mxu0
        %v1392 = vadd.f32 0.0, %v1391
        %v1393 = vpop.f32.mrb[0].mxu0
        %v1394 = vadd.f32 0.0, %v1393
        %1395 = vmatprep.mubr.f32.mxu0 0.0
        %1396 = vmatmul.mubr.f32.gmra.mrb[0].mxu0 %v763
        %v1397 = vpop.f32.mrb[0].mxu0
        %v1398 = vadd.f32 0.0, %v1397
        %v1399 = vpop.f32.mrb[0].mxu0
        %v1400 = vadd.f32 0.0, %v1399
        %1401 = vmatprep.mubr.f32.mxu0 0.0
        %1402 = vmatmul.mubr.f32.gmra.mrb[0].mxu0 %v766
        %v1403 = vpop.f32.mrb[0].mxu0
        %v1404 = vadd.f32 0.0, %v1403
        %v1405 = vpop.f32.mrb[0].mxu0
        %v1406 = vadd.f32 0.0, %v1405
        %1407 = vmatprep.mubr.f32.mxu0 0.0
        %1408 = vmatmul.mubr.f32.gmra.mrb[0].mxu0 %v769
        %v1409 = vpop.f32.mrb[0].mxu0
        %v1410 = vadd.f32 0.0, %v1409
        %v1411 = vpop.f32.mrb[0].mxu0
        %v1412 = vadd.f32 0.0, %v1411
        %1413 = vmatprep.mubr.f32.mxu0 0.0
        %1414 = vmatmul.mubr.f32.gmra.mrb[0].mxu0 %v772
        %v1415 = vpop.f32.mrb[0].mxu0
        %v1416 = vadd.f32 0.0, %v1415
        %v1417 = vpop.f32.mrb[0].mxu0
        %v1418 = vadd.f32 0.0, %v1417
        %1419 = vmatprep.mubr.f32.mxu0 0.0
        %1420 = vmatmul.mubr.f32.gmra.mrb[0].mxu0 %v775
        %v1421 = vpop.f32.mrb[0].mxu0
        %v1422 = vadd.f32 0.0, %v1421
        %v1423 = vpop.f32.mrb[0].mxu0
        %v1424 = vadd.f32 0.0, %v1423
        %1425 = vmatprep.mubr.f32.mxu0 0.0
        %1426 = vmatmul.mubr.f32.gmra.mrb[0].mxu0 %v778
        %v1427 = vpop.f32.mrb[0].mxu0
        %v1428 = vadd.f32 0.0, %v1427
        %v1429 = vpop.f32.mrb[0].mxu0
        %v1430 = vadd.f32 0.0, %v1429
        %1431 = vmatprep.mubr.f32.mxu0 0.0
        %1432 = vmatmul.mubr.f32.gmra.mrb[0].mxu0 %v781
        %v1433 = vpop.f32.mrb[0].mxu0
        %v1434 = vadd.f32 0.0, %v1433
        %v1435 = vpop.f32.mrb[0].mxu0
        %v1436 = vadd.f32 0.0, %v1435
        %1437 = vmatprep.mubr.f32.mxu0 0.0
        %1438 = vmatmul.mubr.f32.gmra.mrb[0].mxu0 %v1227
        %v1439 = vpop.f32.mrb[0].mxu0
        %v1440 = vadd.f32 0.0, %v1439
        %v1441 = vpop.f32.mrb[0].mxu0
        %v1442 = vadd.f32 0.0, %v1441
        %1443 = vdwg.mxu0
        %v1444 = vadd.f32 %v1075, %v1302
        %v1445 = vadd.f32 %v1077, %v1304
        %v1446 = vadd.f32 %v1081, %v1308
        %v1447 = vadd.f32 %v1083, %v1310
        %v1448 = vadd.f32 %v1087, %v1314
        %v1449 = vadd.f32 %v1089, %v1316
        %v1450 = vadd.f32 %v1093, %v1320
        %v1451 = vadd.f32 %v1095, %v1322
        %v1452 = vadd.f32 %v1099, %v1326
        %v1453 = vadd.f32 %v1101, %v1328
        %v1454 = vadd.f32 %v1105, %v1332
        %v1455 = vadd.f32 %v1107, %v1334
        %v1456 = vadd.f32 %v1111, %v1338
        %v1457 = vadd.f32 %v1113, %v1340
        %v1458 = vadd.f32 %v1117, %v1344
        %v1459 = vadd.f32 %v1119, %v1346
        %v1460 = vadd.f32 %v1123, %v1350
        %v1461 = vadd.f32 %v1125, %v1352
        %v1462 = vadd.f32 %v1129, %v1356
        %v1463 = vadd.f32 %v1131, %v1358
        %v1464 = vadd.f32 %v1135, %v1362
        %v1465 = vadd.f32 %v1137, %v1364
        %v1466 = vadd.f32 %v1141, %v1368
        %v1467 = vadd.f32 %v1143, %v1370
        %v1468 = vadd.f32 %v1147, %v1374
        %v1469 = vadd.f32 %v1149, %v1376
        %v1470 = vadd.f32 %v1153, %v1380
        %v1471 = vadd.f32 %v1155, %v1382
        %v1472 = vadd.f32 %v1159, %v1386
        %v1473 = vadd.f32 %v1161, %v1388
        %v1474 = vadd.f32 %v1165, %v1392
        %v1475 = vadd.f32 %v1167, %v1394
        %v1476 = vadd.f32 %v1171, %v1398
        %v1477 = vadd.f32 %v1173, %v1400
        %v1478 = vadd.f32 %v1177, %v1404
        %v1479 = vadd.f32 %v1179, %v1406
        %v1480 = vadd.f32 %v1183, %v1410
        %v1481 = vadd.f32 %v1185, %v1412
        %v1482 = vadd.f32 %v1189, %v1416
        %v1483 = vadd.f32 %v1191, %v1418
        %v1484 = vadd.f32 %v1195, %v1422
        %v1485 = vadd.f32 %v1197, %v1424
        %v1486 = vadd.f32 %v1201, %v1428
        %v1487 = vadd.f32 %v1203, %v1430
        %v1488 = vadd.f32 %v1207, %v1434
        %v1489 = vadd.f32 %v1209, %v1436
        %v1490 = vadd.f32 %v1213, %v1440
        %v1491 = vadd.f32 %v1215, %v1442
        %s1492 = scalar_lea.vmem %s1, 192
        %v1493 = vld [vmem:[%s1492] sm:$0xff]
        %v1494 = vld [vmem:[%s1492 + $0x8] sm:$0xff]
        %v1495 = vld [vmem:[%s1492 + $0x10] sm:$0xff]
        %v1496 = vld [vmem:[%s1492 + $0x18] sm:$0xff]
        %v1497 = vld [vmem:[%s1492 + $0x20] sm:$0xff]
        %v1498 = vld [vmem:[%s1492 + $0x28] sm:$0xff]
        %v1499 = vld [vmem:[%s1492 + $0x30] sm:$0xf]
        %v1500 = vld [vmem:[%s1492 + $0x38] sm:$0xf]
        %v1502 = vsel %vm710, %v691, 0
        %v1505 = vsel %vm783, %v1499, 0
        %v1508 = vsel %vm783, %v1500, 0
        %1510 = vmatprep.subr.mxu0 %v1494
        %1511 = vmatpush1.msra.mxu0 %v1493
        %1512 = vmatprep.subr.mxu0 %v1496
        %1513 = vmatpush1.msra.mxu0 %v1495
        %1514 = vmatprep.subr.mxu0 %v1498
        %1515 = vmatpush1.msra.mxu0 %v1497
        %1516 = vmatprep.subr.mxu0 %v1508
        %1517 = vmatpush1.msra.mxu0 %v1505
        %1518 = vmatprep.subr.mxu0 0.0
        %1519 = vmatpush1.msra.mxu0 0.0
        %1520 = vmatprep.subr.mxu0 0.0
        %1521 = vmatpush1.msra.mxu0 0.0
        %1522 = vmatprep.subr.mxu0 0.0
        %1523 = vmatpush1.msra.mxu0 0.0
        %1524 = vmatprep.subr.mxu0 0.0
        %1525 = vmatpush1.msra.mxu0 0.0
        %1526 = vmatprep.subr.mxu0 0.0
        %1527 = vmatpush1.msra.mxu0 0.0
        %1528 = vmatprep.subr.mxu0 0.0
        %1529 = vmatpush1.msra.mxu0 0.0
        %1530 = vmatprep.subr.mxu0 0.0
        %1531 = vmatpush1.msra.mxu0 0.0
        %1532 = vmatprep.subr.mxu0 0.0
        %1533 = vmatpush1.msra.mxu0 0.0
        %1534 = vmatprep.subr.mxu0 0.0
        %1535 = vmatpush1.msra.mxu0 0.0
        %1536 = vmatprep.subr.mxu0 0.0
        %1537 = vmatpush1.msra.mxu0 0.0
        %1538 = vmatprep.subr.mxu0 0.0
        %1539 = vmatpush1.msra.mxu0 0.0
        %1540 = vmatprep.subr.mxu0 0.0
        %1541 = vmatpush1.msra.mxu0 0.0
        %1542 = vmatprep.subr.mxu0 0.0
        %1543 = vmatpush1.msra.mxu0 0.0
        %1544 = vmatprep.subr.mxu0 0.0
        %1545 = vmatpush1.msra.mxu0 0.0
        %1546 = vmatprep.subr.mxu0 0.0
        %1547 = vmatpush1.msra.mxu0 0.0
        %1548 = vmatprep.subr.mxu0 0.0
        %1549 = vmatpush1.msra.mxu0 0.0
        %1550 = vmatprep.subr.mxu0 0.0
        %1551 = vmatpush1.msra.mxu0 0.0
        %1552 = vmatprep.subr.mxu0 0.0
        %1553 = vmatpush1.msra.mxu0 0.0
        %1554 = vmatprep.subr.mxu0 0.0
        %1555 = vmatpush1.msra.mxu0 0.0
        %1556 = vmatprep.subr.mxu0 0.0
        %1557 = vmatpush1.msra.mxu0 0.0
        %1558 = vmatprep.subr.mxu0 0.0
        %1559 = vmatpush1.msra.mxu0 0.0
        %1560 = vmatprep.subr.mxu0 0.0
        %1561 = vmatpush1.msra.mxu0 0.0
        %1562 = vmatprep.subr.mxu0 0.0
        %1563 = vmatpush1.msra.mxu0 0.0
        %1564 = vmatprep.subr.mxu0 0.0
        %1565 = vmatpush1.msra.mxu0 0.0
        %1566 = vmatprep.subr.mxu0 0.0
        %1567 = vmatpush1.msra.mxu0 0.0
        %1568 = vmatprep.subr.mxu0 0.0
        %1569 = vmatpush1.msra.mxu0 0.0
        %1570 = vmatprep.subr.mxu0 0.0
        %1571 = vmatpush1.msra.mxu0 0.0
        %1572 = vmatprep.subr.mxu0 0.0
        %1573 = vmatpush1.msra.mxu0 0.0
        %1574 = vmatprep.mubr.f32.mxu0 0.0
        %1575 = vmatmul.mubr.f32.gmra.mrb[0].mxu0 %v718
        %v1576 = vpop.f32.mrb[0].mxu0
        %v1577 = vadd.f32 0.0, %v1576
        %v1578 = vpop.f32.mrb[0].mxu0
        %v1579 = vadd.f32 0.0, %v1578
        %1580 = vmatprep.mubr.f32.mxu0 0.0
        %1581 = vmatmul.mubr.f32.gmra.mrb[0].mxu0 %v721
        %v1582 = vpop.f32.mrb[0].mxu0
        %v1583 = vadd.f32 0.0, %v1582
        %v1584 = vpop.f32.mrb[0].mxu0
        %v1585 = vadd.f32 0.0, %v1584
        %1586 = vmatprep.mubr.f32.mxu0 0.0
        %1587 = vmatmul.mubr.f32.gmra.mrb[0].mxu0 %v724
        %v1588 = vpop.f32.mrb[0].mxu0
        %v1589 = vadd.f32 0.0, %v1588
        %v1590 = vpop.f32.mrb[0].mxu0
        %v1591 = vadd.f32 0.0, %v1590
        %1592 = vmatprep.mubr.f32.mxu0 0.0
        %1593 = vmatmul.mubr.f32.gmra.mrb[0].mxu0 %v727
        %v1594 = vpop.f32.mrb[0].mxu0
        %v1595 = vadd.f32 0.0, %v1594
        %v1596 = vpop.f32.mrb[0].mxu0
        %v1597 = vadd.f32 0.0, %v1596
        %1598 = vmatprep.mubr.f32.mxu0 0.0
        %1599 = vmatmul.mubr.f32.gmra.mrb[0].mxu0 %v730
        %v1600 = vpop.f32.mrb[0].mxu0
        %v1601 = vadd.f32 0.0, %v1600
        %v1602 = vpop.f32.mrb[0].mxu0
        %v1603 = vadd.f32 0.0, %v1602
        %1604 = vmatprep.mubr.f32.mxu0 0.0
        %1605 = vmatmul.mubr.f32.gmra.mrb[0].mxu0 %v733
        %v1606 = vpop.f32.mrb[0].mxu0
        %v1607 = vadd.f32 0.0, %v1606
        %v1608 = vpop.f32.mrb[0].mxu0
        %v1609 = vadd.f32 0.0, %v1608
        %1610 = vmatprep.mubr.f32.mxu0 0.0
        %1611 = vmatmul.mubr.f32.gmra.mrb[0].mxu0 %v736
        %v1612 = vpop.f32.mrb[0].mxu0
        %v1613 = vadd.f32 0.0, %v1612
        %v1614 = vpop.f32.mrb[0].mxu0
        %v1615 = vadd.f32 0.0, %v1614
        %1616 = vmatprep.mubr.f32.mxu0 0.0
        %1617 = vmatmul.mubr.f32.gmra.mrb[0].mxu0 %v739
        %v1618 = vpop.f32.mrb[0].mxu0
        %v1619 = vadd.f32 0.0, %v1618
        %v1620 = vpop.f32.mrb[0].mxu0
        %v1621 = vadd.f32 0.0, %v1620
        %1622 = vmatprep.mubr.f32.mxu0 0.0
        %1623 = vmatmul.mubr.f32.gmra.mrb[0].mxu0 %v742
        %v1624 = vpop.f32.mrb[0].mxu0
        %v1625 = vadd.f32 0.0, %v1624
        %v1626 = vpop.f32.mrb[0].mxu0
        %v1627 = vadd.f32 0.0, %v1626
        %1628 = vmatprep.mubr.f32.mxu0 0.0
        %1629 = vmatmul.mubr.f32.gmra.mrb[0].mxu0 %v745
        %v1630 = vpop.f32.mrb[0].mxu0
        %v1631 = vadd.f32 0.0, %v1630
        %v1632 = vpop.f32.mrb[0].mxu0
        %v1633 = vadd.f32 0.0, %v1632
        %1634 = vmatprep.mubr.f32.mxu0 0.0
        %1635 = vmatmul.mubr.f32.gmra.mrb[0].mxu0 %v748
        %v1636 = vpop.f32.mrb[0].mxu0
        %v1637 = vadd.f32 0.0, %v1636
        %v1638 = vpop.f32.mrb[0].mxu0
        %v1639 = vadd.f32 0.0, %v1638
        %1640 = vmatprep.mubr.f32.mxu0 0.0
        %1641 = vmatmul.mubr.f32.gmra.mrb[0].mxu0 %v751
        %v1642 = vpop.f32.mrb[0].mxu0
        %v1643 = vadd.f32 0.0, %v1642
        %v1644 = vpop.f32.mrb[0].mxu0
        %v1645 = vadd.f32 0.0, %v1644
        %1646 = vmatprep.mubr.f32.mxu0 0.0
        %1647 = vmatmul.mubr.f32.gmra.mrb[0].mxu0 %v754
        %v1648 = vpop.f32.mrb[0].mxu0
        %v1649 = vadd.f32 0.0, %v1648
        %v1650 = vpop.f32.mrb[0].mxu0
        %v1651 = vadd.f32 0.0, %v1650
        %1652 = vmatprep.mubr.f32.mxu0 0.0
        %1653 = vmatmul.mubr.f32.gmra.mrb[0].mxu0 %v757
        %v1654 = vpop.f32.mrb[0].mxu0
        %v1655 = vadd.f32 0.0, %v1654
        %v1656 = vpop.f32.mrb[0].mxu0
        %v1657 = vadd.f32 0.0, %v1656
        %1658 = vmatprep.mubr.f32.mxu0 0.0
        %1659 = vmatmul.mubr.f32.gmra.mrb[0].mxu0 %v760
        %v1660 = vpop.f32.mrb[0].mxu0
        %v1661 = vadd.f32 0.0, %v1660
        %v1662 = vpop.f32.mrb[0].mxu0
        %v1663 = vadd.f32 0.0, %v1662
        %1664 = vmatprep.mubr.f32.mxu0 0.0
        %1665 = vmatmul.mubr.f32.gmra.mrb[0].mxu0 %v763
        %v1666 = vpop.f32.mrb[0].mxu0
        %v1667 = vadd.f32 0.0, %v1666
        %v1668 = vpop.f32.mrb[0].mxu0
        %v1669 = vadd.f32 0.0, %v1668
        %1670 = vmatprep.mubr.f32.mxu0 0.0
        %1671 = vmatmul.mubr.f32.gmra.mrb[0].mxu0 %v766
        %v1672 = vpop.f32.mrb[0].mxu0
        %v1673 = vadd.f32 0.0, %v1672
        %v1674 = vpop.f32.mrb[0].mxu0
        %v1675 = vadd.f32 0.0, %v1674
        %1676 = vmatprep.mubr.f32.mxu0 0.0
        %1677 = vmatmul.mubr.f32.gmra.mrb[0].mxu0 %v769
        %v1678 = vpop.f32.mrb[0].mxu0
        %v1679 = vadd.f32 0.0, %v1678
        %v1680 = vpop.f32.mrb[0].mxu0
        %v1681 = vadd.f32 0.0, %v1680
        %1682 = vmatprep.mubr.f32.mxu0 0.0
        %1683 = vmatmul.mubr.f32.gmra.mrb[0].mxu0 %v772
        %v1684 = vpop.f32.mrb[0].mxu0
        %v1685 = vadd.f32 0.0, %v1684
        %v1686 = vpop.f32.mrb[0].mxu0
        %v1687 = vadd.f32 0.0, %v1686
        %1688 = vmatprep.mubr.f32.mxu0 0.0
        %1689 = vmatmul.mubr.f32.gmra.mrb[0].mxu0 %v775
        %v1690 = vpop.f32.mrb[0].mxu0
        %v1691 = vadd.f32 0.0, %v1690
        %v1692 = vpop.f32.mrb[0].mxu0
        %v1693 = vadd.f32 0.0, %v1692
        %1694 = vmatprep.mubr.f32.mxu0 0.0
        %1695 = vmatmul.mubr.f32.gmra.mrb[0].mxu0 %v778
        %v1696 = vpop.f32.mrb[0].mxu0
        %v1697 = vadd.f32 0.0, %v1696
        %v1698 = vpop.f32.mrb[0].mxu0
        %v1699 = vadd.f32 0.0, %v1698
        %1700 = vmatprep.mubr.f32.mxu0 0.0
        %1701 = vmatmul.mubr.f32.gmra.mrb[0].mxu0 %v781
        %v1702 = vpop.f32.mrb[0].mxu0
        %v1703 = vadd.f32 0.0, %v1702
        %v1704 = vpop.f32.mrb[0].mxu0
        %v1705 = vadd.f32 0.0, %v1704
        %1706 = vmatprep.mubr.f32.mxu0 0.0
        %1707 = vmatmul.mubr.f32.gmra.mrb[0].mxu0 %v1227
        %v1708 = vpop.f32.mrb[0].mxu0
        %v1709 = vadd.f32 0.0, %v1708
        %v1710 = vpop.f32.mrb[0].mxu0
        %v1711 = vadd.f32 0.0, %v1710
        %1712 = vmatprep.mubr.f32.mxu0 0.0
        %1713 = vmatmul.mubr.f32.gmra.mrb[0].mxu0 %v1502
        %v1714 = vpop.f32.mrb[0].mxu0
        %v1715 = vadd.f32 0.0, %v1714
        %v1716 = vpop.f32.mrb[0].mxu0
        %v1717 = vadd.f32 0.0, %v1716
        %1718 = vdwg.mxu0
        %v1719 = vadd.f32 %v1444, %v1577
        %v1720 = vadd.f32 %v1445, %v1579
        %v1721 = vadd.f32 %v1446, %v1583
        %v1722 = vadd.f32 %v1447, %v1585
        %v1723 = vadd.f32 %v1448, %v1589
        %v1724 = vadd.f32 %v1449, %v1591
        %v1725 = vadd.f32 %v1450, %v1595
        %v1726 = vadd.f32 %v1451, %v1597
        %v1727 = vadd.f32 %v1452, %v1601
        %v1728 = vadd.f32 %v1453, %v1603
        %v1729 = vadd.f32 %v1454, %v1607
        %v1730 = vadd.f32 %v1455, %v1609
        %v1731 = vadd.f32 %v1456, %v1613
        %v1732 = vadd.f32 %v1457, %v1615
        %v1733 = vadd.f32 %v1458, %v1619
        %v1734 = vadd.f32 %v1459, %v1621
        %v1735 = vadd.f32 %v1460, %v1625
        %v1736 = vadd.f32 %v1461, %v1627
        %v1737 = vadd.f32 %v1462, %v1631
        %v1738 = vadd.f32 %v1463, %v1633
        %v1739 = vadd.f32 %v1464, %v1637
        %v1740 = vadd.f32 %v1465, %v1639
        %v1741 = vadd.f32 %v1466, %v1643
        %v1742 = vadd.f32 %v1467, %v1645
        %v1743 = vadd.f32 %v1468, %v1649
        %v1744 = vadd.f32 %v1469, %v1651
        %v1745 = vadd.f32 %v1470, %v1655
        %v1746 = vadd.f32 %v1471, %v1657
        %v1747 = vadd.f32 %v1472, %v1661
        %v1748 = vadd.f32 %v1473, %v1663
        %v1749 = vadd.f32 %v1474, %v1667
        %v1750 = vadd.f32 %v1475, %v1669
        %v1751 = vadd.f32 %v1476, %v1673
        %v1752 = vadd.f32 %v1477, %v1675
        %v1753 = vadd.f32 %v1478, %v1679
        %v1754 = vadd.f32 %v1479, %v1681
        %v1755 = vadd.f32 %v1480, %v1685
        %v1756 = vadd.f32 %v1481, %v1687
        %v1757 = vadd.f32 %v1482, %v1691
        %v1758 = vadd.f32 %v1483, %v1693
        %v1759 = vadd.f32 %v1484, %v1697
        %v1760 = vadd.f32 %v1485, %v1699
        %v1761 = vadd.f32 %v1486, %v1703
        %v1762 = vadd.f32 %v1487, %v1705
        %v1763 = vadd.f32 %v1488, %v1709
        %v1764 = vadd.f32 %v1489, %v1711
        %v1765 = vadd.f32 %v1490, %v1715
        %v1766 = vadd.f32 %v1491, %v1717
        %s1767 = scalar_lea.vmem %s1, 256
        %v1768 = vld [vmem:[%s1767] sm:$0xff]
        %v1769 = vld [vmem:[%s1767 + $0x8] sm:$0xff]
        %v1770 = vld [vmem:[%s1767 + $0x10] sm:$0xff]
        %v1771 = vld [vmem:[%s1767 + $0x18] sm:$0xff]
        %v1772 = vld [vmem:[%s1767 + $0x20] sm:$0xff]
        %v1773 = vld [vmem:[%s1767 + $0x28] sm:$0xff]
        %v1774 = vld [vmem:[%s1767 + $0x30] sm:$0xf]
        %v1775 = vld [vmem:[%s1767 + $0x38] sm:$0xf]
        %v1777 = vsel %vm710, %v692, 0
        %v1780 = vsel %vm783, %v1774, 0
        %v1783 = vsel %vm783, %v1775, 0
        %1785 = vmatprep.subr.mxu0 %v1769
        %1786 = vmatpush1.msra.mxu0 %v1768
        %1787 = vmatprep.subr.mxu0 %v1771
        %1788 = vmatpush1.msra.mxu0 %v1770
        %1789 = vmatprep.subr.mxu0 %v1773
        %1790 = vmatpush1.msra.mxu0 %v1772
        %1791 = vmatprep.subr.mxu0 %v1783
        %1792 = vmatpush1.msra.mxu0 %v1780
        %1793 = vmatprep.subr.mxu0 0.0
        %1794 = vmatpush1.msra.mxu0 0.0
        %1795 = vmatprep.subr.mxu0 0.0
        %1796 = vmatpush1.msra.mxu0 0.0
        %1797 = vmatprep.subr.mxu0 0.0
        %1798 = vmatpush1.msra.mxu0 0.0
        %1799 = vmatprep.subr.mxu0 0.0
        %1800 = vmatpush1.msra.mxu0 0.0
        %1801 = vmatprep.subr.mxu0 0.0
        %1802 = vmatpush1.msra.mxu0 0.0
        %1803 = vmatprep.subr.mxu0 0.0
        %1804 = vmatpush1.msra.mxu0 0.0
        %1805 = vmatprep.subr.mxu0 0.0
        %1806 = vmatpush1.msra.mxu0 0.0
        %1807 = vmatprep.subr.mxu0 0.0
        %1808 = vmatpush1.msra.mxu0 0.0
        %1809 = vmatprep.subr.mxu0 0.0
        %1810 = vmatpush1.msra.mxu0 0.0
        %1811 = vmatprep.subr.mxu0 0.0
        %1812 = vmatpush1.msra.mxu0 0.0
        %1813 = vmatprep.subr.mxu0 0.0
        %1814 = vmatpush1.msra.mxu0 0.0
        %1815 = vmatprep.subr.mxu0 0.0
        %1816 = vmatpush1.msra.mxu0 0.0
        %1817 = vmatprep.subr.mxu0 0.0
        %1818 = vmatpush1.msra.mxu0 0.0
        %1819 = vmatprep.subr.mxu0 0.0
        %1820 = vmatpush1.msra.mxu0 0.0
        %1821 = vmatprep.subr.mxu0 0.0
        %1822 = vmatpush1.msra.mxu0 0.0
        %1823 = vmatprep.subr.mxu0 0.0
        %1824 = vmatpush1.msra.mxu0 0.0
        %1825 = vmatprep.subr.mxu0 0.0
        %1826 = vmatpush1.msra.mxu0 0.0
        %1827 = vmatprep.subr.mxu0 0.0
        %1828 = vmatpush1.msra.mxu0 0.0
        %1829 = vmatprep.subr.mxu0 0.0
        %1830 = vmatpush1.msra.mxu0 0.0
        %1831 = vmatprep.subr.mxu0 0.0
        %1832 = vmatpush1.msra.mxu0 0.0
        %1833 = vmatprep.subr.mxu0 0.0
        %1834 = vmatpush1.msra.mxu0 0.0
        %1835 = vmatprep.subr.mxu0 0.0
        %1836 = vmatpush1.msra.mxu0 0.0
        %1837 = vmatprep.subr.mxu0 0.0
        %1838 = vmatpush1.msra.mxu0 0.0
        %1839 = vmatprep.subr.mxu0 0.0
        %1840 = vmatpush1.msra.mxu0 0.0
        %1841 = vmatprep.subr.mxu0 0.0
        %1842 = vmatpush1.msra.mxu0 0.0
        %1843 = vmatprep.subr.mxu0 0.0
        %1844 = vmatpush1.msra.mxu0 0.0
        %1845 = vmatprep.subr.mxu0 0.0
        %1846 = vmatpush1.msra.mxu0 0.0
        %1847 = vmatprep.subr.mxu0 0.0
        %1848 = vmatpush1.msra.mxu0 0.0
        %1849 = vmatprep.mubr.f32.mxu0 0.0
        %1850 = vmatmul.mubr.f32.gmra.mrb[0].mxu0 %v721
        %v1851 = vpop.f32.mrb[0].mxu0
        %v1852 = vadd.f32 0.0, %v1851
        %v1853 = vpop.f32.mrb[0].mxu0
        %v1854 = vadd.f32 0.0, %v1853
        %1855 = vmatprep.mubr.f32.mxu0 0.0
        %1856 = vmatmul.mubr.f32.gmra.mrb[0].mxu0 %v724
        %v1857 = vpop.f32.mrb[0].mxu0
        %v1858 = vadd.f32 0.0, %v1857
        %v1859 = vpop.f32.mrb[0].mxu0
        %v1860 = vadd.f32 0.0, %v1859
        %1861 = vmatprep.mubr.f32.mxu0 0.0
        %1862 = vmatmul.mubr.f32.gmra.mrb[0].mxu0 %v727
        %v1863 = vpop.f32.mrb[0].mxu0
        %v1864 = vadd.f32 0.0, %v1863
        %v1865 = vpop.f32.mrb[0].mxu0
        %v1866 = vadd.f32 0.0, %v1865
        %1867 = vmatprep.mubr.f32.mxu0 0.0
        %1868 = vmatmul.mubr.f32.gmra.mrb[0].mxu0 %v730
        %v1869 = vpop.f32.mrb[0].mxu0
        %v1870 = vadd.f32 0.0, %v1869
        %v1871 = vpop.f32.mrb[0].mxu0
        %v1872 = vadd.f32 0.0, %v1871
        %1873 = vmatprep.mubr.f32.mxu0 0.0
        %1874 = vmatmul.mubr.f32.gmra.mrb[0].mxu0 %v733
        %v1875 = vpop.f32.mrb[0].mxu0
        %v1876 = vadd.f32 0.0, %v1875
        %v1877 = vpop.f32.mrb[0].mxu0
        %v1878 = vadd.f32 0.0, %v1877
        %1879 = vmatprep.mubr.f32.mxu0 0.0
        %1880 = vmatmul.mubr.f32.gmra.mrb[0].mxu0 %v736
        %v1881 = vpop.f32.mrb[0].mxu0
        %v1882 = vadd.f32 0.0, %v1881
        %v1883 = vpop.f32.mrb[0].mxu0
        %v1884 = vadd.f32 0.0, %v1883
        %1885 = vmatprep.mubr.f32.mxu0 0.0
        %1886 = vmatmul.mubr.f32.gmra.mrb[0].mxu0 %v739
        %v1887 = vpop.f32.mrb[0].mxu0
        %v1888 = vadd.f32 0.0, %v1887
        %v1889 = vpop.f32.mrb[0].mxu0
        %v1890 = vadd.f32 0.0, %v1889
        %1891 = vmatprep.mubr.f32.mxu0 0.0
        %1892 = vmatmul.mubr.f32.gmra.mrb[0].mxu0 %v742
        %v1893 = vpop.f32.mrb[0].mxu0
        %v1894 = vadd.f32 0.0, %v1893
        %v1895 = vpop.f32.mrb[0].mxu0
        %v1896 = vadd.f32 0.0, %v1895
        %1897 = vmatprep.mubr.f32.mxu0 0.0
        %1898 = vmatmul.mubr.f32.gmra.mrb[0].mxu0 %v745
        %v1899 = vpop.f32.mrb[0].mxu0
        %v1900 = vadd.f32 0.0, %v1899
        %v1901 = vpop.f32.mrb[0].mxu0
        %v1902 = vadd.f32 0.0, %v1901
        %1903 = vmatprep.mubr.f32.mxu0 0.0
        %1904 = vmatmul.mubr.f32.gmra.mrb[0].mxu0 %v748
        %v1905 = vpop.f32.mrb[0].mxu0
        %v1906 = vadd.f32 0.0, %v1905
        %v1907 = vpop.f32.mrb[0].mxu0
        %v1908 = vadd.f32 0.0, %v1907
        %1909 = vmatprep.mubr.f32.mxu0 0.0
        %1910 = vmatmul.mubr.f32.gmra.mrb[0].mxu0 %v751
        %v1911 = vpop.f32.mrb[0].mxu0
        %v1912 = vadd.f32 0.0, %v1911
        %v1913 = vpop.f32.mrb[0].mxu0
        %v1914 = vadd.f32 0.0, %v1913
        %1915 = vmatprep.mubr.f32.mxu0 0.0
        %1916 = vmatmul.mubr.f32.gmra.mrb[0].mxu0 %v754
        %v1917 = vpop.f32.mrb[0].mxu0
        %v1918 = vadd.f32 0.0, %v1917
        %v1919 = vpop.f32.mrb[0].mxu0
        %v1920 = vadd.f32 0.0, %v1919
        %1921 = vmatprep.mubr.f32.mxu0 0.0
        %1922 = vmatmul.mubr.f32.gmra.mrb[0].mxu0 %v757
        %v1923 = vpop.f32.mrb[0].mxu0
        %v1924 = vadd.f32 0.0, %v1923
        %v1925 = vpop.f32.mrb[0].mxu0
        %v1926 = vadd.f32 0.0, %v1925
        %1927 = vmatprep.mubr.f32.mxu0 0.0
        %1928 = vmatmul.mubr.f32.gmra.mrb[0].mxu0 %v760
        %v1929 = vpop.f32.mrb[0].mxu0
        %v1930 = vadd.f32 0.0, %v1929
        %v1931 = vpop.f32.mrb[0].mxu0
        %v1932 = vadd.f32 0.0, %v1931
        %1933 = vmatprep.mubr.f32.mxu0 0.0
        %1934 = vmatmul.mubr.f32.gmra.mrb[0].mxu0 %v763
        %v1935 = vpop.f32.mrb[0].mxu0
        %v1936 = vadd.f32 0.0, %v1935
        %v1937 = vpop.f32.mrb[0].mxu0
        %v1938 = vadd.f32 0.0, %v1937
        %1939 = vmatprep.mubr.f32.mxu0 0.0
        %1940 = vmatmul.mubr.f32.gmra.mrb[0].mxu0 %v766
        %v1941 = vpop.f32.mrb[0].mxu0
        %v1942 = vadd.f32 0.0, %v1941
        %v1943 = vpop.f32.mrb[0].mxu0
        %v1944 = vadd.f32 0.0, %v1943
        %1945 = vmatprep.mubr.f32.mxu0 0.0
        %1946 = vmatmul.mubr.f32.gmra.mrb[0].mxu0 %v769
        %v1947 = vpop.f32.mrb[0].mxu0
        %v1948 = vadd.f32 0.0, %v1947
        %v1949 = vpop.f32.mrb[0].mxu0
        %v1950 = vadd.f32 0.0, %v1949
        %1951 = vmatprep.mubr.f32.mxu0 0.0
        %1952 = vmatmul.mubr.f32.gmra.mrb[0].mxu0 %v772
        %v1953 = vpop.f32.mrb[0].mxu0
        %v1954 = vadd.f32 0.0, %v1953
        %v1955 = vpop.f32.mrb[0].mxu0
        %v1956 = vadd.f32 0.0, %v1955
        %1957 = vmatprep.mubr.f32.mxu0 0.0
        %1958 = vmatmul.mubr.f32.gmra.mrb[0].mxu0 %v775
        %v1959 = vpop.f32.mrb[0].mxu0
        %v1960 = vadd.f32 0.0, %v1959
        %v1961 = vpop.f32.mrb[0].mxu0
        %v1962 = vadd.f32 0.0, %v1961
        %1963 = vmatprep.mubr.f32.mxu0 0.0
        %1964 = vmatmul.mubr.f32.gmra.mrb[0].mxu0 %v778
        %v1965 = vpop.f32.mrb[0].mxu0
        %v1966 = vadd.f32 0.0, %v1965
        %v1967 = vpop.f32.mrb[0].mxu0
        %v1968 = vadd.f32 0.0, %v1967
        %1969 = vmatprep.mubr.f32.mxu0 0.0
        %1970 = vmatmul.mubr.f32.gmra.mrb[0].mxu0 %v781
        %v1971 = vpop.f32.mrb[0].mxu0
        %v1972 = vadd.f32 0.0, %v1971
        %v1973 = vpop.f32.mrb[0].mxu0
        %v1974 = vadd.f32 0.0, %v1973
        %1975 = vmatprep.mubr.f32.mxu0 0.0
        %1976 = vmatmul.mubr.f32.gmra.mrb[0].mxu0 %v1227
        %v1977 = vpop.f32.mrb[0].mxu0
        %v1978 = vadd.f32 0.0, %v1977
        %v1979 = vpop.f32.mrb[0].mxu0
        %v1980 = vadd.f32 0.0, %v1979
        %1981 = vmatprep.mubr.f32.mxu0 0.0
        %1982 = vmatmul.mubr.f32.gmra.mrb[0].mxu0 %v1502
        %v1983 = vpop.f32.mrb[0].mxu0
        %v1984 = vadd.f32 0.0, %v1983
        %v1985 = vpop.f32.mrb[0].mxu0
        %v1986 = vadd.f32 0.0, %v1985
        %1987 = vmatprep.mubr.f32.mxu0 0.0
        %1988 = vmatmul.mubr.f32.gmra.mrb[0].mxu0 %v1777
        %v1989 = vpop.f32.mrb[0].mxu0
        %v1990 = vadd.f32 0.0, %v1989
        %v1991 = vpop.f32.mrb[0].mxu0
        %v1992 = vadd.f32 0.0, %v1991
        %1993 = vdwg.mxu0
        %v1994 = vadd.f32 %v1719, %v1852
        %v1995 = vadd.f32 %v1720, %v1854
        %v1996 = vadd.f32 %v1721, %v1858
        %v1997 = vadd.f32 %v1722, %v1860
        %v1998 = vadd.f32 %v1723, %v1864
        %v1999 = vadd.f32 %v1724, %v1866
        %v2000 = vadd.f32 %v1725, %v1870
        %v2001 = vadd.f32 %v1726, %v1872
        %v2002 = vadd.f32 %v1727, %v1876
        %v2003 = vadd.f32 %v1728, %v1878
        %v2004 = vadd.f32 %v1729, %v1882
        %v2005 = vadd.f32 %v1730, %v1884
        %v2006 = vadd.f32 %v1731, %v1888
        %v2007 = vadd.f32 %v1732, %v1890
        %v2008 = vadd.f32 %v1733, %v1894
        %v2009 = vadd.f32 %v1734, %v1896
        %v2010 = vadd.f32 %v1735, %v1900
        %v2011 = vadd.f32 %v1736, %v1902
        %v2012 = vadd.f32 %v1737, %v1906
        %v2013 = vadd.f32 %v1738, %v1908
        %v2014 = vadd.f32 %v1739, %v1912
        %v2015 = vadd.f32 %v1740, %v1914
        %v2016 = vadd.f32 %v1741, %v1918
        %v2017 = vadd.f32 %v1742, %v1920
        %v2018 = vadd.f32 %v1743, %v1924
        %v2019 = vadd.f32 %v1744, %v1926
        %v2020 = vadd.f32 %v1745, %v1930
        %v2021 = vadd.f32 %v1746, %v1932
        %v2022 = vadd.f32 %v1747, %v1936
        %v2023 = vadd.f32 %v1748, %v1938
        %v2024 = vadd.f32 %v1749, %v1942
        %v2025 = vadd.f32 %v1750, %v1944
        %v2026 = vadd.f32 %v1751, %v1948
        %v2027 = vadd.f32 %v1752, %v1950
        %v2028 = vadd.f32 %v1753, %v1954
        %v2029 = vadd.f32 %v1754, %v1956
        %v2030 = vadd.f32 %v1755, %v1960
        %v2031 = vadd.f32 %v1756, %v1962
        %v2032 = vadd.f32 %v1757, %v1966
        %v2033 = vadd.f32 %v1758, %v1968
        %v2034 = vadd.f32 %v1759, %v1972
        %v2035 = vadd.f32 %v1760, %v1974
        %v2036 = vadd.f32 %v1761, %v1978
        %v2037 = vadd.f32 %v1762, %v1980
        %v2038 = vadd.f32 %v1763, %v1984
        %v2039 = vadd.f32 %v1764, %v1986
        %v2040 = vadd.f32 %v1765, %v1990
        %v2041 = vadd.f32 %v1766, %v1992
        %v2042 = vld [vmem:[%s2] sm:$0x3]
        %v2044 = vlaneseq
        %v2045 = vshrl.u32 %v2044, 7
        %v2046 = vsub.s32 0, %v2045
        %v2047 = vrot.slane %v2042, %v2046
        %v2048 = vlaneseq
        %v2049 = vshrl.u32 %v2048, 7
        %v2050 = vsub.s32 1, %v2049
        %v2051 = vrot.slane %v2042, %v2050
        %v2054 = vadd.f32 %v1994, %v2047
        %v2055 = vadd.f32 %v1995, %v2051
        %v2056 = vadd.f32 %v1996, %v2047
        %v2057 = vadd.f32 %v1997, %v2051
        %v2058 = vadd.f32 %v1998, %v2047
        %v2059 = vadd.f32 %v1999, %v2051
        %v2060 = vadd.f32 %v2000, %v2047
        %v2061 = vadd.f32 %v2001, %v2051
        %v2062 = vadd.f32 %v2002, %v2047
        %v2063 = vadd.f32 %v2003, %v2051
        %v2064 = vadd.f32 %v2004, %v2047
        %v2065 = vadd.f32 %v2005, %v2051
        %v2066 = vadd.f32 %v2006, %v2047
        %v2067 = vadd.f32 %v2007, %v2051
        %v2068 = vadd.f32 %v2008, %v2047
        %v2069 = vadd.f32 %v2009, %v2051
        %v2070 = vadd.f32 %v2010, %v2047
        %v2071 = vadd.f32 %v2011, %v2051
        %v2072 = vadd.f32 %v2012, %v2047
        %v2073 = vadd.f32 %v2013, %v2051
        %v2074 = vadd.f32 %v2014, %v2047
        %v2075 = vadd.f32 %v2015, %v2051
        %v2076 = vadd.f32 %v2016, %v2047
        %v2077 = vadd.f32 %v2017, %v2051
        %v2078 = vadd.f32 %v2018, %v2047
        %v2079 = vadd.f32 %v2019, %v2051
        %v2080 = vadd.f32 %v2020, %v2047
        %v2081 = vadd.f32 %v2021, %v2051
        %v2082 = vadd.f32 %v2022, %v2047
        %v2083 = vadd.f32 %v2023, %v2051
        %v2084 = vadd.f32 %v2024, %v2047
        %v2085 = vadd.f32 %v2025, %v2051
        %v2086 = vadd.f32 %v2026, %v2047
        %v2087 = vadd.f32 %v2027, %v2051
        %v2088 = vadd.f32 %v2028, %v2047
        %v2089 = vadd.f32 %v2029, %v2051
        %v2090 = vadd.f32 %v2030, %v2047
        %v2091 = vadd.f32 %v2031, %v2051
        %v2092 = vadd.f32 %v2032, %v2047
        %v2093 = vadd.f32 %v2033, %v2051
        %v2094 = vadd.f32 %v2034, %v2047
        %v2095 = vadd.f32 %v2035, %v2051
        %v2096 = vadd.f32 %v2036, %v2047
        %v2097 = vadd.f32 %v2037, %v2051
        %v2098 = vadd.f32 %v2038, %v2047
        %v2099 = vadd.f32 %v2039, %v2051
        %v2100 = vadd.f32 %v2040, %v2047
        %v2101 = vadd.f32 %v2041, %v2051
        %v2102 = vmax.f32 %v2054, 0.0
        %v2103 = vmax.f32 %v2055, 0.0
        %v2104 = vmax.f32 %v2056, 0.0
        %v2105 = vmax.f32 %v2057, 0.0
        %v2106 = vmax.f32 %v2058, 0.0
        %v2107 = vmax.f32 %v2059, 0.0
        %v2108 = vmax.f32 %v2060, 0.0
        %v2109 = vmax.f32 %v2061, 0.0
        %v2110 = vmax.f32 %v2062, 0.0
        %v2111 = vmax.f32 %v2063, 0.0
        %v2112 = vmax.f32 %v2064, 0.0
        %v2113 = vmax.f32 %v2065, 0.0
        %v2114 = vmax.f32 %v2066, 0.0
        %v2115 = vmax.f32 %v2067, 0.0
        %v2116 = vmax.f32 %v2068, 0.0
        %v2117 = vmax.f32 %v2069, 0.0
        %v2118 = vmax.f32 %v2070, 0.0
        %v2119 = vmax.f32 %v2071, 0.0
        %v2120 = vmax.f32 %v2072, 0.0
        %v2121 = vmax.f32 %v2073, 0.0
        %v2122 = vmax.f32 %v2074, 0.0
        %v2123 = vmax.f32 %v2075, 0.0
        %v2124 = vmax.f32 %v2076, 0.0
        %v2125 = vmax.f32 %v2077, 0.0
        %v2126 = vmax.f32 %v2078, 0.0
        %v2127 = vmax.f32 %v2079, 0.0
        %v2128 = vmax.f32 %v2080, 0.0
        %v2129 = vmax.f32 %v2081, 0.0
        %v2130 = vmax.f32 %v2082, 0.0
        %v2131 = vmax.f32 %v2083, 0.0
        %v2132 = vmax.f32 %v2084, 0.0
        %v2133 = vmax.f32 %v2085, 0.0
        %v2134 = vmax.f32 %v2086, 0.0
        %v2135 = vmax.f32 %v2087, 0.0
        %v2136 = vmax.f32 %v2088, 0.0
        %v2137 = vmax.f32 %v2089, 0.0
        %v2138 = vmax.f32 %v2090, 0.0
        %v2139 = vmax.f32 %v2091, 0.0
        %v2140 = vmax.f32 %v2092, 0.0
        %v2141 = vmax.f32 %v2093, 0.0
        %v2142 = vmax.f32 %v2094, 0.0
        %v2143 = vmax.f32 %v2095, 0.0
        %v2144 = vmax.f32 %v2096, 0.0
        %v2145 = vmax.f32 %v2097, 0.0
        %v2146 = vmax.f32 %v2098, 0.0
        %v2147 = vmax.f32 %v2099, 0.0
        %v2148 = vmax.f32 %v2100, 0.0
        %v2149 = vmax.f32 %v2101, 0.0
        %v2150 = vmax.f32 %v2102, %v2104
        %v2151 = vmax.f32 %v2103, %v2105
        %v2152 = vmax.f32 %v2106, %v2108
        %v2153 = vmax.f32 %v2107, %v2109
        %v2154 = vmax.f32 %v2110, %v2112
        %v2155 = vmax.f32 %v2111, %v2113
        %v2156 = vmax.f32 %v2114, %v2116
        %v2157 = vmax.f32 %v2115, %v2117
        %v2158 = vmax.f32 %v2118, %v2120
        %v2159 = vmax.f32 %v2119, %v2121
        %v2160 = vmax.f32 %v2122, %v2124
        %v2161 = vmax.f32 %v2123, %v2125
        %v2162 = vmax.f32 %v2126, %v2128
        %v2163 = vmax.f32 %v2127, %v2129
        %v2164 = vmax.f32 %v2130, %v2132
        %v2165 = vmax.f32 %v2131, %v2133
        %v2166 = vmax.f32 %v2134, %v2136
        %v2167 = vmax.f32 %v2135, %v2137
        %v2168 = vmax.f32 %v2138, %v2140
        %v2169 = vmax.f32 %v2139, %v2141
        %v2170 = vmax.f32 %v2142, %v2144
        %v2171 = vmax.f32 %v2143, %v2145
        %v2172 = vmax.f32 %v2146, %v2148
        %v2173 = vmax.f32 %v2147, %v2149
        %v2174 = vld [vmem:[#allocation3] sm:$0xff]
        %v2175 = vld [vmem:[#allocation3 + $0x8] sm:$0xff]
        %v2176 = vld [vmem:[#allocation3 + $0x10] sm:$0xff]
        %v2177 = vld [vmem:[#allocation3 + $0x18] sm:$0xff]
        %v2178 = vld [vmem:[#allocation3 + $0x20] sm:$0xff]
        %v2179 = vld [vmem:[#allocation3 + $0x28] sm:$0xff]
        %v2180 = vld [vmem:[#allocation3 + $0x30] sm:$0xff]
        %v2181 = vld [vmem:[#allocation3 + $0x38] sm:$0xff]
        %v2182 = vld [vmem:[#allocation3 + $0x40] sm:$0xff]
        %v2183 = vld [vmem:[#allocation3 + $0x48] sm:$0xff]
        %v2184 = vld [vmem:[#allocation3 + $0x50] sm:$0xff]
        %v2185 = vld [vmem:[#allocation3 + $0x58] sm:$0xff]
        %v2186 = vld [vmem:[#allocation3 + $0x60] sm:$0xff]
        %v2187 = vld [vmem:[#allocation3 + $0x68] sm:$0xff]
        %v2188 = vld [vmem:[#allocation3 + $0x70] sm:$0xff]
        %v2189 = vld [vmem:[#allocation3 + $0x78] sm:$0xff]
        %v2190 = vld [vmem:[#allocation3 + $0x80] sm:$0xff]
        %v2191 = vld [vmem:[#allocation3 + $0x88] sm:$0xff]
        %vm2192 = vcmask 130048
        %v2194 = vsel %vm2192, %v2151, 0
        %v2197 = vsel %vm2192, %v2153, 0
        %v2200 = vsel %vm2192, %v2155, 0
        %v2203 = vsel %vm2192, %v2157, 0
        %v2206 = vsel %vm2192, %v2159, 0
        %v2209 = vsel %vm2192, %v2161, 0
        %v2212 = vsel %vm2192, %v2163, 0
        %v2215 = vsel %vm2192, %v2165, 0
        %v2218 = vsel %vm2192, %v2167, 0
        %v2221 = vsel %vm2192, %v2169, 0
        %v2224 = vsel %vm2192, %v2171, 0
        %v2227 = vsel %vm2192, %v2173, 0
        %2229 = vmatprep.subr.mxu0 0.0
        %2230 = vmatpush1.msra.mxu0 %v2174
        %2231 = vmatprep.subr.mxu0 0.0
        %2232 = vmatpush1.msra.mxu0 %v2175
        %2233 = vmatprep.subr.mxu0 0.0
        %2234 = vmatpush1.msra.mxu0 %v2176
        %2235 = vmatprep.subr.mxu0 0.0
        %2236 = vmatpush1.msra.mxu0 %v2177
        %2237 = vmatprep.subr.mxu0 0.0
        %2238 = vmatpush1.msra.mxu0 %v2178
        %2239 = vmatprep.subr.mxu0 0.0
        %2240 = vmatpush1.msra.mxu0 %v2179
        %2241 = vmatprep.subr.mxu0 0.0
        %2242 = vmatpush1.msra.mxu0 %v2180
        %2243 = vmatprep.subr.mxu0 0.0
        %2244 = vmatpush1.msra.mxu0 %v2181
        %2245 = vmatprep.subr.mxu0 0.0
        %2246 = vmatpush1.msra.mxu0 %v2182
        %2247 = vmatprep.subr.mxu0 0.0
        %2248 = vmatpush1.msra.mxu0 %v2183
        %2249 = vmatprep.subr.mxu0 0.0
        %2250 = vmatpush1.msra.mxu0 %v2184
        %2251 = vmatprep.subr.mxu0 0.0
        %2252 = vmatpush1.msra.mxu0 %v2185
        %2253 = vmatprep.subr.mxu0 0.0
        %2254 = vmatpush1.msra.mxu0 %v2186
        %2255 = vmatprep.subr.mxu0 0.0
        %2256 = vmatpush1.msra.mxu0 %v2187
        %2257 = vmatprep.subr.mxu0 0.0
        %2258 = vmatpush1.msra.mxu0 %v2188
        %2259 = vmatprep.subr.mxu0 0.0
        %2260 = vmatpush1.msra.mxu0 %v2189
        %2261 = vmatprep.subr.mxu0 0.0
        %2262 = vmatpush1.msra.mxu0 %v2190
        %2263 = vmatprep.subr.mxu0 0.0
        %2264 = vmatpush1.msra.mxu0 %v2191
        %2265 = vmatprep.subr.mxu0 0.0
        %2266 = vmatpush1.msra.mxu0 0.0
        %2267 = vmatprep.subr.mxu0 0.0
        %2268 = vmatpush1.msra.mxu0 0.0
        %2269 = vmatprep.subr.mxu0 0.0
        %2270 = vmatpush1.msra.mxu0 0.0
        %2271 = vmatprep.subr.mxu0 0.0
        %2272 = vmatpush1.msra.mxu0 0.0
        %2273 = vmatprep.subr.mxu0 0.0
        %2274 = vmatpush1.msra.mxu0 0.0
        %2275 = vmatprep.subr.mxu0 0.0
        %2276 = vmatpush1.msra.mxu0 0.0
        %2277 = vmatprep.subr.mxu0 0.0
        %2278 = vmatpush1.msra.mxu0 0.0
        %2279 = vmatprep.subr.mxu0 0.0
        %2280 = vmatpush1.msra.mxu0 0.0
        %2281 = vmatprep.subr.mxu0 0.0
        %2282 = vmatpush1.msra.mxu0 0.0
        %2283 = vmatprep.subr.mxu0 0.0
        %2284 = vmatpush1.msra.mxu0 0.0
        %2285 = vmatprep.subr.mxu0 0.0
        %2286 = vmatpush1.msra.mxu0 0.0
        %2287 = vmatprep.subr.mxu0 0.0
        %2288 = vmatpush1.msra.mxu0 0.0
        %2289 = vmatprep.subr.mxu0 0.0
        %2290 = vmatpush1.msra.mxu0 0.0
        %2291 = vmatprep.subr.mxu0 0.0
        %2292 = vmatpush1.msra.mxu0 0.0
        %2293 = vmatprep.mubr.f32.mxu0 %v2194
        %2294 = vmatmul.mubr.f32.gmra.mrb[0].mxu0 %v2150
        %v2295 = vpop.f32.mrb[0].mxu0
        %v2296 = vadd.f32 0.0, %v2295
        %v2297 = vpop.f32.mrb[0].mxu0
        %2298 = vmatprep.mubr.f32.mxu0 %v2197
        %2299 = vmatmul.mubr.f32.gmra.mrb[0].mxu0 %v2152
        %v2300 = vpop.f32.mrb[0].mxu0
        %v2301 = vadd.f32 0.0, %v2300
        %v2302 = vpop.f32.mrb[0].mxu0
        %2303 = vmatprep.mubr.f32.mxu0 %v2200
        %2304 = vmatmul.mubr.f32.gmra.mrb[0].mxu0 %v2154
        %v2305 = vpop.f32.mrb[0].mxu0
        %v2306 = vadd.f32 0.0, %v2305
        %v2307 = vpop.f32.mrb[0].mxu0
        %2308 = vmatprep.mubr.f32.mxu0 %v2203
        %2309 = vmatmul.mubr.f32.gmra.mrb[0].mxu0 %v2156
        %v2310 = vpop.f32.mrb[0].mxu0
        %v2311 = vadd.f32 0.0, %v2310
        %v2312 = vpop.f32.mrb[0].mxu0
        %2313 = vmatprep.mubr.f32.mxu0 %v2206
        %2314 = vmatmul.mubr.f32.gmra.mrb[0].mxu0 %v2158
        %v2315 = vpop.f32.mrb[0].mxu0
        %v2316 = vadd.f32 0.0, %v2315
        %v2317 = vpop.f32.mrb[0].mxu0
        %2318 = vmatprep.mubr.f32.mxu0 %v2209
        %2319 = vmatmul.mubr.f32.gmra.mrb[0].mxu0 %v2160
        %v2320 = vpop.f32.mrb[0].mxu0
        %v2321 = vadd.f32 0.0, %v2320
        %v2322 = vpop.f32.mrb[0].mxu0
        %2323 = vmatprep.mubr.f32.mxu0 %v2212
        %2324 = vmatmul.mubr.f32.gmra.mrb[0].mxu0 %v2162
        %v2325 = vpop.f32.mrb[0].mxu0
        %v2326 = vadd.f32 0.0, %v2325
        %v2327 = vpop.f32.mrb[0].mxu0
        %2328 = vmatprep.mubr.f32.mxu0 %v2215
        %2329 = vmatmul.mubr.f32.gmra.mrb[0].mxu0 %v2164
        %v2330 = vpop.f32.mrb[0].mxu0
        %v2331 = vadd.f32 0.0, %v2330
        %v2332 = vpop.f32.mrb[0].mxu0
        %2333 = vmatprep.mubr.f32.mxu0 %v2218
        %2334 = vmatmul.mubr.f32.gmra.mrb[0].mxu0 %v2166
        %v2335 = vpop.f32.mrb[0].mxu0
        %v2336 = vadd.f32 0.0, %v2335
        %v2337 = vpop.f32.mrb[0].mxu0
        %2338 = vmatprep.mubr.f32.mxu0 %v2221
        %2339 = vmatmul.mubr.f32.gmra.mrb[0].mxu0 %v2168
        %v2340 = vpop.f32.mrb[0].mxu0
        %v2341 = vadd.f32 0.0, %v2340
        %v2342 = vpop.f32.mrb[0].mxu0
        %2343 = vmatprep.mubr.f32.mxu0 %v2224
        %2344 = vmatmul.mubr.f32.gmra.mrb[0].mxu0 %v2170
        %v2345 = vpop.f32.mrb[0].mxu0
        %v2346 = vadd.f32 0.0, %v2345
        %v2347 = vpop.f32.mrb[0].mxu0
        %2348 = vmatprep.mubr.f32.mxu0 %v2227
        %2349 = vmatmul.mubr.f32.gmra.mrb[0].mxu0 %v2172
        %v2350 = vpop.f32.mrb[0].mxu0
        %v2351 = vadd.f32 0.0, %v2350
        %v2352 = vpop.f32.mrb[0].mxu0
        %2353 = vdwg.mxu0
        %v2354 = vld [vmem:[#allocation6] sm:$0xff]
        %v2355 = vld [vmem:[#allocation6 + $0x8] sm:$0xff]
        %v2356 = vld [vmem:[#allocation6 + $0x10] sm:$0xff]
        %v2357 = vld [vmem:[#allocation6 + $0x18] sm:$0xff]
        %v2358 = vld [vmem:[#allocation6 + $0x20] sm:$0xff]
        %v2359 = vld [vmem:[#allocation6 + $0x28] sm:$0xff]
        %v2360 = vld [vmem:[#allocation6 + $0x30] sm:$0xff]
        %v2361 = vld [vmem:[#allocation6 + $0x38] sm:$0xff]
        %v2362 = vld [vmem:[#allocation6 + $0x40] sm:$0xff]
        %v2363 = vld [vmem:[#allocation6 + $0x48] sm:$0xff]
        %v2364 = vld [vmem:[#allocation6 + $0x50] sm:$0xff]
        %v2365 = vld [vmem:[#allocation6 + $0x58] sm:$0xff]
        %v2366 = vld [vmem:[#allocation6 + $0x60] sm:$0xff]
        %v2367 = vld [vmem:[#allocation6 + $0x68] sm:$0xff]
        %v2368 = vld [vmem:[#allocation6 + $0x70] sm:$0xff]
        %v2369 = vld [vmem:[#allocation6 + $0x78] sm:$0xff]
        %v2370 = vld [vmem:[#allocation6 + $0x80] sm:$0xff]
        %v2371 = vld [vmem:[#allocation6 + $0x88] sm:$0xff]
        %2372 = vmatprep.subr.mxu0 0.0
        %2373 = vmatpush1.msra.mxu0 %v2354
        %2374 = vmatprep.subr.mxu0 0.0
        %2375 = vmatpush1.msra.mxu0 %v2355
        %2376 = vmatprep.subr.mxu0 0.0
        %2377 = vmatpush1.msra.mxu0 %v2356
        %2378 = vmatprep.subr.mxu0 0.0
        %2379 = vmatpush1.msra.mxu0 %v2357
        %2380 = vmatprep.subr.mxu0 0.0
        %2381 = vmatpush1.msra.mxu0 %v2358
        %2382 = vmatprep.subr.mxu0 0.0
        %2383 = vmatpush1.msra.mxu0 %v2359
        %2384 = vmatprep.subr.mxu0 0.0
        %2385 = vmatpush1.msra.mxu0 %v2360
        %2386 = vmatprep.subr.mxu0 0.0
        %2387 = vmatpush1.msra.mxu0 %v2361
        %2388 = vmatprep.subr.mxu0 0.0
        %2389 = vmatpush1.msra.mxu0 %v2362
        %2390 = vmatprep.subr.mxu0 0.0
        %2391 = vmatpush1.msra.mxu0 %v2363
        %2392 = vmatprep.subr.mxu0 0.0
        %2393 = vmatpush1.msra.mxu0 %v2364
        %2394 = vmatprep.subr.mxu0 0.0
        %2395 = vmatpush1.msra.mxu0 %v2365
        %2396 = vmatprep.subr.mxu0 0.0
        %2397 = vmatpush1.msra.mxu0 %v2366
        %2398 = vmatprep.subr.mxu0 0.0
        %2399 = vmatpush1.msra.mxu0 %v2367
        %2400 = vmatprep.subr.mxu0 0.0
        %2401 = vmatpush1.msra.mxu0 %v2368
        %2402 = vmatprep.subr.mxu0 0.0
        %2403 = vmatpush1.msra.mxu0 %v2369
        %2404 = vmatprep.subr.mxu0 0.0
        %2405 = vmatpush1.msra.mxu0 %v2370
        %2406 = vmatprep.subr.mxu0 0.0
        %2407 = vmatpush1.msra.mxu0 %v2371
        %2408 = vmatprep.subr.mxu0 0.0
        %2409 = vmatpush1.msra.mxu0 0.0
        %2410 = vmatprep.subr.mxu0 0.0
        %2411 = vmatpush1.msra.mxu0 0.0
        %2412 = vmatprep.subr.mxu0 0.0
        %2413 = vmatpush1.msra.mxu0 0.0
        %2414 = vmatprep.subr.mxu0 0.0
        %2415 = vmatpush1.msra.mxu0 0.0
        %2416 = vmatprep.subr.mxu0 0.0
        %2417 = vmatpush1.msra.mxu0 0.0
        %2418 = vmatprep.subr.mxu0 0.0
        %2419 = vmatpush1.msra.mxu0 0.0
        %2420 = vmatprep.subr.mxu0 0.0
        %2421 = vmatpush1.msra.mxu0 0.0
        %2422 = vmatprep.subr.mxu0 0.0
        %2423 = vmatpush1.msra.mxu0 0.0
        %2424 = vmatprep.subr.mxu0 0.0
        %2425 = vmatpush1.msra.mxu0 0.0
        %2426 = vmatprep.subr.mxu0 0.0
        %2427 = vmatpush1.msra.mxu0 0.0
        %2428 = vmatprep.subr.mxu0 0.0
        %2429 = vmatpush1.msra.mxu0 0.0
        %2430 = vmatprep.subr.mxu0 0.0
        %2431 = vmatpush1.msra.mxu0 0.0
        %2432 = vmatprep.subr.mxu0 0.0
        %2433 = vmatpush1.msra.mxu0 0.0
        %2434 = vmatprep.subr.mxu0 0.0
        %2435 = vmatpush1.msra.mxu0 0.0
        %2436 = vmatprep.mubr.f32.mxu0 %v2194
        %2437 = vmatmul.mubr.f32.gmra.mrb[0].mxu0 %v2150
        %v2438 = vpop.f32.mrb[0].mxu0
        %v2439 = vadd.f32 0.0, %v2438
        %v2440 = vpop.f32.mrb[0].mxu0
        %2441 = vmatprep.mubr.f32.mxu0 %v2197
        %2442 = vmatmul.mubr.f32.gmra.mrb[0].mxu0 %v2152
        %v2443 = vpop.f32.mrb[0].mxu0
        %v2444 = vadd.f32 0.0, %v2443
        %v2445 = vpop.f32.mrb[0].mxu0
        %2446 = vmatprep.mubr.f32.mxu0 %v2200
        %2447 = vmatmul.mubr.f32.gmra.mrb[0].mxu0 %v2154
        %v2448 = vpop.f32.mrb[0].mxu0
        %v2449 = vadd.f32 0.0, %v2448
        %v2450 = vpop.f32.mrb[0].mxu0
        %2451 = vmatprep.mubr.f32.mxu0 %v2203
        %2452 = vmatmul.mubr.f32.gmra.mrb[0].mxu0 %v2156
        %v2453 = vpop.f32.mrb[0].mxu0
        %v2454 = vadd.f32 0.0, %v2453
        %v2455 = vpop.f32.mrb[0].mxu0
        %2456 = vmatprep.mubr.f32.mxu0 %v2206
        %2457 = vmatmul.mubr.f32.gmra.mrb[0].mxu0 %v2158
        %v2458 = vpop.f32.mrb[0].mxu0
        %v2459 = vadd.f32 0.0, %v2458
        %v2460 = vpop.f32.mrb[0].mxu0
        %2461 = vmatprep.mubr.f32.mxu0 %v2209
        %2462 = vmatmul.mubr.f32.gmra.mrb[0].mxu0 %v2160
        %v2463 = vpop.f32.mrb[0].mxu0
        %v2464 = vadd.f32 0.0, %v2463
        %v2465 = vpop.f32.mrb[0].mxu0
        %2466 = vmatprep.mubr.f32.mxu0 %v2212
        %2467 = vmatmul.mubr.f32.gmra.mrb[0].mxu0 %v2162
        %v2468 = vpop.f32.mrb[0].mxu0
        %v2469 = vadd.f32 0.0, %v2468
        %v2470 = vpop.f32.mrb[0].mxu0
        %2471 = vmatprep.mubr.f32.mxu0 %v2215
        %2472 = vmatmul.mubr.f32.gmra.mrb[0].mxu0 %v2164
        %v2473 = vpop.f32.mrb[0].mxu0
        %v2474 = vadd.f32 0.0, %v2473
        %v2475 = vpop.f32.mrb[0].mxu0
        %2476 = vmatprep.mubr.f32.mxu0 %v2218
        %2477 = vmatmul.mubr.f32.gmra.mrb[0].mxu0 %v2166
        %v2478 = vpop.f32.mrb[0].mxu0
        %v2479 = vadd.f32 0.0, %v2478
        %v2480 = vpop.f32.mrb[0].mxu0
        %2481 = vmatprep.mubr.f32.mxu0 %v2221
        %2482 = vmatmul.mubr.f32.gmra.mrb[0].mxu0 %v2168
        %v2483 = vpop.f32.mrb[0].mxu0
        %v2484 = vadd.f32 0.0, %v2483
        %v2485 = vpop.f32.mrb[0].mxu0
        %2486 = vmatprep.mubr.f32.mxu0 %v2224
        %2487 = vmatmul.mubr.f32.gmra.mrb[0].mxu0 %v2170
        %v2488 = vpop.f32.mrb[0].mxu0
        %v2489 = vadd.f32 0.0, %v2488
        %v2490 = vpop.f32.mrb[0].mxu0
        %2491 = vmatprep.mubr.f32.mxu0 %v2227
        %2492 = vmatmul.mubr.f32.gmra.mrb[0].mxu0 %v2172
        %v2493 = vpop.f32.mrb[0].mxu0
        %v2494 = vadd.f32 0.0, %v2493
        %v2495 = vpop.f32.mrb[0].mxu0
        %2496 = vdwg.mxu0
        %v2497 = vmax.f32 %v2296, %v2439
        %v2498 = vmax.f32 %v2301, %v2444
        %v2499 = vmax.f32 %v2306, %v2449
        %v2500 = vmax.f32 %v2311, %v2454
        %v2501 = vmax.f32 %v2316, %v2459
        %v2502 = vmax.f32 %v2321, %v2464
        %v2503 = vmax.f32 %v2326, %v2469
        %v2504 = vmax.f32 %v2331, %v2474
        %v2505 = vmax.f32 %v2336, %v2479
        %v2506 = vmax.f32 %v2341, %v2484
        %v2507 = vmax.f32 %v2346, %v2489
        %v2508 = vmax.f32 %v2351, %v2494
        %v2509 = vld [vmem:[%s5] sm:$0xff]
        %v2510 = vld [vmem:[%s5 + $0x8] sm:$0xff]
        %v2511 = vld [vmem:[%s5 + $0x10] sm:$0xff]
        %v2512 = vld [vmem:[%s5 + $0x18] sm:$0xff]
        %v2513 = vld [vmem:[%s5 + $0x20] sm:$0xff]
        %v2514 = vld [vmem:[%s5 + $0x28] sm:$0xff]
        %v2515 = vld [vmem:[%s5 + $0x30] sm:$0xff]
        %v2516 = vld [vmem:[%s5 + $0x38] sm:$0xff]
        %v2517 = vld [vmem:[%s5 + $0x40] sm:$0xff]
        %s2518 = scalar_lea.vmem %s5, 72
        %v2519 = vld [vmem:[%s2518] sm:$0xff]
        %v2520 = vld [vmem:[%s2518 + $0x8] sm:$0xff]
        %v2521 = vld [vmem:[%s2518 + $0x10] sm:$0xff]
        %v2522 = vld [vmem:[%s2518 + $0x18] sm:$0xff]
        %v2523 = vld [vmem:[%s2518 + $0x20] sm:$0xff]
        %v2524 = vld [vmem:[%s2518 + $0x28] sm:$0xff]
        %v2525 = vld [vmem:[%s2518 + $0x30] sm:$0xff]
        %v2526 = vld [vmem:[%s2518 + $0x38] sm:$0xff]
        %v2527 = vld [vmem:[%s2518 + $0x40] sm:$0xff]
        %vm2528 = vcmask 588800
        %v2530 = vsel %vm2528, %v2498, 0
        %v2533 = vsel %vm2528, %v2499, 0
        %v2536 = vsel %vm2528, %v2500, 0
        %v2539 = vsel %vm2528, %v2501, 0
        %v2542 = vsel %vm2528, %v2502, 0
        %v2545 = vsel %vm2528, %v2503, 0
        %v2548 = vsel %vm2528, %v2504, 0
        %v2551 = vsel %vm2528, %v2505, 0
        %2553 = vmatprep.subr.mxu0 0.0
        %2554 = vmatpush1.msra.mxu0 %v2519
        %2555 = vmatprep.subr.mxu0 0.0
        %2556 = vmatpush1.msra.mxu0 %v2520
        %2557 = vmatprep.subr.mxu0 0.0
        %2558 = vmatpush1.msra.mxu0 %v2521
        %2559 = vmatprep.subr.mxu0 0.0
        %2560 = vmatpush1.msra.mxu0 %v2522
        %2561 = vmatprep.subr.mxu0 0.0
        %2562 = vmatpush1.msra.mxu0 %v2523
        %2563 = vmatprep.subr.mxu0 0.0
        %2564 = vmatpush1.msra.mxu0 %v2524
        %2565 = vmatprep.subr.mxu0 0.0
        %2566 = vmatpush1.msra.mxu0 %v2525
        %2567 = vmatprep.subr.mxu0 0.0
        %2568 = vmatpush1.msra.mxu0 %v2526
        %2569 = vmatprep.subr.mxu0 0.0
        %2570 = vmatpush1.msra.mxu0 %v2527
        %2571 = vmatprep.subr.mxu0 0.0
        %2572 = vmatpush1.msra.mxu0 0.0
        %2573 = vmatprep.subr.mxu0 0.0
        %2574 = vmatpush1.msra.mxu0 0.0
        %2575 = vmatprep.subr.mxu0 0.0
        %2576 = vmatpush1.msra.mxu0 0.0
        %2577 = vmatprep.subr.mxu0 0.0
        %2578 = vmatpush1.msra.mxu0 0.0
        %2579 = vmatprep.subr.mxu0 0.0
        %2580 = vmatpush1.msra.mxu0 0.0
        %2581 = vmatprep.subr.mxu0 0.0
        %2582 = vmatpush1.msra.mxu0 0.0
        %2583 = vmatprep.subr.mxu0 0.0
        %2584 = vmatpush1.msra.mxu0 0.0
        %2585 = vmatprep.subr.mxu0 0.0
        %2586 = vmatpush1.msra.mxu0 0.0
        %2587 = vmatprep.subr.mxu0 0.0
        %2588 = vmatpush1.msra.mxu0 0.0
        %2589 = vmatprep.subr.mxu0 0.0
        %2590 = vmatpush1.msra.mxu0 0.0
        %2591 = vmatprep.subr.mxu0 0.0
        %2592 = vmatpush1.msra.mxu0 0.0
        %2593 = vmatprep.subr.mxu0 0.0
        %2594 = vmatpush1.msra.mxu0 0.0
        %2595 = vmatprep.subr.mxu0 0.0
        %2596 = vmatpush1.msra.mxu0 0.0
        %2597 = vmatprep.subr.mxu0 0.0
        %2598 = vmatpush1.msra.mxu0 0.0
        %2599 = vmatprep.subr.mxu0 0.0
        %2600 = vmatpush1.msra.mxu0 0.0
        %2601 = vmatprep.subr.mxu0 0.0
        %2602 = vmatpush1.msra.mxu0 0.0
        %2603 = vmatprep.subr.mxu0 0.0
        %2604 = vmatpush1.msra.mxu0 0.0
        %2605 = vmatprep.subr.mxu0 0.0
        %2606 = vmatpush1.msra.mxu0 0.0
        %2607 = vmatprep.subr.mxu0 0.0
        %2608 = vmatpush1.msra.mxu0 0.0
        %2609 = vmatprep.subr.mxu0 0.0
        %2610 = vmatpush1.msra.mxu0 0.0
        %2611 = vmatprep.subr.mxu0 0.0
        %2612 = vmatpush1.msra.mxu0 0.0
        %2613 = vmatprep.subr.mxu0 0.0
        %2614 = vmatpush1.msra.mxu0 0.0
        %2615 = vmatprep.subr.mxu0 0.0
        %2616 = vmatpush1.msra.mxu0 0.0
        %2617 = vmatprep.mubr.f32.mxu0 0.0
        %2618 = vmatmul.mubr.f32.gmra.mrb[0].mxu0 %v2530
        %v2619 = vpop.f32.mrb[0].mxu0
        %v2620 = vadd.f32 0.0, %v2619
        %v2621 = vpop.f32.mrb[0].mxu0
        %2622 = vmatprep.mubr.f32.mxu0 0.0
        %2623 = vmatmul.mubr.f32.gmra.mrb[0].mxu0 %v2533
        %v2624 = vpop.f32.mrb[0].mxu0
        %v2625 = vadd.f32 0.0, %v2624
        %v2626 = vpop.f32.mrb[0].mxu0
        %2627 = vmatprep.mubr.f32.mxu0 0.0
        %2628 = vmatmul.mubr.f32.gmra.mrb[0].mxu0 %v2536
        %v2629 = vpop.f32.mrb[0].mxu0
        %v2630 = vadd.f32 0.0, %v2629
        %v2631 = vpop.f32.mrb[0].mxu0
        %2632 = vmatprep.mubr.f32.mxu0 0.0
        %2633 = vmatmul.mubr.f32.gmra.mrb[0].mxu0 %v2539
        %v2634 = vpop.f32.mrb[0].mxu0
        %v2635 = vadd.f32 0.0, %v2634
        %v2636 = vpop.f32.mrb[0].mxu0
        %2637 = vmatprep.mubr.f32.mxu0 0.0
        %2638 = vmatmul.mubr.f32.gmra.mrb[0].mxu0 %v2542
        %v2639 = vpop.f32.mrb[0].mxu0
        %v2640 = vadd.f32 0.0, %v2639
        %v2641 = vpop.f32.mrb[0].mxu0
        %2642 = vmatprep.mubr.f32.mxu0 0.0
        %2643 = vmatmul.mubr.f32.gmra.mrb[0].mxu0 %v2545
        %v2644 = vpop.f32.mrb[0].mxu0
        %v2645 = vadd.f32 0.0, %v2644
        %v2646 = vpop.f32.mrb[0].mxu0
        %2647 = vmatprep.mubr.f32.mxu0 0.0
        %2648 = vmatmul.mubr.f32.gmra.mrb[0].mxu0 %v2548
        %v2649 = vpop.f32.mrb[0].mxu0
        %v2650 = vadd.f32 0.0, %v2649
        %v2651 = vpop.f32.mrb[0].mxu0
        %2652 = vmatprep.mubr.f32.mxu0 0.0
        %2653 = vmatmul.mubr.f32.gmra.mrb[0].mxu0 %v2551
        %v2654 = vpop.f32.mrb[0].mxu0
        %v2655 = vadd.f32 0.0, %v2654
        %v2656 = vpop.f32.mrb[0].mxu0
        %2657 = vdwg.mxu0
        %v2659 = vsel %vm2528, %v2497, 0
        %2661 = vmatprep.subr.mxu0 0.0
        %2662 = vmatpush1.msra.mxu0 %v2509
        %2663 = vmatprep.subr.mxu0 0.0
        %2664 = vmatpush1.msra.mxu0 %v2510
        %2665 = vmatprep.subr.mxu0 0.0
        %2666 = vmatpush1.msra.mxu0 %v2511
        %2667 = vmatprep.subr.mxu0 0.0
        %2668 = vmatpush1.msra.mxu0 %v2512
        %2669 = vmatprep.subr.mxu0 0.0
        %2670 = vmatpush1.msra.mxu0 %v2513
        %2671 = vmatprep.subr.mxu0 0.0
        %2672 = vmatpush1.msra.mxu0 %v2514
        %2673 = vmatprep.subr.mxu0 0.0
        %2674 = vmatpush1.msra.mxu0 %v2515
        %2675 = vmatprep.subr.mxu0 0.0
        %2676 = vmatpush1.msra.mxu0 %v2516
        %2677 = vmatprep.subr.mxu0 0.0
        %2678 = vmatpush1.msra.mxu0 %v2517
        %2679 = vmatprep.subr.mxu0 0.0
        %2680 = vmatpush1.msra.mxu0 0.0
        %2681 = vmatprep.subr.mxu0 0.0
        %2682 = vmatpush1.msra.mxu0 0.0
        %2683 = vmatprep.subr.mxu0 0.0
        %2684 = vmatpush1.msra.mxu0 0.0
        %2685 = vmatprep.subr.mxu0 0.0
        %2686 = vmatpush1.msra.mxu0 0.0
        %2687 = vmatprep.subr.mxu0 0.0
        %2688 = vmatpush1.msra.mxu0 0.0
        %2689 = vmatprep.subr.mxu0 0.0
        %2690 = vmatpush1.msra.mxu0 0.0
        %2691 = vmatprep.subr.mxu0 0.0
        %2692 = vmatpush1.msra.mxu0 0.0
        %2693 = vmatprep.subr.mxu0 0.0
        %2694 = vmatpush1.msra.mxu0 0.0
        %2695 = vmatprep.subr.mxu0 0.0
        %2696 = vmatpush1.msra.mxu0 0.0
        %2697 = vmatprep.subr.mxu0 0.0
        %2698 = vmatpush1.msra.mxu0 0.0
        %2699 = vmatprep.subr.mxu0 0.0
        %2700 = vmatpush1.msra.mxu0 0.0
        %2701 = vmatprep.subr.mxu0 0.0
        %2702 = vmatpush1.msra.mxu0 0.0
        %2703 = vmatprep.subr.mxu0 0.0
        %2704 = vmatpush1.msra.mxu0 0.0
        %2705 = vmatprep.subr.mxu0 0.0
        %2706 = vmatpush1.msra.mxu0 0.0
        %2707 = vmatprep.subr.mxu0 0.0
        %2708 = vmatpush1.msra.mxu0 0.0
        %2709 = vmatprep.subr.mxu0 0.0
        %2710 = vmatpush1.msra.mxu0 0.0
        %2711 = vmatprep.subr.mxu0 0.0
        %2712 = vmatpush1.msra.mxu0 0.0
        %2713 = vmatprep.subr.mxu0 0.0
        %2714 = vmatpush1.msra.mxu0 0.0
        %2715 = vmatprep.subr.mxu0 0.0
        %2716 = vmatpush1.msra.mxu0 0.0
        %2717 = vmatprep.subr.mxu0 0.0
        %2718 = vmatpush1.msra.mxu0 0.0
        %2719 = vmatprep.subr.mxu0 0.0
        %2720 = vmatpush1.msra.mxu0 0.0
        %2721 = vmatprep.subr.mxu0 0.0
        %2722 = vmatpush1.msra.mxu0 0.0
        %2723 = vmatprep.subr.mxu0 0.0
        %2724 = vmatpush1.msra.mxu0 0.0
        %2725 = vmatprep.mubr.f32.mxu0 0.0
        %2726 = vmatmul.mubr.f32.gmra.mrb[0].mxu0 %v2659
        %v2727 = vpop.f32.mrb[0].mxu0
        %v2728 = vadd.f32 %v2620, %v2727
        %v2729 = vpop.f32.mrb[0].mxu0
        %2730 = vmatprep.mubr.f32.mxu0 0.0
        %2731 = vmatmul.mubr.f32.gmra.mrb[0].mxu0 %v2530
        %v2732 = vpop.f32.mrb[0].mxu0
        %v2733 = vadd.f32 %v2625, %v2732
        %v2734 = vpop.f32.mrb[0].mxu0
        %2735 = vmatprep.mubr.f32.mxu0 0.0
        %2736 = vmatmul.mubr.f32.gmra.mrb[0].mxu0 %v2533
        %v2737 = vpop.f32.mrb[0].mxu0
        %v2738 = vadd.f32 %v2630, %v2737
        %v2739 = vpop.f32.mrb[0].mxu0
        %2740 = vmatprep.mubr.f32.mxu0 0.0
        %2741 = vmatmul.mubr.f32.gmra.mrb[0].mxu0 %v2536
        %v2742 = vpop.f32.mrb[0].mxu0
        %v2743 = vadd.f32 %v2635, %v2742
        %v2744 = vpop.f32.mrb[0].mxu0
        %2745 = vmatprep.mubr.f32.mxu0 0.0
        %2746 = vmatmul.mubr.f32.gmra.mrb[0].mxu0 %v2539
        %v2747 = vpop.f32.mrb[0].mxu0
        %v2748 = vadd.f32 %v2640, %v2747
        %v2749 = vpop.f32.mrb[0].mxu0
        %2750 = vmatprep.mubr.f32.mxu0 0.0
        %2751 = vmatmul.mubr.f32.gmra.mrb[0].mxu0 %v2542
        %v2752 = vpop.f32.mrb[0].mxu0
        %v2753 = vadd.f32 %v2645, %v2752
        %v2754 = vpop.f32.mrb[0].mxu0
        %2755 = vmatprep.mubr.f32.mxu0 0.0
        %2756 = vmatmul.mubr.f32.gmra.mrb[0].mxu0 %v2545
        %v2757 = vpop.f32.mrb[0].mxu0
        %v2758 = vadd.f32 %v2650, %v2757
        %v2759 = vpop.f32.mrb[0].mxu0
        %2760 = vmatprep.mubr.f32.mxu0 0.0
        %2761 = vmatmul.mubr.f32.gmra.mrb[0].mxu0 %v2548
        %v2762 = vpop.f32.mrb[0].mxu0
        %v2763 = vadd.f32 %v2655, %v2762
        %v2764 = vpop.f32.mrb[0].mxu0
        %2765 = vdwg.mxu0
        %s2766 = scalar_lea.vmem %s5, 144
        %v2767 = vld [vmem:[%s2766] sm:$0xff]
        %v2768 = vld [vmem:[%s2766 + $0x8] sm:$0xff]
        %v2769 = vld [vmem:[%s2766 + $0x10] sm:$0xff]
        %v2770 = vld [vmem:[%s2766 + $0x18] sm:$0xff]
        %v2771 = vld [vmem:[%s2766 + $0x20] sm:$0xff]
        %v2772 = vld [vmem:[%s2766 + $0x28] sm:$0xff]
        %v2773 = vld [vmem:[%s2766 + $0x30] sm:$0xff]
        %v2774 = vld [vmem:[%s2766 + $0x38] sm:$0xff]
        %v2775 = vld [vmem:[%s2766 + $0x40] sm:$0xff]
        %v2777 = vsel %vm2528, %v2506, 0
        %2779 = vmatprep.subr.mxu0 0.0
        %2780 = vmatpush1.msra.mxu0 %v2767
        %2781 = vmatprep.subr.mxu0 0.0
        %2782 = vmatpush1.msra.mxu0 %v2768
        %2783 = vmatprep.subr.mxu0 0.0
        %2784 = vmatpush1.msra.mxu0 %v2769
        %2785 = vmatprep.subr.mxu0 0.0
        %2786 = vmatpush1.msra.mxu0 %v2770
        %2787 = vmatprep.subr.mxu0 0.0
        %2788 = vmatpush1.msra.mxu0 %v2771
        %2789 = vmatprep.subr.mxu0 0.0
        %2790 = vmatpush1.msra.mxu0 %v2772
        %2791 = vmatprep.subr.mxu0 0.0
        %2792 = vmatpush1.msra.mxu0 %v2773
        %2793 = vmatprep.subr.mxu0 0.0
        %2794 = vmatpush1.msra.mxu0 %v2774
        %2795 = vmatprep.subr.mxu0 0.0
        %2796 = vmatpush1.msra.mxu0 %v2775
        %2797 = vmatprep.subr.mxu0 0.0
        %2798 = vmatpush1.msra.mxu0 0.0
        %2799 = vmatprep.subr.mxu0 0.0
        %2800 = vmatpush1.msra.mxu0 0.0
        %2801 = vmatprep.subr.mxu0 0.0
        %2802 = vmatpush1.msra.mxu0 0.0
        %2803 = vmatprep.subr.mxu0 0.0
        %2804 = vmatpush1.msra.mxu0 0.0
        %2805 = vmatprep.subr.mxu0 0.0
        %2806 = vmatpush1.msra.mxu0 0.0
        %2807 = vmatprep.subr.mxu0 0.0
        %2808 = vmatpush1.msra.mxu0 0.0
        %2809 = vmatprep.subr.mxu0 0.0
        %2810 = vmatpush1.msra.mxu0 0.0
        %2811 = vmatprep.subr.mxu0 0.0
        %2812 = vmatpush1.msra.mxu0 0.0
        %2813 = vmatprep.subr.mxu0 0.0
        %2814 = vmatpush1.msra.mxu0 0.0
        %2815 = vmatprep.subr.mxu0 0.0
        %2816 = vmatpush1.msra.mxu0 0.0
        %2817 = vmatprep.subr.mxu0 0.0
        %2818 = vmatpush1.msra.mxu0 0.0
        %2819 = vmatprep.subr.mxu0 0.0
        %2820 = vmatpush1.msra.mxu0 0.0
        %2821 = vmatprep.subr.mxu0 0.0
        %2822 = vmatpush1.msra.mxu0 0.0
        %2823 = vmatprep.subr.mxu0 0.0
        %2824 = vmatpush1.msra.mxu0 0.0
        %2825 = vmatprep.subr.mxu0 0.0
        %2826 = vmatpush1.msra.mxu0 0.0
        %2827 = vmatprep.subr.mxu0 0.0
        %2828 = vmatpush1.msra.mxu0 0.0
        %2829 = vmatprep.subr.mxu0 0.0
        %2830 = vmatpush1.msra.mxu0 0.0
        %2831 = vmatprep.subr.mxu0 0.0
        %2832 = vmatpush1.msra.mxu0 0.0
        %2833 = vmatprep.subr.mxu0 0.0
        %2834 = vmatpush1.msra.mxu0 0.0
        %2835 = vmatprep.subr.mxu0 0.0
        %2836 = vmatpush1.msra.mxu0 0.0
        %2837 = vmatprep.subr.mxu0 0.0
        %2838 = vmatpush1.msra.mxu0 0.0
        %2839 = vmatprep.subr.mxu0 0.0
        %2840 = vmatpush1.msra.mxu0 0.0
        %2841 = vmatprep.subr.mxu0 0.0
        %2842 = vmatpush1.msra.mxu0 0.0
        %2843 = vmatprep.mubr.f32.mxu0 0.0
        %2844 = vmatmul.mubr.f32.gmra.mrb[0].mxu0 %v2533
        %v2845 = vpop.f32.mrb[0].mxu0
        %v2846 = vadd.f32 0.0, %v2845
        %v2847 = vpop.f32.mrb[0].mxu0
        %2848 = vmatprep.mubr.f32.mxu0 0.0
        %2849 = vmatmul.mubr.f32.gmra.mrb[0].mxu0 %v2536
        %v2850 = vpop.f32.mrb[0].mxu0
        %v2851 = vadd.f32 0.0, %v2850
        %v2852 = vpop.f32.mrb[0].mxu0
        %2853 = vmatprep.mubr.f32.mxu0 0.0
        %2854 = vmatmul.mubr.f32.gmra.mrb[0].mxu0 %v2539
        %v2855 = vpop.f32.mrb[0].mxu0
        %v2856 = vadd.f32 0.0, %v2855
        %v2857 = vpop.f32.mrb[0].mxu0
        %2858 = vmatprep.mubr.f32.mxu0 0.0
        %2859 = vmatmul.mubr.f32.gmra.mrb[0].mxu0 %v2542
        %v2860 = vpop.f32.mrb[0].mxu0
        %v2861 = vadd.f32 0.0, %v2860
        %v2862 = vpop.f32.mrb[0].mxu0
        %2863 = vmatprep.mubr.f32.mxu0 0.0
        %2864 = vmatmul.mubr.f32.gmra.mrb[0].mxu0 %v2545
        %v2865 = vpop.f32.mrb[0].mxu0
        %v2866 = vadd.f32 0.0, %v2865
        %v2867 = vpop.f32.mrb[0].mxu0
        %2868 = vmatprep.mubr.f32.mxu0 0.0
        %2869 = vmatmul.mubr.f32.gmra.mrb[0].mxu0 %v2548
        %v2870 = vpop.f32.mrb[0].mxu0
        %v2871 = vadd.f32 0.0, %v2870
        %v2872 = vpop.f32.mrb[0].mxu0
        %2873 = vmatprep.mubr.f32.mxu0 0.0
        %2874 = vmatmul.mubr.f32.gmra.mrb[0].mxu0 %v2551
        %v2875 = vpop.f32.mrb[0].mxu0
        %v2876 = vadd.f32 0.0, %v2875
        %v2877 = vpop.f32.mrb[0].mxu0
        %2878 = vmatprep.mubr.f32.mxu0 0.0
        %2879 = vmatmul.mubr.f32.gmra.mrb[0].mxu0 %v2777
        %v2880 = vpop.f32.mrb[0].mxu0
        %v2881 = vadd.f32 0.0, %v2880
        %v2882 = vpop.f32.mrb[0].mxu0
        %2883 = vdwg.mxu0
        %v2884 = vadd.f32 %v2728, %v2846
        %v2885 = vadd.f32 %v2733, %v2851
        %v2886 = vadd.f32 %v2738, %v2856
        %v2887 = vadd.f32 %v2743, %v2861
        %v2888 = vadd.f32 %v2748, %v2866
        %v2889 = vadd.f32 %v2753, %v2871
        %v2890 = vadd.f32 %v2758, %v2876
        %v2891 = vadd.f32 %v2763, %v2881
        %s2892 = scalar_lea.vmem %s5, 216
        %v2893 = vld [vmem:[%s2892] sm:$0xff]
        %v2894 = vld [vmem:[%s2892 + $0x8] sm:$0xff]
        %v2895 = vld [vmem:[%s2892 + $0x10] sm:$0xff]
        %v2896 = vld [vmem:[%s2892 + $0x18] sm:$0xff]
        %v2897 = vld [vmem:[%s2892 + $0x20] sm:$0xff]
        %v2898 = vld [vmem:[%s2892 + $0x28] sm:$0xff]
        %v2899 = vld [vmem:[%s2892 + $0x30] sm:$0xff]
        %v2900 = vld [vmem:[%s2892 + $0x38] sm:$0xff]
        %v2901 = vld [vmem:[%s2892 + $0x40] sm:$0xff]
        %v2903 = vsel %vm2528, %v2507, 0
        %2905 = vmatprep.subr.mxu0 0.0
        %2906 = vmatpush1.msra.mxu0 %v2893
        %2907 = vmatprep.subr.mxu0 0.0
        %2908 = vmatpush1.msra.mxu0 %v2894
        %2909 = vmatprep.subr.mxu0 0.0
        %2910 = vmatpush1.msra.mxu0 %v2895
        %2911 = vmatprep.subr.mxu0 0.0
        %2912 = vmatpush1.msra.mxu0 %v2896
        %2913 = vmatprep.subr.mxu0 0.0
        %2914 = vmatpush1.msra.mxu0 %v2897
        %2915 = vmatprep.subr.mxu0 0.0
        %2916 = vmatpush1.msra.mxu0 %v2898
        %2917 = vmatprep.subr.mxu0 0.0
        %2918 = vmatpush1.msra.mxu0 %v2899
        %2919 = vmatprep.subr.mxu0 0.0
        %2920 = vmatpush1.msra.mxu0 %v2900
        %2921 = vmatprep.subr.mxu0 0.0
        %2922 = vmatpush1.msra.mxu0 %v2901
        %2923 = vmatprep.subr.mxu0 0.0
        %2924 = vmatpush1.msra.mxu0 0.0
        %2925 = vmatprep.subr.mxu0 0.0
        %2926 = vmatpush1.msra.mxu0 0.0
        %2927 = vmatprep.subr.mxu0 0.0
        %2928 = vmatpush1.msra.mxu0 0.0
        %2929 = vmatprep.subr.mxu0 0.0
        %2930 = vmatpush1.msra.mxu0 0.0
        %2931 = vmatprep.subr.mxu0 0.0
        %2932 = vmatpush1.msra.mxu0 0.0
        %2933 = vmatprep.subr.mxu0 0.0
        %2934 = vmatpush1.msra.mxu0 0.0
        %2935 = vmatprep.subr.mxu0 0.0
        %2936 = vmatpush1.msra.mxu0 0.0
        %2937 = vmatprep.subr.mxu0 0.0
        %2938 = vmatpush1.msra.mxu0 0.0
        %2939 = vmatprep.subr.mxu0 0.0
        %2940 = vmatpush1.msra.mxu0 0.0
        %2941 = vmatprep.subr.mxu0 0.0
        %2942 = vmatpush1.msra.mxu0 0.0
        %2943 = vmatprep.subr.mxu0 0.0
        %2944 = vmatpush1.msra.mxu0 0.0
        %2945 = vmatprep.subr.mxu0 0.0
        %2946 = vmatpush1.msra.mxu0 0.0
        %2947 = vmatprep.subr.mxu0 0.0
        %2948 = vmatpush1.msra.mxu0 0.0
        %2949 = vmatprep.subr.mxu0 0.0
        %2950 = vmatpush1.msra.mxu0 0.0
        %2951 = vmatprep.subr.mxu0 0.0
        %2952 = vmatpush1.msra.mxu0 0.0
        %2953 = vmatprep.subr.mxu0 0.0
        %2954 = vmatpush1.msra.mxu0 0.0
        %2955 = vmatprep.subr.mxu0 0.0
        %2956 = vmatpush1.msra.mxu0 0.0
        %2957 = vmatprep.subr.mxu0 0.0
        %2958 = vmatpush1.msra.mxu0 0.0
        %2959 = vmatprep.subr.mxu0 0.0
        %2960 = vmatpush1.msra.mxu0 0.0
        %2961 = vmatprep.subr.mxu0 0.0
        %2962 = vmatpush1.msra.mxu0 0.0
        %2963 = vmatprep.subr.mxu0 0.0
        %2964 = vmatpush1.msra.mxu0 0.0
        %2965 = vmatprep.subr.mxu0 0.0
        %2966 = vmatpush1.msra.mxu0 0.0
        %2967 = vmatprep.subr.mxu0 0.0
        %2968 = vmatpush1.msra.mxu0 0.0
        %2969 = vmatprep.mubr.f32.mxu0 0.0
        %2970 = vmatmul.mubr.f32.gmra.mrb[0].mxu0 %v2536
        %v2971 = vpop.f32.mrb[0].mxu0
        %v2972 = vadd.f32 0.0, %v2971
        %v2973 = vpop.f32.mrb[0].mxu0
        %2974 = vmatprep.mubr.f32.mxu0 0.0
        %2975 = vmatmul.mubr.f32.gmra.mrb[0].mxu0 %v2539
        %v2976 = vpop.f32.mrb[0].mxu0
        %v2977 = vadd.f32 0.0, %v2976
        %v2978 = vpop.f32.mrb[0].mxu0
        %2979 = vmatprep.mubr.f32.mxu0 0.0
        %2980 = vmatmul.mubr.f32.gmra.mrb[0].mxu0 %v2542
        %v2981 = vpop.f32.mrb[0].mxu0
        %v2982 = vadd.f32 0.0, %v2981
        %v2983 = vpop.f32.mrb[0].mxu0
        %2984 = vmatprep.mubr.f32.mxu0 0.0
        %2985 = vmatmul.mubr.f32.gmra.mrb[0].mxu0 %v2545
        %v2986 = vpop.f32.mrb[0].mxu0
        %v2987 = vadd.f32 0.0, %v2986
        %v2988 = vpop.f32.mrb[0].mxu0
        %2989 = vmatprep.mubr.f32.mxu0 0.0
        %2990 = vmatmul.mubr.f32.gmra.mrb[0].mxu0 %v2548
        %v2991 = vpop.f32.mrb[0].mxu0
        %v2992 = vadd.f32 0.0, %v2991
        %v2993 = vpop.f32.mrb[0].mxu0
        %2994 = vmatprep.mubr.f32.mxu0 0.0
        %2995 = vmatmul.mubr.f32.gmra.mrb[0].mxu0 %v2551
        %v2996 = vpop.f32.mrb[0].mxu0
        %v2997 = vadd.f32 0.0, %v2996
        %v2998 = vpop.f32.mrb[0].mxu0
        %2999 = vmatprep.mubr.f32.mxu0 0.0
        %3000 = vmatmul.mubr.f32.gmra.mrb[0].mxu0 %v2777
        %v3001 = vpop.f32.mrb[0].mxu0
        %v3002 = vadd.f32 0.0, %v3001
        %v3003 = vpop.f32.mrb[0].mxu0
        %3004 = vmatprep.mubr.f32.mxu0 0.0
        %3005 = vmatmul.mubr.f32.gmra.mrb[0].mxu0 %v2903
        %v3006 = vpop.f32.mrb[0].mxu0
        %v3007 = vadd.f32 0.0, %v3006
        %v3008 = vpop.f32.mrb[0].mxu0
        %3009 = vdwg.mxu0
        %v3010 = vadd.f32 %v2884, %v2972
        %v3011 = vadd.f32 %v2885, %v2977
        %v3012 = vadd.f32 %v2886, %v2982
        %v3013 = vadd.f32 %v2887, %v2987
        %v3014 = vadd.f32 %v2888, %v2992
        %v3015 = vadd.f32 %v2889, %v2997
        %v3016 = vadd.f32 %v2890, %v3002
        %v3017 = vadd.f32 %v2891, %v3007
        %s3018 = scalar_lea.vmem %s5, 288
        %v3019 = vld [vmem:[%s3018] sm:$0xff]
        %v3020 = vld [vmem:[%s3018 + $0x8] sm:$0xff]
        %v3021 = vld [vmem:[%s3018 + $0x10] sm:$0xff]
        %v3022 = vld [vmem:[%s3018 + $0x18] sm:$0xff]
        %v3023 = vld [vmem:[%s3018 + $0x20] sm:$0xff]
        %v3024 = vld [vmem:[%s3018 + $0x28] sm:$0xff]
        %v3025 = vld [vmem:[%s3018 + $0x30] sm:$0xff]
        %v3026 = vld [vmem:[%s3018 + $0x38] sm:$0xff]
        %v3027 = vld [vmem:[%s3018 + $0x40] sm:$0xff]
        %v3029 = vsel %vm2528, %v2508, 0
        %3031 = vmatprep.subr.mxu0 0.0
        %3032 = vmatpush1.msra.mxu0 %v3019
        %3033 = vmatprep.subr.mxu0 0.0
        %3034 = vmatpush1.msra.mxu0 %v3020
        %3035 = vmatprep.subr.mxu0 0.0
        %3036 = vmatpush1.msra.mxu0 %v3021
        %3037 = vmatprep.subr.mxu0 0.0
        %3038 = vmatpush1.msra.mxu0 %v3022
        %3039 = vmatprep.subr.mxu0 0.0
        %3040 = vmatpush1.msra.mxu0 %v3023
        %3041 = vmatprep.subr.mxu0 0.0
        %3042 = vmatpush1.msra.mxu0 %v3024
        %3043 = vmatprep.subr.mxu0 0.0
        %3044 = vmatpush1.msra.mxu0 %v3025
        %3045 = vmatprep.subr.mxu0 0.0
        %3046 = vmatpush1.msra.mxu0 %v3026
        %3047 = vmatprep.subr.mxu0 0.0
        %3048 = vmatpush1.msra.mxu0 %v3027
        %3049 = vmatprep.subr.mxu0 0.0
        %3050 = vmatpush1.msra.mxu0 0.0
        %3051 = vmatprep.subr.mxu0 0.0
        %3052 = vmatpush1.msra.mxu0 0.0
        %3053 = vmatprep.subr.mxu0 0.0
        %3054 = vmatpush1.msra.mxu0 0.0
        %3055 = vmatprep.subr.mxu0 0.0
        %3056 = vmatpush1.msra.mxu0 0.0
        %3057 = vmatprep.subr.mxu0 0.0
        %3058 = vmatpush1.msra.mxu0 0.0
        %3059 = vmatprep.subr.mxu0 0.0
        %3060 = vmatpush1.msra.mxu0 0.0
        %3061 = vmatprep.subr.mxu0 0.0
        %3062 = vmatpush1.msra.mxu0 0.0
        %3063 = vmatprep.subr.mxu0 0.0
        %3064 = vmatpush1.msra.mxu0 0.0
        %3065 = vmatprep.subr.mxu0 0.0
        %3066 = vmatpush1.msra.mxu0 0.0
        %3067 = vmatprep.subr.mxu0 0.0
        %3068 = vmatpush1.msra.mxu0 0.0
        %3069 = vmatprep.subr.mxu0 0.0
        %3070 = vmatpush1.msra.mxu0 0.0
        %3071 = vmatprep.subr.mxu0 0.0
        %3072 = vmatpush1.msra.mxu0 0.0
        %3073 = vmatprep.subr.mxu0 0.0
        %3074 = vmatpush1.msra.mxu0 0.0
        %3075 = vmatprep.subr.mxu0 0.0
        %3076 = vmatpush1.msra.mxu0 0.0
        %3077 = vmatprep.subr.mxu0 0.0
        %3078 = vmatpush1.msra.mxu0 0.0
        %3079 = vmatprep.subr.mxu0 0.0
        %3080 = vmatpush1.msra.mxu0 0.0
        %3081 = vmatprep.subr.mxu0 0.0
        %3082 = vmatpush1.msra.mxu0 0.0
        %3083 = vmatprep.subr.mxu0 0.0
        %3084 = vmatpush1.msra.mxu0 0.0
        %3085 = vmatprep.subr.mxu0 0.0
        %3086 = vmatpush1.msra.mxu0 0.0
        %3087 = vmatprep.subr.mxu0 0.0
        %3088 = vmatpush1.msra.mxu0 0.0
        %3089 = vmatprep.subr.mxu0 0.0
        %3090 = vmatpush1.msra.mxu0 0.0
        %3091 = vmatprep.subr.mxu0 0.0
        %3092 = vmatpush1.msra.mxu0 0.0
        %3093 = vmatprep.subr.mxu0 0.0
        %3094 = vmatpush1.msra.mxu0 0.0
        %3095 = vmatprep.mubr.f32.mxu0 0.0
        %3096 = vmatmul.mubr.f32.gmra.mrb[0].mxu0 %v2539
        %v3097 = vpop.f32.mrb[0].mxu0
        %v3098 = vadd.f32 0.0, %v3097
        %v3099 = vpop.f32.mrb[0].mxu0
        %3100 = vmatprep.mubr.f32.mxu0 0.0
        %3101 = vmatmul.mubr.f32.gmra.mrb[0].mxu0 %v2542
        %v3102 = vpop.f32.mrb[0].mxu0
        %v3103 = vadd.f32 0.0, %v3102
        %v3104 = vpop.f32.mrb[0].mxu0
        %3105 = vmatprep.mubr.f32.mxu0 0.0
        %3106 = vmatmul.mubr.f32.gmra.mrb[0].mxu0 %v2545
        %v3107 = vpop.f32.mrb[0].mxu0
        %v3108 = vadd.f32 0.0, %v3107
        %v3109 = vpop.f32.mrb[0].mxu0
        %3110 = vmatprep.mubr.f32.mxu0 0.0
        %3111 = vmatmul.mubr.f32.gmra.mrb[0].mxu0 %v2548
        %v3112 = vpop.f32.mrb[0].mxu0
        %v3113 = vadd.f32 0.0, %v3112
        %v3114 = vpop.f32.mrb[0].mxu0
        %3115 = vmatprep.mubr.f32.mxu0 0.0
        %3116 = vmatmul.mubr.f32.gmra.mrb[0].mxu0 %v2551
        %v3117 = vpop.f32.mrb[0].mxu0
        %v3118 = vadd.f32 0.0, %v3117
        %v3119 = vpop.f32.mrb[0].mxu0
        %3120 = vmatprep.mubr.f32.mxu0 0.0
        %3121 = vmatmul.mubr.f32.gmra.mrb[0].mxu0 %v2777
        %v3122 = vpop.f32.mrb[0].mxu0
        %v3123 = vadd.f32 0.0, %v3122
        %v3124 = vpop.f32.mrb[0].mxu0
        %3125 = vmatprep.mubr.f32.mxu0 0.0
        %3126 = vmatmul.mubr.f32.gmra.mrb[0].mxu0 %v2903
        %v3127 = vpop.f32.mrb[0].mxu0
        %v3128 = vadd.f32 0.0, %v3127
        %v3129 = vpop.f32.mrb[0].mxu0
        %3130 = vmatprep.mubr.f32.mxu0 0.0
        %3131 = vmatmul.mubr.f32.gmra.mrb[0].mxu0 %v3029
        %v3132 = vpop.f32.mrb[0].mxu0
        %v3133 = vadd.f32 0.0, %v3132
        %v3134 = vpop.f32.mrb[0].mxu0
        %3135 = vdwg.mxu0
        %v3136 = vadd.f32 %v3010, %v3098
        %v3137 = vadd.f32 %v3011, %v3103
        %v3138 = vadd.f32 %v3012, %v3108
        %v3139 = vadd.f32 %v3013, %v3113
        %v3140 = vadd.f32 %v3014, %v3118
        %v3141 = vadd.f32 %v3015, %v3123
        %v3142 = vadd.f32 %v3016, %v3128
        %v3143 = vadd.f32 %v3017, %v3133
        %v3144 = vld [vmem:[%s6] sm:$0x1]
        %v3146 = vlaneseq
        %v3147 = vshrl.u32 %v3146, 7
        %v3148 = vsub.s32 0, %v3147
        %v3149 = vrot.slane %v3144, %v3148
        %v3151 = vadd.f32 %v3136, %v3149
        %v3152 = vadd.f32 %v3137, %v3149
        %v3153 = vadd.f32 %v3138, %v3149
        %v3154 = vadd.f32 %v3139, %v3149
        %v3155 = vadd.f32 %v3140, %v3149
        %v3156 = vadd.f32 %v3141, %v3149
        %v3157 = vadd.f32 %v3142, %v3149
        %v3158 = vadd.f32 %v3143, %v3149
        %v3159 = vmax.f32 %v3151, 0.0
        %v3160 = vmax.f32 %v3152, 0.0
        %v3161 = vmax.f32 %v3153, 0.0
        %v3162 = vmax.f32 %v3154, 0.0
        %v3163 = vmax.f32 %v3155, 0.0
        %v3164 = vmax.f32 %v3156, 0.0
        %v3165 = vmax.f32 %v3157, 0.0
        %v3166 = vmax.f32 %v3158, 0.0
        %v3167 = vmax.f32 %v3159, %v3160
        %v3168 = vmax.f32 %v3161, %v3162
        %v3169 = vmax.f32 %v3163, %v3164
        %v3170 = vmax.f32 %v3165, %v3166
        %v3171 = vld [vmem:[%s7] sm:$0xff]
        %v3172 = vld [vmem:[%s7 + $0x8] sm:$0xff]
        %v3173 = vld [vmem:[%s7 + $0x10] sm:$0xff]
        %v3174 = vld [vmem:[%s7 + $0x18] sm:$0xff]
        %v3175 = vld [vmem:[%s7 + $0x20] sm:$0xff]
        %v3176 = vld [vmem:[%s7 + $0x28] sm:$0xff]
        %v3177 = vld [vmem:[%s7 + $0x30] sm:$0xff]
        %v3178 = vld [vmem:[%s7 + $0x38] sm:$0xff]
        %v3179 = vld [vmem:[%s7 + $0x40] sm:$0xff]
        %v3180 = vld [vmem:[%s7 + $0x48] sm:$0xff]
        %v3181 = vld [vmem:[%s7 + $0x50] sm:$0xff]
        %v3182 = vld [vmem:[%s7 + $0x58] sm:$0xff]
        %v3183 = vld [vmem:[%s7 + $0x60] sm:$0xff]
        %v3184 = vld [vmem:[%s7 + $0x68] sm:$0xff]
        %v3185 = vld [vmem:[%s7 + $0x70] sm:$0xff]
        %v3186 = vld [vmem:[%s7 + $0x78] sm:$0xff]
        %3187 = vmatprep.subr.mxu0 0.0
        %3188 = vmatpush1.msra.mxu0 %v3171
        %3189 = vmatprep.subr.mxu0 0.0
        %3190 = vmatpush1.msra.mxu0 %v3172
        %3191 = vmatprep.subr.mxu0 0.0
        %3192 = vmatpush1.msra.mxu0 %v3173
        %3193 = vmatprep.subr.mxu0 0.0
        %3194 = vmatpush1.msra.mxu0 %v3174
        %3195 = vmatprep.subr.mxu0 0.0
        %3196 = vmatpush1.msra.mxu0 %v3175
        %3197 = vmatprep.subr.mxu0 0.0
        %3198 = vmatpush1.msra.mxu0 %v3176
        %3199 = vmatprep.subr.mxu0 0.0
        %3200 = vmatpush1.msra.mxu0 %v3177
        %3201 = vmatprep.subr.mxu0 0.0
        %3202 = vmatpush1.msra.mxu0 %v3178
        %3203 = vmatprep.subr.mxu0 0.0
        %3204 = vmatpush1.msra.mxu0 %v3179
        %3205 = vmatprep.subr.mxu0 0.0
        %3206 = vmatpush1.msra.mxu0 %v3180
        %3207 = vmatprep.subr.mxu0 0.0
        %3208 = vmatpush1.msra.mxu0 %v3181
        %3209 = vmatprep.subr.mxu0 0.0
        %3210 = vmatpush1.msra.mxu0 %v3182
        %3211 = vmatprep.subr.mxu0 0.0
        %3212 = vmatpush1.msra.mxu0 %v3183
        %3213 = vmatprep.subr.mxu0 0.0
        %3214 = vmatpush1.msra.mxu0 %v3184
        %3215 = vmatprep.subr.mxu0 0.0
        %3216 = vmatpush1.msra.mxu0 %v3185
        %3217 = vmatprep.subr.mxu0 0.0
        %3218 = vmatpush1.msra.mxu0 %v3186
        %3219 = vmatprep.subr.mxu0 0.0
        %3220 = vmatpush1.msra.mxu0 0.0
        %3221 = vmatprep.subr.mxu0 0.0
        %3222 = vmatpush1.msra.mxu0 0.0
        %3223 = vmatprep.subr.mxu0 0.0
        %3224 = vmatpush1.msra.mxu0 0.0
        %3225 = vmatprep.subr.mxu0 0.0
        %3226 = vmatpush1.msra.mxu0 0.0
        %3227 = vmatprep.subr.mxu0 0.0
        %3228 = vmatpush1.msra.mxu0 0.0
        %3229 = vmatprep.subr.mxu0 0.0
        %3230 = vmatpush1.msra.mxu0 0.0
        %3231 = vmatprep.subr.mxu0 0.0
        %3232 = vmatpush1.msra.mxu0 0.0
        %3233 = vmatprep.subr.mxu0 0.0
        %3234 = vmatpush1.msra.mxu0 0.0
        %3235 = vmatprep.subr.mxu0 0.0
        %3236 = vmatpush1.msra.mxu0 0.0
        %3237 = vmatprep.subr.mxu0 0.0
        %3238 = vmatpush1.msra.mxu0 0.0
        %3239 = vmatprep.subr.mxu0 0.0
        %3240 = vmatpush1.msra.mxu0 0.0
        %3241 = vmatprep.subr.mxu0 0.0
        %3242 = vmatpush1.msra.mxu0 0.0
        %3243 = vmatprep.subr.mxu0 0.0
        %3244 = vmatpush1.msra.mxu0 0.0
        %3245 = vmatprep.subr.mxu0 0.0
        %3246 = vmatpush1.msra.mxu0 0.0
        %3247 = vmatprep.subr.mxu0 0.0
        %3248 = vmatpush1.msra.mxu0 0.0
        %3249 = vmatprep.subr.mxu0 0.0
        %3250 = vmatpush1.msra.mxu0 0.0
        %3251 = vmatprep.mubr.f32.mxu0 0.0
        %3252 = vmatmul.mubr.f32.gmra.mrb[0].mxu0 %v3167
        %v3253 = vpop.f32.mrb[0].mxu0
        %v3254 = vadd.f32 0.0, %v3253
        %v3255 = vpop.f32.mrb[0].mxu0
        %3256 = vmatprep.mubr.f32.mxu0 0.0
        %3257 = vmatmul.mubr.f32.gmra.mrb[0].mxu0 %v3168
        %v3258 = vpop.f32.mrb[0].mxu0
        %v3259 = vadd.f32 0.0, %v3258
        %v3260 = vpop.f32.mrb[0].mxu0
        %3261 = vmatprep.mubr.f32.mxu0 0.0
        %3262 = vmatmul.mubr.f32.gmra.mrb[0].mxu0 %v3169
        %v3263 = vpop.f32.mrb[0].mxu0
        %v3264 = vadd.f32 0.0, %v3263
        %v3265 = vpop.f32.mrb[0].mxu0
        %3266 = vmatprep.mubr.f32.mxu0 0.0
        %3267 = vmatmul.mubr.f32.gmra.mrb[0].mxu0 %v3170
        %v3268 = vpop.f32.mrb[0].mxu0
        %v3269 = vadd.f32 0.0, %v3268
        %v3270 = vpop.f32.mrb[0].mxu0
        %3271 = vdwg.mxu0
        %v3272 = vld [vmem:[%s8] sm:$0xff]
        %v3273 = vld [vmem:[%s8 + $0x8] sm:$0xff]
        %v3274 = vld [vmem:[%s8 + $0x10] sm:$0xff]
        %v3275 = vld [vmem:[%s8 + $0x18] sm:$0xff]
        %v3276 = vld [vmem:[%s8 + $0x20] sm:$0xff]
        %v3277 = vld [vmem:[%s8 + $0x28] sm:$0xff]
        %v3278 = vld [vmem:[%s8 + $0x30] sm:$0xff]
        %v3279 = vld [vmem:[%s8 + $0x38] sm:$0xff]
        %v3280 = vld [vmem:[%s8 + $0x40] sm:$0xff]
        %v3281 = vld [vmem:[%s8 + $0x48] sm:$0xff]
        %v3282 = vld [vmem:[%s8 + $0x50] sm:$0xff]
        %v3283 = vld [vmem:[%s8 + $0x58] sm:$0xff]
        %v3284 = vld [vmem:[%s8 + $0x60] sm:$0xff]
        %v3285 = vld [vmem:[%s8 + $0x68] sm:$0xff]
        %v3286 = vld [vmem:[%s8 + $0x70] sm:$0xff]
        %v3287 = vld [vmem:[%s8 + $0x78] sm:$0xff]
        %3288 = vmatprep.subr.mxu0 0.0
        %3289 = vmatpush1.msra.mxu0 %v3272
        %3290 = vmatprep.subr.mxu0 0.0
        %3291 = vmatpush1.msra.mxu0 %v3273
        %3292 = vmatprep.subr.mxu0 0.0
        %3293 = vmatpush1.msra.mxu0 %v3274
        %3294 = vmatprep.subr.mxu0 0.0
        %3295 = vmatpush1.msra.mxu0 %v3275
        %3296 = vmatprep.subr.mxu0 0.0
        %3297 = vmatpush1.msra.mxu0 %v3276
        %3298 = vmatprep.subr.mxu0 0.0
        %3299 = vmatpush1.msra.mxu0 %v3277
        %3300 = vmatprep.subr.mxu0 0.0
        %3301 = vmatpush1.msra.mxu0 %v3278
        %3302 = vmatprep.subr.mxu0 0.0
        %3303 = vmatpush1.msra.mxu0 %v3279
        %3304 = vmatprep.subr.mxu0 0.0
        %3305 = vmatpush1.msra.mxu0 %v3280
        %3306 = vmatprep.subr.mxu0 0.0
        %3307 = vmatpush1.msra.mxu0 %v3281
        %3308 = vmatprep.subr.mxu0 0.0
        %3309 = vmatpush1.msra.mxu0 %v3282
        %3310 = vmatprep.subr.mxu0 0.0
        %3311 = vmatpush1.msra.mxu0 %v3283
        %3312 = vmatprep.subr.mxu0 0.0
        %3313 = vmatpush1.msra.mxu0 %v3284
        %3314 = vmatprep.subr.mxu0 0.0
        %3315 = vmatpush1.msra.mxu0 %v3285
        %3316 = vmatprep.subr.mxu0 0.0
        %3317 = vmatpush1.msra.mxu0 %v3286
        %3318 = vmatprep.subr.mxu0 0.0
        %3319 = vmatpush1.msra.mxu0 %v3287
        %3320 = vmatprep.subr.mxu0 0.0
        %3321 = vmatpush1.msra.mxu0 0.0
        %3322 = vmatprep.subr.mxu0 0.0
        %3323 = vmatpush1.msra.mxu0 0.0
        %3324 = vmatprep.subr.mxu0 0.0
        %3325 = vmatpush1.msra.mxu0 0.0
        %3326 = vmatprep.subr.mxu0 0.0
        %3327 = vmatpush1.msra.mxu0 0.0
        %3328 = vmatprep.subr.mxu0 0.0
        %3329 = vmatpush1.msra.mxu0 0.0
        %3330 = vmatprep.subr.mxu0 0.0
        %3331 = vmatpush1.msra.mxu0 0.0
        %3332 = vmatprep.subr.mxu0 0.0
        %3333 = vmatpush1.msra.mxu0 0.0
        %3334 = vmatprep.subr.mxu0 0.0
        %3335 = vmatpush1.msra.mxu0 0.0
        %3336 = vmatprep.subr.mxu0 0.0
        %3337 = vmatpush1.msra.mxu0 0.0
        %3338 = vmatprep.subr.mxu0 0.0
        %3339 = vmatpush1.msra.mxu0 0.0
        %3340 = vmatprep.subr.mxu0 0.0
        %3341 = vmatpush1.msra.mxu0 0.0
        %3342 = vmatprep.subr.mxu0 0.0
        %3343 = vmatpush1.msra.mxu0 0.0
        %3344 = vmatprep.subr.mxu0 0.0
        %3345 = vmatpush1.msra.mxu0 0.0
        %3346 = vmatprep.subr.mxu0 0.0
        %3347 = vmatpush1.msra.mxu0 0.0
        %3348 = vmatprep.subr.mxu0 0.0
        %3349 = vmatpush1.msra.mxu0 0.0
        %3350 = vmatprep.subr.mxu0 0.0
        %3351 = vmatpush1.msra.mxu0 0.0
        %3352 = vmatprep.mubr.f32.mxu0 0.0
        %3353 = vmatmul.mubr.f32.gmra.mrb[0].mxu0 %v3167
        %v3354 = vpop.f32.mrb[0].mxu0
        %v3355 = vadd.f32 0.0, %v3354
        %v3356 = vpop.f32.mrb[0].mxu0
        %3357 = vmatprep.mubr.f32.mxu0 0.0
        %3358 = vmatmul.mubr.f32.gmra.mrb[0].mxu0 %v3168
        %v3359 = vpop.f32.mrb[0].mxu0
        %v3360 = vadd.f32 0.0, %v3359
        %v3361 = vpop.f32.mrb[0].mxu0
        %3362 = vmatprep.mubr.f32.mxu0 0.0
        %3363 = vmatmul.mubr.f32.gmra.mrb[0].mxu0 %v3169
        %v3364 = vpop.f32.mrb[0].mxu0
        %v3365 = vadd.f32 0.0, %v3364
        %v3366 = vpop.f32.mrb[0].mxu0
        %3367 = vmatprep.mubr.f32.mxu0 0.0
        %3368 = vmatmul.mubr.f32.gmra.mrb[0].mxu0 %v3170
        %v3369 = vpop.f32.mrb[0].mxu0
        %v3370 = vadd.f32 0.0, %v3369
        %v3371 = vpop.f32.mrb[0].mxu0
        %3372 = vdwg.mxu0
        %v3373 = vmax.f32 %v3254, %v3355
        %v3374 = vmax.f32 %v3259, %v3360
        %v3375 = vmax.f32 %v3264, %v3365
        %v3376 = vmax.f32 %v3269, %v3370
        %v3377 = vld [vmem:[%s9] sm:$0xff]
        %v3378 = vld [vmem:[%s9 + $0x8] sm:$0xff]
        %v3379 = vld [vmem:[%s9 + $0x10] sm:$0xff]
        %v3380 = vld [vmem:[%s9 + $0x18] sm:$0xff]
        %v3381 = vld [vmem:[%s9 + $0x20] sm:$0xff]
        %v3382 = vld [vmem:[%s9 + $0x28] sm:$0xff]
        %v3383 = vld [vmem:[%s9 + $0x30] sm:$0xff]
        %v3384 = vld [vmem:[%s9 + $0x38] sm:$0xff]
        %s3385 = scalar_lea.vmem %s9, 64
        %v3386 = vld [vmem:[%s3385] sm:$0xff]
        %v3387 = vld [vmem:[%s3385 + $0x8] sm:$0xff]
        %v3388 = vld [vmem:[%s3385 + $0x10] sm:$0xff]
        %v3389 = vld [vmem:[%s3385 + $0x18] sm:$0xff]
        %v3390 = vld [vmem:[%s3385 + $0x20] sm:$0xff]
        %v3391 = vld [vmem:[%s3385 + $0x28] sm:$0xff]
        %v3392 = vld [vmem:[%s3385 + $0x30] sm:$0xff]
        %v3393 = vld [vmem:[%s3385 + $0x38] sm:$0xff]
        %vm3394 = vcmask 523264
        %v3396 = vsel %vm3394, %v3374, 0
        %3398 = vmatprep.subr.mxu0 0.0
        %3399 = vmatpush1.msra.mxu0 %v3386
        %3400 = vmatprep.subr.mxu0 0.0
        %3401 = vmatpush1.msra.mxu0 %v3387
        %3402 = vmatprep.subr.mxu0 0.0
        %3403 = vmatpush1.msra.mxu0 %v3388
        %3404 = vmatprep.subr.mxu0 0.0
        %3405 = vmatpush1.msra.mxu0 %v3389
        %3406 = vmatprep.subr.mxu0 0.0
        %3407 = vmatpush1.msra.mxu0 %v3390
        %3408 = vmatprep.subr.mxu0 0.0
        %3409 = vmatpush1.msra.mxu0 %v3391
        %3410 = vmatprep.subr.mxu0 0.0
        %3411 = vmatpush1.msra.mxu0 %v3392
        %3412 = vmatprep.subr.mxu0 0.0
        %3413 = vmatpush1.msra.mxu0 %v3393
        %3414 = vmatprep.subr.mxu0 0.0
        %3415 = vmatpush1.msra.mxu0 0.0
        %3416 = vmatprep.subr.mxu0 0.0
        %3417 = vmatpush1.msra.mxu0 0.0
        %3418 = vmatprep.subr.mxu0 0.0
        %3419 = vmatpush1.msra.mxu0 0.0
        %3420 = vmatprep.subr.mxu0 0.0
        %3421 = vmatpush1.msra.mxu0 0.0
        %3422 = vmatprep.subr.mxu0 0.0
        %3423 = vmatpush1.msra.mxu0 0.0
        %3424 = vmatprep.subr.mxu0 0.0
        %3425 = vmatpush1.msra.mxu0 0.0
        %3426 = vmatprep.subr.mxu0 0.0
        %3427 = vmatpush1.msra.mxu0 0.0
        %3428 = vmatprep.subr.mxu0 0.0
        %3429 = vmatpush1.msra.mxu0 0.0
        %3430 = vmatprep.subr.mxu0 0.0
        %3431 = vmatpush1.msra.mxu0 0.0
        %3432 = vmatprep.subr.mxu0 0.0
        %3433 = vmatpush1.msra.mxu0 0.0
        %3434 = vmatprep.subr.mxu0 0.0
        %3435 = vmatpush1.msra.mxu0 0.0
        %3436 = vmatprep.subr.mxu0 0.0
        %3437 = vmatpush1.msra.mxu0 0.0
        %3438 = vmatprep.subr.mxu0 0.0
        %3439 = vmatpush1.msra.mxu0 0.0
        %3440 = vmatprep.subr.mxu0 0.0
        %3441 = vmatpush1.msra.mxu0 0.0
        %3442 = vmatprep.subr.mxu0 0.0
        %3443 = vmatpush1.msra.mxu0 0.0
        %3444 = vmatprep.subr.mxu0 0.0
        %3445 = vmatpush1.msra.mxu0 0.0
        %3446 = vmatprep.subr.mxu0 0.0
        %3447 = vmatpush1.msra.mxu0 0.0
        %3448 = vmatprep.subr.mxu0 0.0
        %3449 = vmatpush1.msra.mxu0 0.0
        %3450 = vmatprep.subr.mxu0 0.0
        %3451 = vmatpush1.msra.mxu0 0.0
        %3452 = vmatprep.subr.mxu0 0.0
        %3453 = vmatpush1.msra.mxu0 0.0
        %3454 = vmatprep.subr.mxu0 0.0
        %3455 = vmatpush1.msra.mxu0 0.0
        %3456 = vmatprep.subr.mxu0 0.0
        %3457 = vmatpush1.msra.mxu0 0.0
        %3458 = vmatprep.subr.mxu0 0.0
        %3459 = vmatpush1.msra.mxu0 0.0
        %3460 = vmatprep.subr.mxu0 0.0
        %3461 = vmatpush1.msra.mxu0 0.0
        %3462 = vmatprep.mubr.f32.mxu0 0.0
        %3463 = vmatmul.mubr.f32.gmra.mrb[0].mxu0 %v3396
        %v3464 = vpop.f32.mrb[0].mxu0
        %v3465 = vadd.f32 0.0, %v3464
        %v3466 = vpop.f32.mrb[0].mxu0
        %3467 = vdwg.mxu0
        %v3469 = vsel %vm3394, %v3373, 0
        %3471 = vmatprep.subr.mxu0 0.0
        %3472 = vmatpush1.msra.mxu0 %v3377
        %3473 = vmatprep.subr.mxu0 0.0
        %3474 = vmatpush1.msra.mxu0 %v3378
        %3475 = vmatprep.subr.mxu0 0.0
        %3476 = vmatpush1.msra.mxu0 %v3379
        %3477 = vmatprep.subr.mxu0 0.0
        %3478 = vmatpush1.msra.mxu0 %v3380
        %3479 = vmatprep.subr.mxu0 0.0
        %3480 = vmatpush1.msra.mxu0 %v3381
        %3481 = vmatprep.subr.mxu0 0.0
        %3482 = vmatpush1.msra.mxu0 %v3382
        %3483 = vmatprep.subr.mxu0 0.0
        %3484 = vmatpush1.msra.mxu0 %v3383
        %3485 = vmatprep.subr.mxu0 0.0
        %3486 = vmatpush1.msra.mxu0 %v3384
        %3487 = vmatprep.subr.mxu0 0.0
        %3488 = vmatpush1.msra.mxu0 0.0
        %3489 = vmatprep.subr.mxu0 0.0
        %3490 = vmatpush1.msra.mxu0 0.0
        %3491 = vmatprep.subr.mxu0 0.0
        %3492 = vmatpush1.msra.mxu0 0.0
        %3493 = vmatprep.subr.mxu0 0.0
        %3494 = vmatpush1.msra.mxu0 0.0
        %3495 = vmatprep.subr.mxu0 0.0
        %3496 = vmatpush1.msra.mxu0 0.0
        %3497 = vmatprep.subr.mxu0 0.0
        %3498 = vmatpush1.msra.mxu0 0.0
        %3499 = vmatprep.subr.mxu0 0.0
        %3500 = vmatpush1.msra.mxu0 0.0
        %3501 = vmatprep.subr.mxu0 0.0
        %3502 = vmatpush1.msra.mxu0 0.0
        %3503 = vmatprep.subr.mxu0 0.0
        %3504 = vmatpush1.msra.mxu0 0.0
        %3505 = vmatprep.subr.mxu0 0.0
        %3506 = vmatpush1.msra.mxu0 0.0
        %3507 = vmatprep.subr.mxu0 0.0
        %3508 = vmatpush1.msra.mxu0 0.0
        %3509 = vmatprep.subr.mxu0 0.0
        %3510 = vmatpush1.msra.mxu0 0.0
        %3511 = vmatprep.subr.mxu0 0.0
        %3512 = vmatpush1.msra.mxu0 0.0
        %3513 = vmatprep.subr.mxu0 0.0
        %3514 = vmatpush1.msra.mxu0 0.0
        %3515 = vmatprep.subr.mxu0 0.0
        %3516 = vmatpush1.msra.mxu0 0.0
        %3517 = vmatprep.subr.mxu0 0.0
        %3518 = vmatpush1.msra.mxu0 0.0
        %3519 = vmatprep.subr.mxu0 0.0
        %3520 = vmatpush1.msra.mxu0 0.0
        %3521 = vmatprep.subr.mxu0 0.0
        %3522 = vmatpush1.msra.mxu0 0.0
        %3523 = vmatprep.subr.mxu0 0.0
        %3524 = vmatpush1.msra.mxu0 0.0
        %3525 = vmatprep.subr.mxu0 0.0
        %3526 = vmatpush1.msra.mxu0 0.0
        %3527 = vmatprep.subr.mxu0 0.0
        %3528 = vmatpush1.msra.mxu0 0.0
        %3529 = vmatprep.subr.mxu0 0.0
        %3530 = vmatpush1.msra.mxu0 0.0
        %3531 = vmatprep.subr.mxu0 0.0
        %3532 = vmatpush1.msra.mxu0 0.0
        %3533 = vmatprep.subr.mxu0 0.0
        %3534 = vmatpush1.msra.mxu0 0.0
        %3535 = vmatprep.mubr.f32.mxu0 0.0
        %3536 = vmatmul.mubr.f32.gmra.mrb[0].mxu0 %v3469
        %v3537 = vpop.f32.mrb[0].mxu0
        %v3538 = vadd.f32 %v3465, %v3537
        %v3539 = vpop.f32.mrb[0].mxu0
        %3540 = vdwg.mxu0
        %s3541 = scalar_lea.vmem %s9, 128
        %v3542 = vld [vmem:[%s3541] sm:$0xff]
        %v3543 = vld [vmem:[%s3541 + $0x8] sm:$0xff]
        %v3544 = vld [vmem:[%s3541 + $0x10] sm:$0xff]
        %v3545 = vld [vmem:[%s3541 + $0x18] sm:$0xff]
        %v3546 = vld [vmem:[%s3541 + $0x20] sm:$0xff]
        %v3547 = vld [vmem:[%s3541 + $0x28] sm:$0xff]
        %v3548 = vld [vmem:[%s3541 + $0x30] sm:$0xff]
        %v3549 = vld [vmem:[%s3541 + $0x38] sm:$0xff]
        %v3551 = vsel %vm3394, %v3375, 0
        %3553 = vmatprep.subr.mxu0 0.0
        %3554 = vmatpush1.msra.mxu0 %v3542
        %3555 = vmatprep.subr.mxu0 0.0
        %3556 = vmatpush1.msra.mxu0 %v3543
        %3557 = vmatprep.subr.mxu0 0.0
        %3558 = vmatpush1.msra.mxu0 %v3544
        %3559 = vmatprep.subr.mxu0 0.0
        %3560 = vmatpush1.msra.mxu0 %v3545
        %3561 = vmatprep.subr.mxu0 0.0
        %3562 = vmatpush1.msra.mxu0 %v3546
        %3563 = vmatprep.subr.mxu0 0.0
        %3564 = vmatpush1.msra.mxu0 %v3547
        %3565 = vmatprep.subr.mxu0 0.0
        %3566 = vmatpush1.msra.mxu0 %v3548
        %3567 = vmatprep.subr.mxu0 0.0
        %3568 = vmatpush1.msra.mxu0 %v3549
        %3569 = vmatprep.subr.mxu0 0.0
        %3570 = vmatpush1.msra.mxu0 0.0
        %3571 = vmatprep.subr.mxu0 0.0
        %3572 = vmatpush1.msra.mxu0 0.0
        %3573 = vmatprep.subr.mxu0 0.0
        %3574 = vmatpush1.msra.mxu0 0.0
        %3575 = vmatprep.subr.mxu0 0.0
        %3576 = vmatpush1.msra.mxu0 0.0
        %3577 = vmatprep.subr.mxu0 0.0
        %3578 = vmatpush1.msra.mxu0 0.0
        %3579 = vmatprep.subr.mxu0 0.0
        %3580 = vmatpush1.msra.mxu0 0.0
        %3581 = vmatprep.subr.mxu0 0.0
        %3582 = vmatpush1.msra.mxu0 0.0
        %3583 = vmatprep.subr.mxu0 0.0
        %3584 = vmatpush1.msra.mxu0 0.0
        %3585 = vmatprep.subr.mxu0 0.0
        %3586 = vmatpush1.msra.mxu0 0.0
        %3587 = vmatprep.subr.mxu0 0.0
        %3588 = vmatpush1.msra.mxu0 0.0
        %3589 = vmatprep.subr.mxu0 0.0
        %3590 = vmatpush1.msra.mxu0 0.0
        %3591 = vmatprep.subr.mxu0 0.0
        %3592 = vmatpush1.msra.mxu0 0.0
        %3593 = vmatprep.subr.mxu0 0.0
        %3594 = vmatpush1.msra.mxu0 0.0
        %3595 = vmatprep.subr.mxu0 0.0
        %3596 = vmatpush1.msra.mxu0 0.0
        %3597 = vmatprep.subr.mxu0 0.0
        %3598 = vmatpush1.msra.mxu0 0.0
        %3599 = vmatprep.subr.mxu0 0.0
        %3600 = vmatpush1.msra.mxu0 0.0
        %3601 = vmatprep.subr.mxu0 0.0
        %3602 = vmatpush1.msra.mxu0 0.0
        %3603 = vmatprep.subr.mxu0 0.0
        %3604 = vmatpush1.msra.mxu0 0.0
        %3605 = vmatprep.subr.mxu0 0.0
        %3606 = vmatpush1.msra.mxu0 0.0
        %3607 = vmatprep.subr.mxu0 0.0
        %3608 = vmatpush1.msra.mxu0 0.0
        %3609 = vmatprep.subr.mxu0 0.0
        %3610 = vmatpush1.msra.mxu0 0.0
        %3611 = vmatprep.subr.mxu0 0.0
        %3612 = vmatpush1.msra.mxu0 0.0
        %3613 = vmatprep.subr.mxu0 0.0
        %3614 = vmatpush1.msra.mxu0 0.0
        %3615 = vmatprep.subr.mxu0 0.0
        %3616 = vmatpush1.msra.mxu0 0.0
        %3617 = vmatprep.mubr.f32.mxu0 0.0
        %3618 = vmatmul.mubr.f32.gmra.mrb[0].mxu0 %v3551
        %v3619 = vpop.f32.mrb[0].mxu0
        %v3620 = vadd.f32 0.0, %v3619
        %v3621 = vpop.f32.mrb[0].mxu0
        %3622 = vdwg.mxu0
        %v3623 = vadd.f32 %v3538, %v3620
        %s3624 = scalar_lea.vmem %s9, 192
        %v3625 = vld [vmem:[%s3624] sm:$0xff]
        %v3626 = vld [vmem:[%s3624 + $0x8] sm:$0xff]
        %v3627 = vld [vmem:[%s3624 + $0x10] sm:$0xff]
        %v3628 = vld [vmem:[%s3624 + $0x18] sm:$0xff]
        %v3629 = vld [vmem:[%s3624 + $0x20] sm:$0xff]
        %v3630 = vld [vmem:[%s3624 + $0x28] sm:$0xff]
        %v3631 = vld [vmem:[%s3624 + $0x30] sm:$0xff]
        %v3632 = vld [vmem:[%s3624 + $0x38] sm:$0xff]
        %v3634 = vsel %vm3394, %v3376, 0
        %3636 = vmatprep.subr.mxu0 0.0
        %3637 = vmatpush1.msra.mxu0 %v3625
        %3638 = vmatprep.subr.mxu0 0.0
        %3639 = vmatpush1.msra.mxu0 %v3626
        %3640 = vmatprep.subr.mxu0 0.0
        %3641 = vmatpush1.msra.mxu0 %v3627
        %3642 = vmatprep.subr.mxu0 0.0
        %3643 = vmatpush1.msra.mxu0 %v3628
        %3644 = vmatprep.subr.mxu0 0.0
        %3645 = vmatpush1.msra.mxu0 %v3629
        %3646 = vmatprep.subr.mxu0 0.0
        %3647 = vmatpush1.msra.mxu0 %v3630
        %3648 = vmatprep.subr.mxu0 0.0
        %3649 = vmatpush1.msra.mxu0 %v3631
        %3650 = vmatprep.subr.mxu0 0.0
        %3651 = vmatpush1.msra.mxu0 %v3632
        %3652 = vmatprep.subr.mxu0 0.0
        %3653 = vmatpush1.msra.mxu0 0.0
        %3654 = vmatprep.subr.mxu0 0.0
        %3655 = vmatpush1.msra.mxu0 0.0
        %3656 = vmatprep.subr.mxu0 0.0
        %3657 = vmatpush1.msra.mxu0 0.0
        %3658 = vmatprep.subr.mxu0 0.0
        %3659 = vmatpush1.msra.mxu0 0.0
        %3660 = vmatprep.subr.mxu0 0.0
        %3661 = vmatpush1.msra.mxu0 0.0
        %3662 = vmatprep.subr.mxu0 0.0
        %3663 = vmatpush1.msra.mxu0 0.0
        %3664 = vmatprep.subr.mxu0 0.0
        %3665 = vmatpush1.msra.mxu0 0.0
        %3666 = vmatprep.subr.mxu0 0.0
        %3667 = vmatpush1.msra.mxu0 0.0
        %3668 = vmatprep.subr.mxu0 0.0
        %3669 = vmatpush1.msra.mxu0 0.0
        %3670 = vmatprep.subr.mxu0 0.0
        %3671 = vmatpush1.msra.mxu0 0.0
        %3672 = vmatprep.subr.mxu0 0.0
        %3673 = vmatpush1.msra.mxu0 0.0
        %3674 = vmatprep.subr.mxu0 0.0
        %3675 = vmatpush1.msra.mxu0 0.0
        %3676 = vmatprep.subr.mxu0 0.0
        %3677 = vmatpush1.msra.mxu0 0.0
        %3678 = vmatprep.subr.mxu0 0.0
        %3679 = vmatpush1.msra.mxu0 0.0
        %3680 = vmatprep.subr.mxu0 0.0
        %3681 = vmatpush1.msra.mxu0 0.0
        %3682 = vmatprep.subr.mxu0 0.0
        %3683 = vmatpush1.msra.mxu0 0.0
        %3684 = vmatprep.subr.mxu0 0.0
        %3685 = vmatpush1.msra.mxu0 0.0
        %3686 = vmatprep.subr.mxu0 0.0
        %3687 = vmatpush1.msra.mxu0 0.0
        %3688 = vmatprep.subr.mxu0 0.0
        %3689 = vmatpush1.msra.mxu0 0.0
        %3690 = vmatprep.subr.mxu0 0.0
        %3691 = vmatpush1.msra.mxu0 0.0
        %3692 = vmatprep.subr.mxu0 0.0
        %3693 = vmatpush1.msra.mxu0 0.0
        %3694 = vmatprep.subr.mxu0 0.0
        %3695 = vmatpush1.msra.mxu0 0.0
        %3696 = vmatprep.subr.mxu0 0.0
        %3697 = vmatpush1.msra.mxu0 0.0
        %3698 = vmatprep.subr.mxu0 0.0
        %3699 = vmatpush1.msra.mxu0 0.0
        %3700 = vmatprep.mubr.f32.mxu0 0.0
        %3701 = vmatmul.mubr.f32.gmra.mrb[0].mxu0 %v3634
        %v3702 = vpop.f32.mrb[0].mxu0
        %v3703 = vadd.f32 0.0, %v3702
        %v3704 = vpop.f32.mrb[0].mxu0
        %3705 = vdwg.mxu0
        %v3706 = vadd.f32 %v3623, %v3703
        %v3707 = vld [vmem:[%s10] sm:$0x1]
        %v3709 = vlaneseq
        %v3710 = vshrl.u32 %v3709, 7
        %v3711 = vsub.s32 0, %v3710
        %v3712 = vrot.slane %v3707, %v3711
        %v3714 = vadd.f32 %v3706, %v3712
        %v3715 = vmax.f32 %v3714, 0.0
        %v3716 = vld [vmem:[%s11] sm:$0xff]
        %v3717 = vld [vmem:[%s11 + $0x8] sm:$0xff]
        %v3718 = vld [vmem:[%s11 + $0x10] sm:$0xff]
        %v3719 = vld [vmem:[%s11 + $0x18] sm:$0xff]
        %v3720 = vld [vmem:[%s11 + $0x20] sm:$0xff]
        %v3721 = vld [vmem:[%s11 + $0x28] sm:$0xff]
        %v3722 = vld [vmem:[%s11 + $0x30] sm:$0xff]
        %v3723 = vld [vmem:[%s11 + $0x38] sm:$0xff]
        %v3724 = vld [vmem:[%s11 + $0x40] sm:$0xff]
        %v3725 = vld [vmem:[%s11 + $0x48] sm:$0xff]
        %v3726 = vld [vmem:[%s11 + $0x50] sm:$0xff]
        %v3727 = vld [vmem:[%s11 + $0x58] sm:$0xff]
        %v3728 = vld [vmem:[%s11 + $0x60] sm:$0xff]
        %v3729 = vld [vmem:[%s11 + $0x68] sm:$0xff]
        %v3730 = vld [vmem:[%s11 + $0x70] sm:$0xff]
        %v3731 = vld [vmem:[%s12] sm:$0x1]
        %v3733 = vlaneseq
        %v3734 = vshrl.u32 %v3733, 7
        %v3735 = vsub.s32 0, %v3734
        %v3736 = vrot.slane %v3731, %v3735
        %vm3738 = vcmask 982016
        %v3740 = vsel %vm3738, %v3715, 0
        %3742 = vmatprep.subr.mxu0 0.0
        %3743 = vmatpush1.msra.mxu0 %v3716
        %3744 = vmatprep.subr.mxu0 0.0
        %3745 = vmatpush1.msra.mxu0 %v3717
        %3746 = vmatprep.subr.mxu0 0.0
        %3747 = vmatpush1.msra.mxu0 %v3718
        %3748 = vmatprep.subr.mxu0 0.0
        %3749 = vmatpush1.msra.mxu0 %v3719
        %3750 = vmatprep.subr.mxu0 0.0
        %3751 = vmatpush1.msra.mxu0 %v3720
        %3752 = vmatprep.subr.mxu0 0.0
        %3753 = vmatpush1.msra.mxu0 %v3721
        %3754 = vmatprep.subr.mxu0 0.0
        %3755 = vmatpush1.msra.mxu0 %v3722
        %3756 = vmatprep.subr.mxu0 0.0
        %3757 = vmatpush1.msra.mxu0 %v3723
        %3758 = vmatprep.subr.mxu0 0.0
        %3759 = vmatpush1.msra.mxu0 %v3724
        %3760 = vmatprep.subr.mxu0 0.0
        %3761 = vmatpush1.msra.mxu0 %v3725
        %3762 = vmatprep.subr.mxu0 0.0
        %3763 = vmatpush1.msra.mxu0 %v3726
        %3764 = vmatprep.subr.mxu0 0.0
        %3765 = vmatpush1.msra.mxu0 %v3727
        %3766 = vmatprep.subr.mxu0 0.0
        %3767 = vmatpush1.msra.mxu0 %v3728
        %3768 = vmatprep.subr.mxu0 0.0
        %3769 = vmatpush1.msra.mxu0 %v3729
        %3770 = vmatprep.subr.mxu0 0.0
        %3771 = vmatpush1.msra.mxu0 %v3730
        %3772 = vmatprep.subr.mxu0 0.0
        %3773 = vmatpush1.msra.mxu0 0.0
        %3774 = vmatprep.subr.mxu0 0.0
        %3775 = vmatpush1.msra.mxu0 0.0
        %3776 = vmatprep.subr.mxu0 0.0
        %3777 = vmatpush1.msra.mxu0 0.0
        %3778 = vmatprep.subr.mxu0 0.0
        %3779 = vmatpush1.msra.mxu0 0.0
        %3780 = vmatprep.subr.mxu0 0.0
        %3781 = vmatpush1.msra.mxu0 0.0
        %3782 = vmatprep.subr.mxu0 0.0
        %3783 = vmatpush1.msra.mxu0 0.0
        %3784 = vmatprep.subr.mxu0 0.0
        %3785 = vmatpush1.msra.mxu0 0.0
        %3786 = vmatprep.subr.mxu0 0.0
        %3787 = vmatpush1.msra.mxu0 0.0
        %3788 = vmatprep.subr.mxu0 0.0
        %3789 = vmatpush1.msra.mxu0 0.0
        %3790 = vmatprep.subr.mxu0 0.0
        %3791 = vmatpush1.msra.mxu0 0.0
        %3792 = vmatprep.subr.mxu0 0.0
        %3793 = vmatpush1.msra.mxu0 0.0
        %3794 = vmatprep.subr.mxu0 0.0
        %3795 = vmatpush1.msra.mxu0 0.0
        %3796 = vmatprep.subr.mxu0 0.0
        %3797 = vmatpush1.msra.mxu0 0.0
        %3798 = vmatprep.subr.mxu0 0.0
        %3799 = vmatpush1.msra.mxu0 0.0
        %3800 = vmatprep.subr.mxu0 0.0
        %3801 = vmatpush1.msra.mxu0 0.0
        %3802 = vmatprep.subr.mxu0 0.0
        %3803 = vmatpush1.msra.mxu0 0.0
        %3804 = vmatprep.subr.mxu0 0.0
        %3805 = vmatpush1.msra.mxu0 0.0
        %3806 = vmatprep.mubr.f32.mxu0 0.0
        %3807 = vmatmul.mubr.f32.gmra.mrb[0].mxu0 %v3740
        %v3808 = vpop.f32.mrb[0].mxu0
        %v3809 = vadd.f32 %v3736, %v3808
        %v3810 = vpop.f32.mrb[0].mxu0
        %3811 = vdwg.mxu0
        %v3812 = vmax.f32 %v3809, 0.0
        %v3813 = vld [vmem:[%s13] sm:$0xff]
        %v3814 = vld [vmem:[%s13 + $0x8] sm:$0xff]
        %v3815 = vld [vmem:[%s13 + $0x10] sm:$0xff]
        %v3816 = vld [vmem:[%s13 + $0x18] sm:$0xff]
        %v3817 = vld [vmem:[%s13 + $0x20] sm:$0xff]
        %v3818 = vld [vmem:[%s13 + $0x28] sm:$0xff]
        %v3819 = vld [vmem:[%s13 + $0x30] sm:$0xff]
        %v3820 = vld [vmem:[%s13 + $0x38] sm:$0xff]
        %v3821 = vld [vmem:[%s13 + $0x40] sm:$0xff]
        %v3822 = vld [vmem:[%s13 + $0x48] sm:$0xff]
        %v3823 = vld [vmem:[%s13 + $0x50] sm:$0xf]
        %v3824 = vld [vmem:[%s14] sm:$0x1]
        %v3826 = vlaneseq
        %v3827 = vshrl.u32 %v3826, 7
        %v3828 = vsub.s32 0, %v3827
        %v3829 = vrot.slane %v3824, %v3828
        %vm3831 = vcmask 687104
        %v3833 = vsel %vm3831, %v3812, 0
        %v3836 = vsel %vm783, %v3823, 0
        %3838 = vmatprep.subr.mxu0 0.0
        %3839 = vmatpush1.msra.mxu0 %v3813
        %3840 = vmatprep.subr.mxu0 0.0
        %3841 = vmatpush1.msra.mxu0 %v3814
        %3842 = vmatprep.subr.mxu0 0.0
        %3843 = vmatpush1.msra.mxu0 %v3815
        %3844 = vmatprep.subr.mxu0 0.0
        %3845 = vmatpush1.msra.mxu0 %v3816
        %3846 = vmatprep.subr.mxu0 0.0
        %3847 = vmatpush1.msra.mxu0 %v3817
        %3848 = vmatprep.subr.mxu0 0.0
        %3849 = vmatpush1.msra.mxu0 %v3818
        %3850 = vmatprep.subr.mxu0 0.0
        %3851 = vmatpush1.msra.mxu0 %v3819
        %3852 = vmatprep.subr.mxu0 0.0
        %3853 = vmatpush1.msra.mxu0 %v3820
        %3854 = vmatprep.subr.mxu0 0.0
        %3855 = vmatpush1.msra.mxu0 %v3821
        %3856 = vmatprep.subr.mxu0 0.0
        %3857 = vmatpush1.msra.mxu0 %v3822
        %3858 = vmatprep.subr.mxu0 0.0
        %3859 = vmatpush1.msra.mxu0 %v3836
        %3860 = vmatprep.subr.mxu0 0.0
        %3861 = vmatpush1.msra.mxu0 0.0
        %3862 = vmatprep.subr.mxu0 0.0
        %3863 = vmatpush1.msra.mxu0 0.0
        %3864 = vmatprep.subr.mxu0 0.0
        %3865 = vmatpush1.msra.mxu0 0.0
        %3866 = vmatprep.subr.mxu0 0.0
        %3867 = vmatpush1.msra.mxu0 0.0
        %3868 = vmatprep.subr.mxu0 0.0
        %3869 = vmatpush1.msra.mxu0 0.0
        %3870 = vmatprep.subr.mxu0 0.0
        %3871 = vmatpush1.msra.mxu0 0.0
        %3872 = vmatprep.subr.mxu0 0.0
        %3873 = vmatpush1.msra.mxu0 0.0
        %3874 = vmatprep.subr.mxu0 0.0
        %3875 = vmatpush1.msra.mxu0 0.0
        %3876 = vmatprep.subr.mxu0 0.0
        %3877 = vmatpush1.msra.mxu0 0.0
        %3878 = vmatprep.subr.mxu0 0.0
        %3879 = vmatpush1.msra.mxu0 0.0
        %3880 = vmatprep.subr.mxu0 0.0
        %3881 = vmatpush1.msra.mxu0 0.0
        %3882 = vmatprep.subr.mxu0 0.0
        %3883 = vmatpush1.msra.mxu0 0.0
        %3884 = vmatprep.subr.mxu0 0.0
        %3885 = vmatpush1.msra.mxu0 0.0
        %3886 = vmatprep.subr.mxu0 0.0
        %3887 = vmatpush1.msra.mxu0 0.0
        %3888 = vmatprep.subr.mxu0 0.0
        %3889 = vmatpush1.msra.mxu0 0.0
        %3890 = vmatprep.subr.mxu0 0.0
        %3891 = vmatpush1.msra.mxu0 0.0
        %3892 = vmatprep.subr.mxu0 0.0
        %3893 = vmatpush1.msra.mxu0 0.0
        %3894 = vmatprep.subr.mxu0 0.0
        %3895 = vmatpush1.msra.mxu0 0.0
        %3896 = vmatprep.subr.mxu0 0.0
        %3897 = vmatpush1.msra.mxu0 0.0
        %3898 = vmatprep.subr.mxu0 0.0
        %3899 = vmatpush1.msra.mxu0 0.0
        %3900 = vmatprep.subr.mxu0 0.0
        %3901 = vmatpush1.msra.mxu0 0.0
        %3902 = vmatprep.mubr.f32.mxu0 0.0
        %3903 = vmatmul.mubr.f32.gmra.mrb[0].mxu0 %v3833
        %v3904 = vpop.f32.mrb[0].mxu0
        %v3905 = vadd.f32 %v3829, %v3904
        %v3906 = vpop.f32.mrb[0].mxu0
        %3907 = vdwg.mxu0
        %3908 = vst [vmem:[%s664] sm:$0xff] %v3905
        %s3909 = sand.u32 %s359, 1
        %s3910 = scalar_lea.sflag [#allocation5], %s3909
        %s3911 = sand.u32 %s359, 1
        %s3912 = smul.addr %s3911, 8
        %s3913 = scalar_lea.vmem [#allocation8], %s3912
        // Predicated region
        $region127: #{lenet5_forward.1} parent=113 // pred_check
          %p3914 = pneg %p369
        $region128: #{lenet5_forward.1} parent=113 // pred_check_branch
          %3916 = sbr.rel (%p3914) target = $region130
        $region129: #{lenet5_forward.1} parent=113 // pred_region
          %s3918 = ssub.s32 128, 128
          %3919 = vsyncadd %s3910, %s3918
          %s3920 = smul.addr %s31, 128
          %s3921 = scalar_lea.hbm %s15, %s3920
          %s3923 = sshll.u32 %s3913, 4
          %s3924 = int_to_ptr.vmem [resolvable:$true] %s3923
          %3926 = dma.vmem_to_hbm [thread:$0]  %s3924, 128, %s3921, %s3910
        $region130: #{lenet5_forward.1} parent=113 // pred_fallthru
          _
      $region114: #{lenet5_forward.1} parent=5 // pred_fallthru
        _
      %p3927 = scmp.le.s32.totalorder 2, %s26
      // Predicated region
      $region131: #{lenet5_forward.1} parent=5 // pred_check
        %p3928 = pneg %p3927
      $region132: #{lenet5_forward.1} parent=5 // pred_check_branch
        %3930 = sbr.rel (%p3928) target = $region134
      $region133: #{lenet5_forward.1} parent=5 // pred_region
        %s3931 = ssub.s32 %s26, 2
        // Predicated region
        $region135: #{lenet5_forward.1} parent=133 // pred_check
          %p3932 = pneg %p375
        $region136: #{lenet5_forward.1} parent=133 // pred_check_branch
          %3934 = sbr.rel (%p3932) target = $region138
        $region137: #{lenet5_forward.1} parent=133 // pred_region
          %s3935 = sand.u32 %s360, 1
          %s3936 = scalar_lea.sflag [#allocation5], %s3935
          %s3937 = sand.u32 %s360, 1
          %s3938 = smul.addr %s3937, 8
          %s3939 = scalar_lea.vmem [#allocation8], %s3938
          %3940 = dma.done %s3936, 128
        $region138: #{lenet5_forward.1} parent=133 // pred_fallthru
          _
      $region134: #{lenet5_forward.1} parent=5 // pred_fallthru
        _
    $region6: #{lenet5_forward.1} parent=1 // loop_footer
      %s30 = sadd.s32 1, %s26
    $region7: #{lenet5_forward.1} parent=1 // loop_footer_branch
      %25 = sbr.rel target = $region3
    $region8: #{lenet5_forward.1} parent=1 // loop_exit
      _
    %3941 = vsyncpa [#allocation4], 1
    %s3942 = scalar_lea.sflag [#allocation4], 1
    %3943 = vsyncpa %s3942, 1
    %3944 = vsyncpa [#allocation7], 1
    %3945 = vsyncpa [#allocation5], 1
    %s3946 = scalar_lea.sflag [#allocation5], 1
    %3947 = vsyncpa %s3946, 1

</llo_original>
